<compile_context>
chip_gen: v5e
topology: v5e:2x2
jax: 0.10.0
libtpu: 0.0.40
codegen_flags: <defaults>
</compile_context>

<pallas_src>
import math
import functools

import jax
import jax.numpy as jnp
from jax.experimental import pallas as pl
from jax.experimental.pallas import tpu as pltpu


def _layernorm_f32(x, gamma, beta, eps=1e-5):
    # PyTorch LayerNorm semantics (biased variance), computed in float32.
    x32 = x.astype(jnp.float32)
    mu = jnp.mean(x32, axis=-1, keepdims=True)
    xc = x32 - mu
    var = jnp.mean(xc * xc, axis=-1, keepdims=True)
    return xc * jax.lax.rsqrt(var + eps) * gamma + beta


def _residual_attention_block_kernel(
    x_ref,                        # (1, L, E)  full sequence for the current batch
    ln1_g_ref, ln1_b_ref,         # (1, E) f32
    w_q_ref, w_k_ref, w_v_ref,    # (E, E) compute dtype (pre-transposed, pre-split)
    b_q_ref, b_k_ref, b_v_ref,    # (1, E) f32
    w_out_ref, b_out_ref,         # (E, E) compute dtype, (1, E) f32
    ln2_g_ref, ln2_b_ref,         # (1, E) f32
    w_fc_ref, b_fc_ref,           # (E, 4E) compute dtype, (1, 4E) f32
    w_proj_ref, b_proj_ref,       # (4E, E) compute dtype, (1, E) f32
    o_ref,                        # (1, tq, E)
    k_scratch, v_scratch,         # (L, E) compute dtype, persistent across query tiles
    *, n_head: int, tq: int, tkv: int, compute_dtype,
):
    qi = pl.program_id(1)
    _, L, E = x_ref.shape
    H = n_head
    Dh = E // H
    scale = 1.0 / math.sqrt(Dh)
    n_kv = L // tkv

    ln1_g = ln1_g_ref[...]
    ln1_b = ln1_b_ref[...]

    # ---- K/V path: LayerNorm + projections done once per batch, reused across qi ----
    @pl.when(qi == 0)
    def _fill_kv():
        hkv = _layernorm_f32(x_ref[0], ln1_g, ln1_b).astype(compute_dtype)       # (L, E)
        k = jnp.dot(hkv, w_k_ref[...], preferred_element_type=jnp.float32) + b_k_ref[...]
        v = jnp.dot(hkv, w_v_ref[...], preferred_element_type=jnp.float32) + b_v_ref[...]
        k_scratch[...] = k.astype(compute_dtype)
        v_scratch[...] = v.astype(compute_dtype)

    # ---- Query tile sliced from the resident sequence block (no extra DMA) ----
    q_start = pl.multiple_of(qi * tq, tq)
    xq = x_ref[0, pl.ds(q_start, tq), :]                                          # (tq, E)
    hq = _layernorm_f32(xq, ln1_g, ln1_b).astype(compute_dtype)
    q = jnp.dot(hq, w_q_ref[...], preferred_element_type=jnp.float32) + b_q_ref[...]
    qh = jnp.transpose((q * scale).astype(compute_dtype).reshape(tq, H, Dh),
                       (1, 0, 2))                                                 # (H, tq, Dh)

    # ---- Online-softmax attention over kv tiles (live scores bounded to (H,tq,tkv)) ----
    # TODO(synk): attn_mask path (module default None) not implemented; with a mask it
    # would be added to `s` before the running max/exp below.
    def kv_step(t, carry):
        m, l, acc = carry
        start = t * tkv
        if not isinstance(start, int):
            start = pl.multiple_of(start, tkv)
        k_blk = k_scratch[pl.ds(start, tkv), :]                                   # (tkv, E)
        v_blk = v_scratch[pl.ds(start, tkv), :]
        kh = jnp.transpose(k_blk.reshape(tkv, H, Dh), (1, 0, 2))                  # (H, tkv, Dh)
        vh = jnp.transpose(v_blk.reshape(tkv, H, Dh), (1, 0, 2))
        s = jnp.einsum('hqd,hkd->hqk', qh, kh,
                       preferred_element_type=jnp.float32)                        # (H, tq, tkv)
        m_new = jnp.maximum(m, jnp.max(s, axis=-1, keepdims=True))
        alpha = jnp.exp(m - m_new)
        p = jnp.exp(s - m_new)
        l_new = alpha * l + jnp.sum(p, axis=-1, keepdims=True)
        acc_new = alpha * acc + jnp.einsum('hqk,hkd->hqd', p.astype(compute_dtype), vh,
                                           preferred_element_type=jnp.float32)    # (H, tq, Dh)
        return m_new, l_new, acc_new

    carry0 = (jnp.full((H, tq, 1), -jnp.inf, jnp.float32),
              jnp.zeros((H, tq, 1), jnp.float32),
              jnp.zeros((H, tq, Dh), jnp.float32))
    if n_kv == 1:
        _, l_f, acc_f = kv_step(0, carry0)
    else:
        _, l_f, acc_f = jax.lax.fori_loop(0, n_kv, kv_step, carry0)

    attn = acc_f * pl.reciprocal(l_f, approx=True)                                # (H, tq, Dh) f32
    attn = jnp.transpose(attn, (1, 0, 2)).reshape(tq, E)                          # (tq, E) f32

    # ---- Output projection + residual ----
    attn = jnp.dot(attn.astype(compute_dtype), w_out_ref[...],
                   preferred_element_type=jnp.float32) + b_out_ref[...]
    x1 = xq.astype(jnp.float32) + attn                                            # (tq, E) f32

    # ---- LayerNorm 2 + MLP (c_fc -> QuickGELU -> c_proj) + residual ----
    h2 = _layernorm_f32(x1, ln2_g_ref[...], ln2_b_ref[...]).astype(compute_dtype)
    fc = jnp.dot(h2, w_fc_ref[...], preferred_element_type=jnp.float32) + b_fc_ref[...]
    gelu = fc * jax.nn.sigmoid(1.702 * fc)                                        # QuickGELU (f32)
    proj = jnp.dot(gelu.astype(compute_dtype), w_proj_ref[...],
                   preferred_element_type=jnp.float32) + b_proj_ref[...]

    o_ref[0] = (x1 + proj).astype(o_ref.dtype)


def _pick_tile(n, prefs):
    for t in prefs:
        if n >= t and n % t == 0:
            return t
    return n


def residual_attention_block(x, params, n_head: int, *,
                             compute_dtype=jnp.bfloat16,
                             q_tile: int = 256, kv_tile: int = 512):
    """x: (L, N, E) float32, PyTorch MultiheadAttention layout. Returns (L, N, E)."""
    L, N, E = x.shape
    assert E % n_head == 0

    (ln1_g, ln1_b, w_qkv, b_qkv, w_out, b_out,
     ln2_g, ln2_b, w_fc, b_fc, w_proj, b_proj) = params

    cd = compute_dtype
    f32 = jnp.float32

    def row(p):  # accept PyTorch-native (D,) or (1, D), return (1, D) f32
        return jnp.asarray(p, f32).reshape(1, -1)

    # Host-side: split the packed in_proj, pre-transpose every weight, cast to the
    # matmul compute dtype. Biases / LN params stay f32 (added post-accumulation).
    w_qkv = jnp.asarray(w_qkv)
    b_qkv = row(b_qkv)
    w_q = w_qkv[:E, :].T.astype(cd)
    w_k = w_qkv[E:2 * E, :].T.astype(cd)
    w_v = w_qkv[2 * E:, :].T.astype(cd)
    b_q, b_k, b_v = b_qkv[:, :E], b_qkv[:, E:2 * E], b_qkv[:, 2 * E:]

    weights = [
        row(ln1_g), row(ln1_b),
        w_q, w_k, w_v, b_q, b_k, b_v,
        jnp.asarray(w_out).T.astype(cd), row(b_out),
        row(ln2_g), row(ln2_b),
        jnp.asarray(w_fc).T.astype(cd), row(b_fc),
        jnp.asarray(w_proj).T.astype(cd), row(b_proj),
    ]

    # TODO(synk): lengths not divisible by the tile fall back to a single tile; a
    # pl.cdiv grid with in-kernel query masking would keep pipeline granularity
    # for lengths like 197/257.
    tq = _pick_tile(L, (q_tile, 256, 128))
    tkv = _pick_tile(L, (kv_tile, 256, 128))
    n_q = L // tq

    # TODO(synk): the (L,N,E)<->(N,L,E) transposes could be removed by tiling on the
    # native layout, but a (tq, N, E) block with small N violates the (8,128) block
    # rule; kept as explicit XLA transposes (counted in bytes_accessed below).
    xb = jnp.transpose(x, (1, 0, 2))   # (N, L, E)

    # Generation-aware VMEM budget (v7x has only 64 MiB per TensorCore).
    try:
        vmem_cap = int(pltpu.get_tpu_info().vmem_capacity_bytes)
    except Exception:  # pragma: no cover - unknown chip / interpret mode
        vmem_cap = 64 * 1024 * 1024
    cd_bytes = jnp.dtype(cd).itemsize
    param_bytes = sum(int(w.size) * w.dtype.itemsize for w in weights)
    need = (param_bytes                      # weights (single-buffered)
            + 2 * L * E * 4                  # double-buffered sequence block (f32)
            + 2 * tq * E * 4                 # double-buffered output tile
            + 2 * L * E * cd_bytes           # persistent K/V scratch
            + (n_head * tq * tkv + tq * 4 * E + 4 * tq * E + 2 * L * E) * 4)
    vmem_limit = int(min(int(vmem_cap * 0.9),
                         max(32 * 1024 * 1024, need + (8 << 20))))

    flops = N * (24 * L * E * E + 4 * L * L * E)
    transcendentals = N * L * (n_head * L + 4 * E)
    # x read + output write inside the kernel, plus the two wrapper transposes.
    bytes_accessed = int(6 * L * N * E * 4 + param_bytes)

    kernel = functools.partial(_residual_attention_block_kernel,
                               n_head=n_head, tq=tq, tkv=tkv, compute_dtype=cd)
    seq_spec = pl.BlockSpec((1, L, E), lambda b, qi: (b, 0, 0))
    out_spec = pl.BlockSpec((1, tq, E), lambda b, qi: (b, qi, 0))

    def _run(weight_pipeline_mode):
        if weight_pipeline_mode is None:
            weight_specs = [pl.BlockSpec(w.shape, lambda b, qi: (0, 0)) for w in weights]
        else:
            weight_specs = [pl.BlockSpec(w.shape, lambda b, qi: (0, 0),
                                         pipeline_mode=weight_pipeline_mode)
                            for w in weights]
        return pl.pallas_call(
            kernel,
            out_shape=jax.ShapeDtypeStruct((N, L, E), x.dtype),
            grid=(N, n_q),
            in_specs=[seq_spec, *weight_specs],
            out_specs=out_spec,
            scratch_shapes=[pltpu.VMEM((L, E), cd),   # K
                            pltpu.VMEM((L, E), cd)],  # V
            compiler_params=pltpu.CompilerParams(
                # batch "parallel" (megacore shards whole batches), query-tile axis
                # "arbitrary" so the per-batch K/V scratch reuse stays correct.
                dimension_semantics=("parallel", "arbitrary"),
                vmem_limit_bytes=vmem_limit),
            cost_estimate=pl.CostEstimate(
                flops=int(flops),
                transcendentals=int(transcendentals),
                bytes_accessed=bytes_accessed),
        )(xb, *weights)

    try:
        # Constant weight blocks never change across the grid: single-buffer them.
        out = _run(pl.Buffered(buffer_count=1))
    except Exception:
        # TODO(synk): fall back to default double-buffering if this JAX build rejects
        # single-buffered pipeline_mode on pallas_call operands.
        out = _run(None)

    return jnp.transpose(out, (1, 0, 2))


def init_params(key, d_model: int):
    """Deterministic synthetic parameters with PyTorch-native shapes."""
    E = d_model
    ks = jax.random.split(key, 6)
    s = 0.02
    ln1_g = jnp.ones((E,), jnp.float32)
    ln1_b = jnp.zeros((E,), jnp.float32)
    w_qkv = s * jax.random.normal(ks[0], (3 * E, E), jnp.float32)   # in_proj_weight
    b_qkv = s * jax.random.normal(ks[1], (3 * E,), jnp.float32)     # in_proj_bias
    w_out = s * jax.random.normal(ks[2], (E, E), jnp.float32)       # out_proj.weight
    b_out = jnp.zeros((E,), jnp.float32)                            # out_proj.bias
    ln2_g = jnp.ones((E,), jnp.float32)
    ln2_b = jnp.zeros((E,), jnp.float32)
    w_fc = s * jax.random.normal(ks[3], (4 * E, E), jnp.float32)    # mlp.c_fc.weight
    b_fc = s * jax.random.normal(ks[4], (4 * E,), jnp.float32)      # mlp.c_fc.bias
    w_proj = s * jax.random.normal(ks[5], (E, 4 * E), jnp.float32)  # mlp.c_proj.weight
    b_proj = jnp.zeros((E,), jnp.float32)                           # mlp.c_proj.bias
    return (ln1_g, ln1_b, w_qkv, b_qkv, w_out, b_out,
            ln2_g, ln2_b, w_fc, b_fc, w_proj, b_proj)


if __name__ == "__main__":
    # Small shapes consistent with the module: seq=8, batch=2, d_model=32, heads=4.
    L, N, E, H = 8, 2, 32, 4
    key = jax.random.PRNGKey(0)
    kx, kp = jax.random.split(key)
    x = jax.random.normal(kx, (L, N, E), jnp.float32)   # (seq, batch, d_model)
    params = init_params(kp, E)

    y = residual_attention_block(x, params, n_head=H)
    jax.block_until_ready(y)
    assert y.shape == (L, N, E)
    assert bool(jnp.all(jnp.isfinite(y)))
    print("KERNEL_OK")
</pallas_src>

<mosaic_0001>
module attributes {stable_mosaic.version = 11 : i64} {
  func.func @_residual_attention_block_kernel(%arg0: i32, %arg1: i32, %arg2: memref<1x8x32xf32, #tpu.memory_space<vmem>>, %arg3: memref<1x32xf32, #tpu.memory_space<vmem>>, %arg4: memref<1x32xf32, #tpu.memory_space<vmem>>, %arg5: memref<32x32xbf16, #tpu.memory_space<vmem>>, %arg6: memref<32x32xbf16, #tpu.memory_space<vmem>>, %arg7: memref<32x32xbf16, #tpu.memory_space<vmem>>, %arg8: memref<1x32xf32, #tpu.memory_space<vmem>>, %arg9: memref<1x32xf32, #tpu.memory_space<vmem>>, %arg10: memref<1x32xf32, #tpu.memory_space<vmem>>, %arg11: memref<32x32xbf16, #tpu.memory_space<vmem>>, %arg12: memref<1x32xf32, #tpu.memory_space<vmem>>, %arg13: memref<1x32xf32, #tpu.memory_space<vmem>>, %arg14: memref<1x32xf32, #tpu.memory_space<vmem>>, %arg15: memref<32x128xbf16, #tpu.memory_space<vmem>>, %arg16: memref<1x128xf32, #tpu.memory_space<vmem>>, %arg17: memref<128x32xbf16, #tpu.memory_space<vmem>>, %arg18: memref<1x32xf32, #tpu.memory_space<vmem>>, %arg19: memref<1x8x32xf32, #tpu.memory_space<vmem>>, %arg20: memref<8x32xbf16, #tpu.memory_space<vmem>>, %arg21: memref<8x32xbf16, #tpu.memory_space<vmem>>) attributes {dimension_semantics = [#tpu.dimension_semantics<parallel>, #tpu.dimension_semantics<arbitrary>], iteration_bounds = array<i64: 2, 1>, scalar_prefetch = 0 : i64, scratch_operands = 2 : i64, tpu.core_type = #tpu.core_type<tc>, window_params = [{transform_indices = @transform_0, window_bounds = array<i64: 1, 8, 32>}, {pipeline_mode = #tpu.pipeline_mode<synchronous>, transform_indices = @transform_1, window_bounds = array<i64: 1, 32>}, {pipeline_mode = #tpu.pipeline_mode<synchronous>, transform_indices = @transform_2, window_bounds = array<i64: 1, 32>}, {pipeline_mode = #tpu.pipeline_mode<synchronous>, transform_indices = @transform_3, window_bounds = array<i64: 32, 32>}, {pipeline_mode = #tpu.pipeline_mode<synchronous>, transform_indices = @transform_4, window_bounds = array<i64: 32, 32>}, {pipeline_mode = #tpu.pipeline_mode<synchronous>, transform_indices = @transform_5, window_bounds = array<i64: 32, 32>}, {pipeline_mode = #tpu.pipeline_mode<synchronous>, transform_indices = @transform_6, window_bounds = array<i64: 1, 32>}, {pipeline_mode = #tpu.pipeline_mode<synchronous>, transform_indices = @transform_7, window_bounds = array<i64: 1, 32>}, {pipeline_mode = #tpu.pipeline_mode<synchronous>, transform_indices = @transform_8, window_bounds = array<i64: 1, 32>}, {pipeline_mode = #tpu.pipeline_mode<synchronous>, transform_indices = @transform_9, window_bounds = array<i64: 32, 32>}, {pipeline_mode = #tpu.pipeline_mode<synchronous>, transform_indices = @transform_10, window_bounds = array<i64: 1, 32>}, {pipeline_mode = #tpu.pipeline_mode<synchronous>, transform_indices = @transform_11, window_bounds = array<i64: 1, 32>}, {pipeline_mode = #tpu.pipeline_mode<synchronous>, transform_indices = @transform_12, window_bounds = array<i64: 1, 32>}, {pipeline_mode = #tpu.pipeline_mode<synchronous>, transform_indices = @transform_13, window_bounds = array<i64: 32, 128>}, {pipeline_mode = #tpu.pipeline_mode<synchronous>, transform_indices = @transform_14, window_bounds = array<i64: 1, 128>}, {pipeline_mode = #tpu.pipeline_mode<synchronous>, transform_indices = @transform_15, window_bounds = array<i64: 128, 32>}, {pipeline_mode = #tpu.pipeline_mode<synchronous>, transform_indices = @transform_16, window_bounds = array<i64: 1, 32>}, {transform_indices = @transform_17, window_bounds = array<i64: 1, 8, 32>}]} {
    %c0 = arith.constant 0 : index
    %c0_0 = arith.constant 0 : index
    %0 = vector.load %arg3[%c0, %c0_0] : memref<1x32xf32, #tpu.memory_space<vmem>>, vector<1x32xf32>
    %c0_1 = arith.constant 0 : index
    %c0_2 = arith.constant 0 : index
    %1 = vector.load %arg4[%c0_1, %c0_2] : memref<1x32xf32, #tpu.memory_space<vmem>>, vector<1x32xf32>
    %c0_i32 = arith.constant 0 : i32
    %2 = arith.cmpi eq, %arg1, %c0_i32 : i32
    %3 = arith.extui %2 : i1 to i32
    %c0_i32_3 = arith.constant 0 : i32
    %4 = arith.cmpi ne, %3, %c0_i32_3 : i32
    scf.if %4 {
      %c0_56 = arith.constant 0 : index
      %c0_57 = arith.constant 0 : index
      %c0_58 = arith.constant 0 : index
      %126 = vector.load %arg2[%c0_56, %c0_57, %c0_58] : memref<1x8x32xf32, #tpu.memory_space<vmem>>, vector<1x8x32xf32>
      %127 = vector.shape_cast %126 : vector<1x8x32xf32> to vector<8x32xf32>
      %cst_59 = arith.constant dense<0.000000e+00> : vector<8xf32>
      %128 = vector.multi_reduction <add>, %127, %cst_59 [1] : vector<8x32xf32> to vector<8xf32>
      %129 = vector.shape_cast %128 : vector<8xf32> to vector<8x1xf32>
      %cst_60 = arith.constant 3.200000e+01 : f32
      %130 = vector.broadcast %cst_60 : f32 to vector<8x1xf32>
      %131 = arith.divf %129, %130 : vector<8x1xf32>
      %132 = vector.broadcast %131 : vector<8x1xf32> to vector<8x32xf32>
      %133 = arith.subf %127, %132 : vector<8x32xf32>
      %134 = arith.mulf %133, %133 : vector<8x32xf32>
      %cst_61 = arith.constant dense<0.000000e+00> : vector<8xf32>
      %135 = vector.multi_reduction <add>, %134, %cst_61 [1] : vector<8x32xf32> to vector<8xf32>
      %136 = vector.shape_cast %135 : vector<8xf32> to vector<8x1xf32>
      %cst_62 = arith.constant 3.200000e+01 : f32
      %137 = vector.broadcast %cst_62 : f32 to vector<8x1xf32>
      %138 = arith.divf %136, %137 : vector<8x1xf32>
      %cst_63 = arith.constant 9.99999974E-6 : f32
      %139 = vector.broadcast %cst_63 : f32 to vector<8x1xf32>
      %140 = arith.addf %138, %139 : vector<8x1xf32>
      %141 = math.rsqrt %140 : vector<8x1xf32>
      %142 = vector.broadcast %141 : vector<8x1xf32> to vector<8x32xf32>
      %143 = arith.mulf %133, %142 : vector<8x32xf32>
      %144 = vector.broadcast %0 : vector<1x32xf32> to vector<8x32xf32>
      %145 = arith.mulf %143, %144 : vector<8x32xf32>
      %146 = vector.broadcast %1 : vector<1x32xf32> to vector<8x32xf32>
      %147 = arith.addf %145, %146 : vector<8x32xf32>
      %148 = arith.truncf %147 : vector<8x32xf32> to vector<8x32xbf16>
      %c0_64 = arith.constant 0 : index
      %c0_65 = arith.constant 0 : index
      %149 = vector.load %arg6[%c0_64, %c0_65] : memref<32x32xbf16, #tpu.memory_space<vmem>>, vector<32x32xbf16>
      %cst_66 = arith.constant dense<0.000000e+00> : vector<8x32xf32>
      %150 = tpu.matmul %148, %149, %cst_66 {dimension_numbers = #tpu.dot_dimension_numbers<[1], [0], [0], [1], [0, 0, 1, 1], [], []>} : vector<8x32xbf16>, vector<32x32xbf16>, vector<8x32xf32> -> vector<8x32xf32>
      %c0_67 = arith.constant 0 : index
      %c0_68 = arith.constant 0 : index
      %151 = vector.load %arg9[%c0_67, %c0_68] : memref<1x32xf32, #tpu.memory_space<vmem>>, vector<1x32xf32>
      %152 = vector.broadcast %151 : vector<1x32xf32> to vector<8x32xf32>
      %153 = arith.addf %150, %152 : vector<8x32xf32>
      %c0_69 = arith.constant 0 : index
      %c0_70 = arith.constant 0 : index
      %154 = vector.load %arg7[%c0_69, %c0_70] : memref<32x32xbf16, #tpu.memory_space<vmem>>, vector<32x32xbf16>
      %cst_71 = arith.constant dense<0.000000e+00> : vector<8x32xf32>
      %155 = tpu.matmul %148, %154, %cst_71 {dimension_numbers = #tpu.dot_dimension_numbers<[1], [0], [0], [1], [0, 0, 1, 1], [], []>} : vector<8x32xbf16>, vector<32x32xbf16>, vector<8x32xf32> -> vector<8x32xf32>
      %c0_72 = arith.constant 0 : index
      %c0_73 = arith.constant 0 : index
      %156 = vector.load %arg10[%c0_72, %c0_73] : memref<1x32xf32, #tpu.memory_space<vmem>>, vector<1x32xf32>
      %157 = vector.broadcast %156 : vector<1x32xf32> to vector<8x32xf32>
      %158 = arith.addf %155, %157 : vector<8x32xf32>
      %159 = arith.truncf %153 : vector<8x32xf32> to vector<8x32xbf16>
      %c0_74 = arith.constant 0 : index
      %c0_75 = arith.constant 0 : index
      %160 = vector.load %arg20[%c0_74, %c0_75] : memref<8x32xbf16, #tpu.memory_space<vmem>>, vector<8x32xbf16>
      tpu.vector_store %arg20[%c0_74, %c0_75], %159 {strides = array<i32>} : memref<8x32xbf16, #tpu.memory_space<vmem>>, vector<8x32xbf16>,
      %161 = arith.truncf %158 : vector<8x32xf32> to vector<8x32xbf16>
      %c0_76 = arith.constant 0 : index
      %c0_77 = arith.constant 0 : index
      %162 = vector.load %arg21[%c0_76, %c0_77] : memref<8x32xbf16, #tpu.memory_space<vmem>>, vector<8x32xbf16>
      tpu.vector_store %arg21[%c0_76, %c0_77], %161 {strides = array<i32>} : memref<8x32xbf16, #tpu.memory_space<vmem>>, vector<8x32xbf16>,
    } else {
    }
    %c8_i32 = arith.constant 8 : i32
    %5 = arith.muli %arg1, %c8_i32 : i32
    %6 = tpu.assume_multiple %5, 8 : i32
    %c0_4 = arith.constant 0 : index
    %7 = arith.index_cast %6 : i32 to index
    %c0_5 = arith.constant 0 : index
    %8 = vector.load %arg2[%c0_4, %7, %c0_5] : memref<1x8x32xf32, #tpu.memory_space<vmem>>, vector<1x8x32xf32>
    %9 = vector.shape_cast %8 : vector<1x8x32xf32> to vector<8x32xf32>
    %cst = arith.constant dense<0.000000e+00> : vector<8xf32>
    %10 = vector.multi_reduction <add>, %9, %cst [1] : vector<8x32xf32> to vector<8xf32>
    %11 = vector.shape_cast %10 : vector<8xf32> to vector<8x1xf32>
    %cst_6 = arith.constant 3.200000e+01 : f32
    %12 = vector.broadcast %cst_6 : f32 to vector<8x1xf32>
    %13 = arith.divf %11, %12 : vector<8x1xf32>
    %14 = vector.broadcast %13 : vector<8x1xf32> to vector<8x32xf32>
    %15 = arith.subf %9, %14 : vector<8x32xf32>
    %16 = arith.mulf %15, %15 : vector<8x32xf32>
    %cst_7 = arith.constant dense<0.000000e+00> : vector<8xf32>
    %17 = vector.multi_reduction <add>, %16, %cst_7 [1] : vector<8x32xf32> to vector<8xf32>
    %18 = vector.shape_cast %17 : vector<8xf32> to vector<8x1xf32>
    %cst_8 = arith.constant 3.200000e+01 : f32
    %19 = vector.broadcast %cst_8 : f32 to vector<8x1xf32>
    %20 = arith.divf %18, %19 : vector<8x1xf32>
    %cst_9 = arith.constant 9.99999974E-6 : f32
    %21 = vector.broadcast %cst_9 : f32 to vector<8x1xf32>
    %22 = arith.addf %20, %21 : vector<8x1xf32>
    %23 = math.rsqrt %22 : vector<8x1xf32>
    %24 = vector.broadcast %23 : vector<8x1xf32> to vector<8x32xf32>
    %25 = arith.mulf %15, %24 : vector<8x32xf32>
    %26 = vector.broadcast %0 : vector<1x32xf32> to vector<8x32xf32>
    %27 = arith.mulf %25, %26 : vector<8x32xf32>
    %28 = vector.broadcast %1 : vector<1x32xf32> to vector<8x32xf32>
    %29 = arith.addf %27, %28 : vector<8x32xf32>
    %30 = arith.truncf %29 : vector<8x32xf32> to vector<8x32xbf16>
    %c0_10 = arith.constant 0 : index
    %c0_11 = arith.constant 0 : index
    %31 = vector.load %arg5[%c0_10, %c0_11] : memref<32x32xbf16, #tpu.memory_space<vmem>>, vector<32x32xbf16>
    %cst_12 = arith.constant dense<0.000000e+00> : vector<8x32xf32>
    %32 = tpu.matmul %30, %31, %cst_12 {dimension_numbers = #tpu.dot_dimension_numbers<[1], [0], [0], [1], [0, 0, 1, 1], [], []>} : vector<8x32xbf16>, vector<32x32xbf16>, vector<8x32xf32> -> vector<8x32xf32>
    %c0_13 = arith.constant 0 : index
    %c0_14 = arith.constant 0 : index
    %33 = vector.load %arg8[%c0_13, %c0_14] : memref<1x32xf32, #tpu.memory_space<vmem>>, vector<1x32xf32>
    %34 = vector.broadcast %33 : vector<1x32xf32> to vector<8x32xf32>
    %35 = arith.addf %32, %34 : vector<8x32xf32>
    %cst_15 = arith.constant 0.353553385 : f32
    %36 = vector.broadcast %cst_15 : f32 to vector<8x32xf32>
    %37 = arith.mulf %35, %36 : vector<8x32xf32>
    %38 = arith.truncf %37 : vector<8x32xf32> to vector<8x32xbf16>
    %39 = vector.shape_cast %38 : vector<8x32xbf16> to vector<8x4x8xbf16>
    %40 = tpu.transpose %39, [1, 0, 2] : vector<8x4x8xbf16> -> vector<4x8x8xbf16>
    %cst_16 = arith.constant 0xFF800000 : f32
    %41 = vector.broadcast %cst_16 : f32 to vector<4x8x1xf32>
    %cst_17 = arith.constant 0.000000e+00 : f32
    %42 = vector.broadcast %cst_17 : f32 to vector<4x8x1xf32>
    %cst_18 = arith.constant 0.000000e+00 : f32
    %43 = vector.broadcast %cst_18 : f32 to vector<4x8x8xf32>
    %c0_19 = arith.constant 0 : index
    %c0_20 = arith.constant 0 : index
    %44 = vector.load %arg20[%c0_19, %c0_20] : memref<8x32xbf16, #tpu.memory_space<vmem>>, vector<8x32xbf16>
    %c0_21 = arith.constant 0 : index
    %c0_22 = arith.constant 0 : index
    %45 = vector.load %arg21[%c0_21, %c0_22] : memref<8x32xbf16, #tpu.memory_space<vmem>>, vector<8x32xbf16>
    %46 = vector.shape_cast %44 : vector<8x32xbf16> to vector<8x4x8xbf16>
    %47 = tpu.transpose %46, [1, 0, 2] : vector<8x4x8xbf16> -> vector<4x8x8xbf16>
    %48 = vector.shape_cast %45 : vector<8x32xbf16> to vector<8x4x8xbf16>
    %49 = tpu.transpose %48, [1, 0, 2] : vector<8x4x8xbf16> -> vector<4x8x8xbf16>
    "tpu.trace_start"() <{level = 10 : i32, message = "hqd,hkd->hqk"}> : () -> ()
    %cst_23 = arith.constant dense<0.000000e+00> : vector<4x8x8xf32>
    %50 = tpu.matmul %40, %47, %cst_23 {dimension_numbers = #tpu.dot_dimension_numbers<[2], [2], [1], [1], [0, 0, 0, 1, 1, 1], [0], [0]>} : vector<4x8x8xbf16>, vector<4x8x8xbf16>, vector<4x8x8xf32> -> vector<4x8x8xf32>
    "tpu.trace_stop"() : () -> ()
    %cst_24 = arith.constant dense<0xFF800000> : vector<4x8xf32>
    %51 = vector.multi_reduction <maximumf>, %50, %cst_24 [2] : vector<4x8x8xf32> to vector<4x8xf32>
    %52 = vector.shape_cast %51 : vector<4x8xf32> to vector<4x8x1xf32>
    %53 = arith.maximumf %41, %52 : vector<4x8x1xf32>
    %54 = arith.subf %41, %53 : vector<4x8x1xf32>
    %55 = math.exp %54 : vector<4x8x1xf32>
    %56 = vector.broadcast %53 : vector<4x8x1xf32> to vector<4x8x8xf32>
    %57 = arith.subf %50, %56 : vector<4x8x8xf32>
    %58 = math.exp %57 : vector<4x8x8xf32>
    %59 = arith.mulf %55, %42 : vector<4x8x1xf32>
    %cst_25 = arith.constant dense<0.000000e+00> : vector<4x8xf32>
    %60 = vector.multi_reduction <add>, %58, %cst_25 [2] : vector<4x8x8xf32> to vector<4x8xf32>
    %61 = vector.shape_cast %60 : vector<4x8xf32> to vector<4x8x1xf32>
    %62 = arith.addf %59, %61 : vector<4x8x1xf32>
    %63 = vector.broadcast %55 : vector<4x8x1xf32> to vector<4x8x8xf32>
    %64 = arith.mulf %63, %43 : vector<4x8x8xf32>
    %65 = arith.truncf %58 : vector<4x8x8xf32> to vector<4x8x8xbf16>
    "tpu.trace_start"() <{level = 10 : i32, message = "hqk,hkd->hqd"}> : () -> ()
    %cst_26 = arith.constant dense<0.000000e+00> : vector<4x8x8xf32>
    %66 = tpu.matmul %65, %49, %cst_26 {dimension_numbers = #tpu.dot_dimension_numbers<[2], [1], [1], [2], [0, 0, 0, 1, 1, 2], [0], [0]>} : vector<4x8x8xbf16>, vector<4x8x8xbf16>, vector<4x8x8xf32> -> vector<4x8x8xf32>
    "tpu.trace_stop"() : () -> ()
    %67 = arith.addf %64, %66 : vector<4x8x8xf32>
    %68 = tpu.reciprocal %62 {approx = true} : vector<4x8x1xf32> -> vector<4x8x1xf32>
    %69 = vector.broadcast %68 : vector<4x8x1xf32> to vector<4x8x8xf32>
    %70 = arith.mulf %67, %69 : vector<4x8x8xf32>
    %71 = tpu.transpose %70, [1, 0, 2] : vector<4x8x8xf32> -> vector<8x4x8xf32>
    %72 = vector.shape_cast %71 : vector<8x4x8xf32> to vector<8x32xf32>
    %73 = arith.truncf %72 : vector<8x32xf32> to vector<8x32xbf16>
    %c0_27 = arith.constant 0 : index
    %c0_28 = arith.constant 0 : index
    %74 = vector.load %arg11[%c0_27, %c0_28] : memref<32x32xbf16, #tpu.memory_space<vmem>>, vector<32x32xbf16>
    %cst_29 = arith.constant dense<0.000000e+00> : vector<8x32xf32>
    %75 = tpu.matmul %73, %74, %cst_29 {dimension_numbers = #tpu.dot_dimension_numbers<[1], [0], [0], [1], [0, 0, 1, 1], [], []>} : vector<8x32xbf16>, vector<32x32xbf16>, vector<8x32xf32> -> vector<8x32xf32>
    %c0_30 = arith.constant 0 : index
    %c0_31 = arith.constant 0 : index
    %76 = vector.load %arg12[%c0_30, %c0_31] : memref<1x32xf32, #tpu.memory_space<vmem>>, vector<1x32xf32>
    %77 = vector.broadcast %76 : vector<1x32xf32> to vector<8x32xf32>
    %78 = arith.addf %75, %77 : vector<8x32xf32>
    %79 = arith.addf %9, %78 : vector<8x32xf32>
    %c0_32 = arith.constant 0 : index
    %c0_33 = arith.constant 0 : index
    %80 = vector.load %arg13[%c0_32, %c0_33] : memref<1x32xf32, #tpu.memory_space<vmem>>, vector<1x32xf32>
    %c0_34 = arith.constant 0 : index
    %c0_35 = arith.constant 0 : index
    %81 = vector.load %arg14[%c0_34, %c0_35] : memref<1x32xf32, #tpu.memory_space<vmem>>, vector<1x32xf32>
    %cst_36 = arith.constant dense<0.000000e+00> : vector<8xf32>
    %82 = vector.multi_reduction <add>, %79, %cst_36 [1] : vector<8x32xf32> to vector<8xf32>
    %83 = vector.shape_cast %82 : vector<8xf32> to vector<8x1xf32>
    %cst_37 = arith.constant 3.200000e+01 : f32
    %84 = vector.broadcast %cst_37 : f32 to vector<8x1xf32>
    %85 = arith.divf %83, %84 : vector<8x1xf32>
    %86 = vector.broadcast %85 : vector<8x1xf32> to vector<8x32xf32>
    %87 = arith.subf %79, %86 : vector<8x32xf32>
    %88 = arith.mulf %87, %87 : vector<8x32xf32>
    %cst_38 = arith.constant dense<0.000000e+00> : vector<8xf32>
    %89 = vector.multi_reduction <add>, %88, %cst_38 [1] : vector<8x32xf32> to vector<8xf32>
    %90 = vector.shape_cast %89 : vector<8xf32> to vector<8x1xf32>
    %cst_39 = arith.constant 3.200000e+01 : f32
    %91 = vector.broadcast %cst_39 : f32 to vector<8x1xf32>
    %92 = arith.divf %90, %91 : vector<8x1xf32>
    %cst_40 = arith.constant 9.99999974E-6 : f32
    %93 = vector.broadcast %cst_40 : f32 to vector<8x1xf32>
    %94 = arith.addf %92, %93 : vector<8x1xf32>
    %95 = math.rsqrt %94 : vector<8x1xf32>
    %96 = vector.broadcast %95 : vector<8x1xf32> to vector<8x32xf32>
    %97 = arith.mulf %87, %96 : vector<8x32xf32>
    %98 = vector.broadcast %80 : vector<1x32xf32> to vector<8x32xf32>
    %99 = arith.mulf %97, %98 : vector<8x32xf32>
    %100 = vector.broadcast %81 : vector<1x32xf32> to vector<8x32xf32>
    %101 = arith.addf %99, %100 : vector<8x32xf32>
    %102 = arith.truncf %101 : vector<8x32xf32> to vector<8x32xbf16>
    %c0_41 = arith.constant 0 : index
    %c0_42 = arith.constant 0 : index
    %103 = vector.load %arg15[%c0_41, %c0_42] : memref<32x128xbf16, #tpu.memory_space<vmem>>, vector<32x128xbf16>
    %cst_43 = arith.constant dense<0.000000e+00> : vector<8x128xf32>
    %104 = tpu.matmul %102, %103, %cst_43 {dimension_numbers = #tpu.dot_dimension_numbers<[1], [0], [0], [1], [0, 0, 1, 1], [], []>} : vector<8x32xbf16>, vector<32x128xbf16>, vector<8x128xf32> -> vector<8x128xf32>
    %c0_44 = arith.constant 0 : index
    %c0_45 = arith.constant 0 : index
    %105 = vector.load %arg16[%c0_44, %c0_45] : memref<1x128xf32, #tpu.memory_space<vmem>>, vector<1x128xf32>
    %106 = vector.broadcast %105 : vector<1x128xf32> to vector<8x128xf32>
    %107 = arith.addf %104, %106 : vector<8x128xf32>
    %cst_46 = arith.constant 1.702000e+00 : f32
    %108 = vector.broadcast %cst_46 : f32 to vector<8x128xf32>
    %109 = arith.mulf %108, %107 : vector<8x128xf32>
    %110 = arith.negf %109 : vector<8x128xf32>
    %111 = math.exp %110 : vector<8x128xf32>
    %cst_47 = arith.constant 1.000000e+00 : f32
    %112 = vector.broadcast %cst_47 : f32 to vector<8x128xf32>
    %113 = arith.addf %112, %111 : vector<8x128xf32>
    %114 = arith.divf %112, %113 : vector<8x128xf32>
    %115 = arith.mulf %107, %114 : vector<8x128xf32>
    %116 = arith.truncf %115 : vector<8x128xf32> to vector<8x128xbf16>
    %c0_48 = arith.constant 0 : index
    %c0_49 = arith.constant 0 : index
    %117 = vector.load %arg17[%c0_48, %c0_49] : memref<128x32xbf16, #tpu.memory_space<vmem>>, vector<128x32xbf16>
    %cst_50 = arith.constant dense<0.000000e+00> : vector<8x32xf32>
    %118 = tpu.matmul %116, %117, %cst_50 {dimension_numbers = #tpu.dot_dimension_numbers<[1], [0], [0], [1], [0, 0, 1, 1], [], []>} : vector<8x128xbf16>, vector<128x32xbf16>, vector<8x32xf32> -> vector<8x32xf32>
    %c0_51 = arith.constant 0 : index
    %c0_52 = arith.constant 0 : index
    %119 = vector.load %arg18[%c0_51, %c0_52] : memref<1x32xf32, #tpu.memory_space<vmem>>, vector<1x32xf32>
    %120 = vector.broadcast %119 : vector<1x32xf32> to vector<8x32xf32>
    %121 = arith.addf %118, %120 : vector<8x32xf32>
    %122 = arith.addf %79, %121 : vector<8x32xf32>
    %c0_53 = arith.constant 0 : index
    %c0_54 = arith.constant 0 : index
    %c0_55 = arith.constant 0 : index
    %123 = vector.load %arg19[%c0_53, %c0_54, %c0_55] : memref<1x8x32xf32, #tpu.memory_space<vmem>>, vector<1x8x32xf32>
    %124 = vector.shape_cast %123 : vector<1x8x32xf32> to vector<8x32xf32>
    %125 = vector.shape_cast %122 : vector<8x32xf32> to vector<1x8x32xf32>
    tpu.vector_store %arg19[%c0_53, %c0_54, %c0_55], %125 {strides = array<i32>} : memref<1x8x32xf32, #tpu.memory_space<vmem>>, vector<1x8x32xf32>,
    return
  }
  func.func @transform_0(%arg0: i32, %arg1: i32) -> (i32, i32, i32) {
    %c0_i32 = arith.constant 0 : i32
    %c0_i32_0 = arith.constant 0 : i32
    %c0_i32_1 = arith.constant 0 : i32
    return %arg0, %c0_i32, %c0_i32_0 : i32, i32, i32
  }
  func.func @transform_1(%arg0: i32, %arg1: i32) -> (i32, i32) {
    %c0_i32 = arith.constant 0 : i32
    %c0_i32_0 = arith.constant 0 : i32
    %c0_i32_1 = arith.constant 0 : i32
    return %c0_i32, %c0_i32_0 : i32, i32
  }
  func.func @transform_2(%arg0: i32, %arg1: i32) -> (i32, i32) {
    %c0_i32 = arith.constant 0 : i32
    %c0_i32_0 = arith.constant 0 : i32
    %c0_i32_1 = arith.constant 0 : i32
    return %c0_i32, %c0_i32_0 : i32, i32
  }
  func.func @transform_3(%arg0: i32, %arg1: i32) -> (i32, i32) {
    %c0_i32 = arith.constant 0 : i32
    %c0_i32_0 = arith.constant 0 : i32
    %c0_i32_1 = arith.constant 0 : i32
    return %c0_i32, %c0_i32_0 : i32, i32
  }
  func.func @transform_4(%arg0: i32, %arg1: i32) -> (i32, i32) {
    %c0_i32 = arith.constant 0 : i32
    %c0_i32_0 = arith.constant 0 : i32
    %c0_i32_1 = arith.constant 0 : i32
    return %c0_i32, %c0_i32_0 : i32, i32
  }
  func.func @transform_5(%arg0: i32, %arg1: i32) -> (i32, i32) {
    %c0_i32 = arith.constant 0 : i32
    %c0_i32_0 = arith.constant 0 : i32
    %c0_i32_1 = arith.constant 0 : i32
    return %c0_i32, %c0_i32_0 : i32, i32
  }
  func.func @transform_6(%arg0: i32, %arg1: i32) -> (i32, i32) {
    %c0_i32 = arith.constant 0 : i32
    %c0_i32_0 = arith.constant 0 : i32
    %c0_i32_1 = arith.constant 0 : i32
    return %c0_i32, %c0_i32_0 : i32, i32
  }
  func.func @transform_7(%arg0: i32, %arg1: i32) -> (i32, i32) {
    %c0_i32 = arith.constant 0 : i32
    %c0_i32_0 = arith.constant 0 : i32
    %c0_i32_1 = arith.constant 0 : i32
    return %c0_i32, %c0_i32_0 : i32, i32
  }
  func.func @transform_8(%arg0: i32, %arg1: i32) -> (i32, i32) {
    %c0_i32 = arith.constant 0 : i32
    %c0_i32_0 = arith.constant 0 : i32
    %c0_i32_1 = arith.constant 0 : i32
    return %c0_i32, %c0_i32_0 : i32, i32
  }
  func.func @transform_9(%arg0: i32, %arg1: i32) -> (i32, i32) {
    %c0_i32 = arith.constant 0 : i32
    %c0_i32_0 = arith.constant 0 : i32
    %c0_i32_1 = arith.constant 0 : i32
    return %c0_i32, %c0_i32_0 : i32, i32
  }
  func.func @transform_10(%arg0: i32, %arg1: i32) -> (i32, i32) {
    %c0_i32 = arith.constant 0 : i32
    %c0_i32_0 = arith.constant 0 : i32
    %c0_i32_1 = arith.constant 0 : i32
    return %c0_i32, %c0_i32_0 : i32, i32
  }
  func.func @transform_11(%arg0: i32, %arg1: i32) -> (i32, i32) {
    %c0_i32 = arith.constant 0 : i32
    %c0_i32_0 = arith.constant 0 : i32
    %c0_i32_1 = arith.constant 0 : i32
    return %c0_i32, %c0_i32_0 : i32, i32
  }
  func.func @transform_12(%arg0: i32, %arg1: i32) -> (i32, i32) {
    %c0_i32 = arith.constant 0 : i32
    %c0_i32_0 = arith.constant 0 : i32
    %c0_i32_1 = arith.constant 0 : i32
    return %c0_i32, %c0_i32_0 : i32, i32
  }
  func.func @transform_13(%arg0: i32, %arg1: i32) -> (i32, i32) {
    %c0_i32 = arith.constant 0 : i32
    %c0_i32_0 = arith.constant 0 : i32
    %c0_i32_1 = arith.constant 0 : i32
    return %c0_i32, %c0_i32_0 : i32, i32
  }
  func.func @transform_14(%arg0: i32, %arg1: i32) -> (i32, i32) {
    %c0_i32 = arith.constant 0 : i32
    %c0_i32_0 = arith.constant 0 : i32
    %c0_i32_1 = arith.constant 0 : i32
    return %c0_i32, %c0_i32_0 : i32, i32
  }
  func.func @transform_15(%arg0: i32, %arg1: i32) -> (i32, i32) {
    %c0_i32 = arith.constant 0 : i32
    %c0_i32_0 = arith.constant 0 : i32
    %c0_i32_1 = arith.constant 0 : i32
    return %c0_i32, %c0_i32_0 : i32, i32
  }
  func.func @transform_16(%arg0: i32, %arg1: i32) -> (i32, i32) {
    %c0_i32 = arith.constant 0 : i32
    %c0_i32_0 = arith.constant 0 : i32
    %c0_i32_1 = arith.constant 0 : i32
    return %c0_i32, %c0_i32_0 : i32, i32
  }
  func.func @transform_17(%arg0: i32, %arg1: i32) -> (i32, i32, i32) {
    %c0_i32 = arith.constant 0 : i32
    %c0_i32_0 = arith.constant 0 : i32
    return %arg0, %arg1, %c0_i32 : i32, i32, i32
  }
}

module attributes {stable_mosaic.version = 11 : i64} {
  func.func @_residual_attention_block_kernel(%arg0: i32, %arg1: i32, %arg2: memref<1x8x32xf32, #tpu.memory_space<vmem>>, %arg3: memref<1x32xf32, #tpu.memory_space<vmem>>, %arg4: memref<1x32xf32, #tpu.memory_space<vmem>>, %arg5: memref<32x32xbf16, #tpu.memory_space<vmem>>, %arg6: memref<32x32xbf16, #tpu.memory_space<vmem>>, %arg7: memref<32x32xbf16, #tpu.memory_space<vmem>>, %arg8: memref<1x32xf32, #tpu.memory_space<vmem>>, %arg9: memref<1x32xf32, #tpu.memory_space<vmem>>, %arg10: memref<1x32xf32, #tpu.memory_space<vmem>>, %arg11: memref<32x32xbf16, #tpu.memory_space<vmem>>, %arg12: memref<1x32xf32, #tpu.memory_space<vmem>>, %arg13: memref<1x32xf32, #tpu.memory_space<vmem>>, %arg14: memref<1x32xf32, #tpu.memory_space<vmem>>, %arg15: memref<32x128xbf16, #tpu.memory_space<vmem>>, %arg16: memref<1x128xf32, #tpu.memory_space<vmem>>, %arg17: memref<128x32xbf16, #tpu.memory_space<vmem>>, %arg18: memref<1x32xf32, #tpu.memory_space<vmem>>, %arg19: memref<1x8x32xf32, #tpu.memory_space<vmem>>, %arg20: memref<8x32xbf16, #tpu.memory_space<vmem>>, %arg21: memref<8x32xbf16, #tpu.memory_space<vmem>>) attributes {dimension_semantics = [#tpu.dimension_semantics<parallel>, #tpu.dimension_semantics<arbitrary>], iteration_bounds = array<i64: 2, 1>, scalar_prefetch = 0 : i64, scratch_operands = 2 : i64, tpu.core_type = #tpu.core_type<tc>, window_params = [{transform_indices = @transform_0, window_bounds = array<i64: 1, 8, 32>}, {pipeline_mode = #tpu.pipeline_mode<synchronous>, transform_indices = @transform_1, window_bounds = array<i64: 1, 32>}, {pipeline_mode = #tpu.pipeline_mode<synchronous>, transform_indices = @transform_2, window_bounds = array<i64: 1, 32>}, {pipeline_mode = #tpu.pipeline_mode<synchronous>, transform_indices = @transform_3, window_bounds = array<i64: 32, 32>}, {pipeline_mode = #tpu.pipeline_mode<synchronous>, transform_indices = @transform_4, window_bounds = array<i64: 32, 32>}, {pipeline_mode = #tpu.pipeline_mode<synchronous>, transform_indices = @transform_5, window_bounds = array<i64: 32, 32>}, {pipeline_mode = #tpu.pipeline_mode<synchronous>, transform_indices = @transform_6, window_bounds = array<i64: 1, 32>}, {pipeline_mode = #tpu.pipeline_mode<synchronous>, transform_indices = @transform_7, window_bounds = array<i64: 1, 32>}, {pipeline_mode = #tpu.pipeline_mode<synchronous>, transform_indices = @transform_8, window_bounds = array<i64: 1, 32>}, {pipeline_mode = #tpu.pipeline_mode<synchronous>, transform_indices = @transform_9, window_bounds = array<i64: 32, 32>}, {pipeline_mode = #tpu.pipeline_mode<synchronous>, transform_indices = @transform_10, window_bounds = array<i64: 1, 32>}, {pipeline_mode = #tpu.pipeline_mode<synchronous>, transform_indices = @transform_11, window_bounds = array<i64: 1, 32>}, {pipeline_mode = #tpu.pipeline_mode<synchronous>, transform_indices = @transform_12, window_bounds = array<i64: 1, 32>}, {pipeline_mode = #tpu.pipeline_mode<synchronous>, transform_indices = @transform_13, window_bounds = array<i64: 32, 128>}, {pipeline_mode = #tpu.pipeline_mode<synchronous>, transform_indices = @transform_14, window_bounds = array<i64: 1, 128>}, {pipeline_mode = #tpu.pipeline_mode<synchronous>, transform_indices = @transform_15, window_bounds = array<i64: 128, 32>}, {pipeline_mode = #tpu.pipeline_mode<synchronous>, transform_indices = @transform_16, window_bounds = array<i64: 1, 32>}, {transform_indices = @transform_17, window_bounds = array<i64: 1, 8, 32>}]} {
    %c0 = arith.constant 0 : index
    %c0_0 = arith.constant 0 : index
    %0 = vector.load %arg3[%c0, %c0_0] : memref<1x32xf32, #tpu.memory_space<vmem>>, vector<1x32xf32>
    %c0_1 = arith.constant 0 : index
    %c0_2 = arith.constant 0 : index
    %1 = vector.load %arg4[%c0_1, %c0_2] : memref<1x32xf32, #tpu.memory_space<vmem>>, vector<1x32xf32>
    %c0_i32 = arith.constant 0 : i32
    %2 = arith.cmpi eq, %arg1, %c0_i32 : i32
    %3 = arith.extui %2 : i1 to i32
    %c0_i32_3 = arith.constant 0 : i32
    %4 = arith.cmpi ne, %3, %c0_i32_3 : i32
    scf.if %4 {
      %c0_56 = arith.constant 0 : index
      %c0_57 = arith.constant 0 : index
      %c0_58 = arith.constant 0 : index
      %126 = vector.load %arg2[%c0_56, %c0_57, %c0_58] : memref<1x8x32xf32, #tpu.memory_space<vmem>>, vector<1x8x32xf32>
      %127 = vector.shape_cast %126 : vector<1x8x32xf32> to vector<8x32xf32>
      %cst_59 = arith.constant dense<0.000000e+00> : vector<8xf32>
      %128 = vector.multi_reduction <add>, %127, %cst_59 [1] : vector<8x32xf32> to vector<8xf32>
      %129 = vector.shape_cast %128 : vector<8xf32> to vector<8x1xf32>
      %cst_60 = arith.constant 3.200000e+01 : f32
      %130 = vector.broadcast %cst_60 : f32 to vector<8x1xf32>
      %131 = arith.divf %129, %130 : vector<8x1xf32>
      %132 = vector.broadcast %131 : vector<8x1xf32> to vector<8x32xf32>
      %133 = arith.subf %127, %132 : vector<8x32xf32>
      %134 = arith.mulf %133, %133 : vector<8x32xf32>
      %cst_61 = arith.constant dense<0.000000e+00> : vector<8xf32>
      %135 = vector.multi_reduction <add>, %134, %cst_61 [1] : vector<8x32xf32> to vector<8xf32>
      %136 = vector.shape_cast %135 : vector<8xf32> to vector<8x1xf32>
      %cst_62 = arith.constant 3.200000e+01 : f32
      %137 = vector.broadcast %cst_62 : f32 to vector<8x1xf32>
      %138 = arith.divf %136, %137 : vector<8x1xf32>
      %cst_63 = arith.constant 9.99999974E-6 : f32
      %139 = vector.broadcast %cst_63 : f32 to vector<8x1xf32>
      %140 = arith.addf %138, %139 : vector<8x1xf32>
      %141 = math.rsqrt %140 : vector<8x1xf32>
      %142 = vector.broadcast %141 : vector<8x1xf32> to vector<8x32xf32>
      %143 = arith.mulf %133, %142 : vector<8x32xf32>
      %144 = vector.broadcast %0 : vector<1x32xf32> to vector<8x32xf32>
      %145 = arith.mulf %143, %144 : vector<8x32xf32>
      %146 = vector.broadcast %1 : vector<1x32xf32> to vector<8x32xf32>
      %147 = arith.addf %145, %146 : vector<8x32xf32>
      %148 = arith.truncf %147 : vector<8x32xf32> to vector<8x32xbf16>
      %c0_64 = arith.constant 0 : index
      %c0_65 = arith.constant 0 : index
      %149 = vector.load %arg6[%c0_64, %c0_65] : memref<32x32xbf16, #tpu.memory_space<vmem>>, vector<32x32xbf16>
      %cst_66 = arith.constant dense<0.000000e+00> : vector<8x32xf32>
      %150 = tpu.matmul %148, %149, %cst_66 {dimension_numbers = #tpu.dot_dimension_numbers<[1], [0], [0], [1], [0, 0, 1, 1], [], []>} : vector<8x32xbf16>, vector<32x32xbf16>, vector<8x32xf32> -> vector<8x32xf32>
      %c0_67 = arith.constant 0 : index
      %c0_68 = arith.constant 0 : index
      %151 = vector.load %arg9[%c0_67, %c0_68] : memref<1x32xf32, #tpu.memory_space<vmem>>, vector<1x32xf32>
      %152 = vector.broadcast %151 : vector<1x32xf32> to vector<8x32xf32>
      %153 = arith.addf %150, %152 : vector<8x32xf32>
      %c0_69 = arith.constant 0 : index
      %c0_70 = arith.constant 0 : index
      %154 = vector.load %arg7[%c0_69, %c0_70] : memref<32x32xbf16, #tpu.memory_space<vmem>>, vector<32x32xbf16>
      %cst_71 = arith.constant dense<0.000000e+00> : vector<8x32xf32>
      %155 = tpu.matmul %148, %154, %cst_71 {dimension_numbers = #tpu.dot_dimension_numbers<[1], [0], [0], [1], [0, 0, 1, 1], [], []>} : vector<8x32xbf16>, vector<32x32xbf16>, vector<8x32xf32> -> vector<8x32xf32>
      %c0_72 = arith.constant 0 : index
      %c0_73 = arith.constant 0 : index
      %156 = vector.load %arg10[%c0_72, %c0_73] : memref<1x32xf32, #tpu.memory_space<vmem>>, vector<1x32xf32>
      %157 = vector.broadcast %156 : vector<1x32xf32> to vector<8x32xf32>
      %158 = arith.addf %155, %157 : vector<8x32xf32>
      %159 = arith.truncf %153 : vector<8x32xf32> to vector<8x32xbf16>
      %c0_74 = arith.constant 0 : index
      %c0_75 = arith.constant 0 : index
      %160 = vector.load %arg20[%c0_74, %c0_75] : memref<8x32xbf16, #tpu.memory_space<vmem>>, vector<8x32xbf16>
      tpu.vector_store %arg20[%c0_74, %c0_75], %159 {strides = array<i32>} : memref<8x32xbf16, #tpu.memory_space<vmem>>, vector<8x32xbf16>,
      %161 = arith.truncf %158 : vector<8x32xf32> to vector<8x32xbf16>
      %c0_76 = arith.constant 0 : index
      %c0_77 = arith.constant 0 : index
      %162 = vector.load %arg21[%c0_76, %c0_77] : memref<8x32xbf16, #tpu.memory_space<vmem>>, vector<8x32xbf16>
      tpu.vector_store %arg21[%c0_76, %c0_77], %161 {strides = array<i32>} : memref<8x32xbf16, #tpu.memory_space<vmem>>, vector<8x32xbf16>,
    } else {
    }
    %c8_i32 = arith.constant 8 : i32
    %5 = arith.muli %arg1, %c8_i32 : i32
    %6 = tpu.assume_multiple %5, 8 : i32
    %c0_4 = arith.constant 0 : index
    %7 = arith.index_cast %6 : i32 to index
    %c0_5 = arith.constant 0 : index
    %8 = vector.load %arg2[%c0_4, %7, %c0_5] : memref<1x8x32xf32, #tpu.memory_space<vmem>>, vector<1x8x32xf32>
    %9 = vector.shape_cast %8 : vector<1x8x32xf32> to vector<8x32xf32>
    %cst = arith.constant dense<0.000000e+00> : vector<8xf32>
    %10 = vector.multi_reduction <add>, %9, %cst [1] : vector<8x32xf32> to vector<8xf32>
    %11 = vector.shape_cast %10 : vector<8xf32> to vector<8x1xf32>
    %cst_6 = arith.constant 3.200000e+01 : f32
    %12 = vector.broadcast %cst_6 : f32 to vector<8x1xf32>
    %13 = arith.divf %11, %12 : vector<8x1xf32>
    %14 = vector.broadcast %13 : vector<8x1xf32> to vector<8x32xf32>
    %15 = arith.subf %9, %14 : vector<8x32xf32>
    %16 = arith.mulf %15, %15 : vector<8x32xf32>
    %cst_7 = arith.constant dense<0.000000e+00> : vector<8xf32>
    %17 = vector.multi_reduction <add>, %16, %cst_7 [1] : vector<8x32xf32> to vector<8xf32>
    %18 = vector.shape_cast %17 : vector<8xf32> to vector<8x1xf32>
    %cst_8 = arith.constant 3.200000e+01 : f32
    %19 = vector.broadcast %cst_8 : f32 to vector<8x1xf32>
    %20 = arith.divf %18, %19 : vector<8x1xf32>
    %cst_9 = arith.constant 9.99999974E-6 : f32
    %21 = vector.broadcast %cst_9 : f32 to vector<8x1xf32>
    %22 = arith.addf %20, %21 : vector<8x1xf32>
    %23 = math.rsqrt %22 : vector<8x1xf32>
    %24 = vector.broadcast %23 : vector<8x1xf32> to vector<8x32xf32>
    %25 = arith.mulf %15, %24 : vector<8x32xf32>
    %26 = vector.broadcast %0 : vector<1x32xf32> to vector<8x32xf32>
    %27 = arith.mulf %25, %26 : vector<8x32xf32>
    %28 = vector.broadcast %1 : vector<1x32xf32> to vector<8x32xf32>
    %29 = arith.addf %27, %28 : vector<8x32xf32>
    %30 = arith.truncf %29 : vector<8x32xf32> to vector<8x32xbf16>
    %c0_10 = arith.constant 0 : index
    %c0_11 = arith.constant 0 : index
    %31 = vector.load %arg5[%c0_10, %c0_11] : memref<32x32xbf16, #tpu.memory_space<vmem>>, vector<32x32xbf16>
    %cst_12 = arith.constant dense<0.000000e+00> : vector<8x32xf32>
    %32 = tpu.matmul %30, %31, %cst_12 {dimension_numbers = #tpu.dot_dimension_numbers<[1], [0], [0], [1], [0, 0, 1, 1], [], []>} : vector<8x32xbf16>, vector<32x32xbf16>, vector<8x32xf32> -> vector<8x32xf32>
    %c0_13 = arith.constant 0 : index
    %c0_14 = arith.constant 0 : index
    %33 = vector.load %arg8[%c0_13, %c0_14] : memref<1x32xf32, #tpu.memory_space<vmem>>, vector<1x32xf32>
    %34 = vector.broadcast %33 : vector<1x32xf32> to vector<8x32xf32>
    %35 = arith.addf %32, %34 : vector<8x32xf32>
    %cst_15 = arith.constant 0.353553385 : f32
    %36 = vector.broadcast %cst_15 : f32 to vector<8x32xf32>
    %37 = arith.mulf %35, %36 : vector<8x32xf32>
    %38 = arith.truncf %37 : vector<8x32xf32> to vector<8x32xbf16>
    %39 = vector.shape_cast %38 : vector<8x32xbf16> to vector<8x4x8xbf16>
    %40 = tpu.transpose %39, [1, 0, 2] : vector<8x4x8xbf16> -> vector<4x8x8xbf16>
    %cst_16 = arith.constant 0xFF800000 : f32
    %41 = vector.broadcast %cst_16 : f32 to vector<4x8x1xf32>
    %cst_17 = arith.constant 0.000000e+00 : f32
    %42 = vector.broadcast %cst_17 : f32 to vector<4x8x1xf32>
    %cst_18 = arith.constant 0.000000e+00 : f32
    %43 = vector.broadcast %cst_18 : f32 to vector<4x8x8xf32>
    %c0_19 = arith.constant 0 : index
    %c0_20 = arith.constant 0 : index
    %44 = vector.load %arg20[%c0_19, %c0_20] : memref<8x32xbf16, #tpu.memory_space<vmem>>, vector<8x32xbf16>
    %c0_21 = arith.constant 0 : index
    %c0_22 = arith.constant 0 : index
    %45 = vector.load %arg21[%c0_21, %c0_22] : memref<8x32xbf16, #tpu.memory_space<vmem>>, vector<8x32xbf16>
    %46 = vector.shape_cast %44 : vector<8x32xbf16> to vector<8x4x8xbf16>
    %47 = tpu.transpose %46, [1, 0, 2] : vector<8x4x8xbf16> -> vector<4x8x8xbf16>
    %48 = vector.shape_cast %45 : vector<8x32xbf16> to vector<8x4x8xbf16>
    %49 = tpu.transpose %48, [1, 0, 2] : vector<8x4x8xbf16> -> vector<4x8x8xbf16>
    "tpu.trace_start"() <{level = 10 : i32, message = "hqd,hkd->hqk"}> : () -> ()
    %cst_23 = arith.constant dense<0.000000e+00> : vector<4x8x8xf32>
    %50 = tpu.matmul %40, %47, %cst_23 {dimension_numbers = #tpu.dot_dimension_numbers<[2], [2], [1], [1], [0, 0, 0, 1, 1, 1], [0], [0]>} : vector<4x8x8xbf16>, vector<4x8x8xbf16>, vector<4x8x8xf32> -> vector<4x8x8xf32>
    "tpu.trace_stop"() : () -> ()
    %cst_24 = arith.constant dense<0xFF800000> : vector<4x8xf32>
    %51 = vector.multi_reduction <maximumf>, %50, %cst_24 [2] : vector<4x8x8xf32> to vector<4x8xf32>
    %52 = vector.shape_cast %51 : vector<4x8xf32> to vector<4x8x1xf32>
    %53 = arith.maximumf %41, %52 : vector<4x8x1xf32>
    %54 = arith.subf %41, %53 : vector<4x8x1xf32>
    %55 = math.exp %54 : vector<4x8x1xf32>
    %56 = vector.broadcast %53 : vector<4x8x1xf32> to vector<4x8x8xf32>
    %57 = arith.subf %50, %56 : vector<4x8x8xf32>
    %58 = math.exp %57 : vector<4x8x8xf32>
    %59 = arith.mulf %55, %42 : vector<4x8x1xf32>
    %cst_25 = arith.constant dense<0.000000e+00> : vector<4x8xf32>
    %60 = vector.multi_reduction <add>, %58, %cst_25 [2] : vector<4x8x8xf32> to vector<4x8xf32>
    %61 = vector.shape_cast %60 : vector<4x8xf32> to vector<4x8x1xf32>
    %62 = arith.addf %59, %61 : vector<4x8x1xf32>
    %63 = vector.broadcast %55 : vector<4x8x1xf32> to vector<4x8x8xf32>
    %64 = arith.mulf %63, %43 : vector<4x8x8xf32>
    %65 = arith.truncf %58 : vector<4x8x8xf32> to vector<4x8x8xbf16>
    "tpu.trace_start"() <{level = 10 : i32, message = "hqk,hkd->hqd"}> : () -> ()
    %cst_26 = arith.constant dense<0.000000e+00> : vector<4x8x8xf32>
    %66 = tpu.matmul %65, %49, %cst_26 {dimension_numbers = #tpu.dot_dimension_numbers<[2], [1], [1], [2], [0, 0, 0, 1, 1, 2], [0], [0]>} : vector<4x8x8xbf16>, vector<4x8x8xbf16>, vector<4x8x8xf32> -> vector<4x8x8xf32>
    "tpu.trace_stop"() : () -> ()
    %67 = arith.addf %64, %66 : vector<4x8x8xf32>
    %68 = tpu.reciprocal %62 {approx = true} : vector<4x8x1xf32> -> vector<4x8x1xf32>
    %69 = vector.broadcast %68 : vector<4x8x1xf32> to vector<4x8x8xf32>
    %70 = arith.mulf %67, %69 : vector<4x8x8xf32>
    %71 = tpu.transpose %70, [1, 0, 2] : vector<4x8x8xf32> -> vector<8x4x8xf32>
    %72 = vector.shape_cast %71 : vector<8x4x8xf32> to vector<8x32xf32>
    %73 = arith.truncf %72 : vector<8x32xf32> to vector<8x32xbf16>
    %c0_27 = arith.constant 0 : index
    %c0_28 = arith.constant 0 : index
    %74 = vector.load %arg11[%c0_27, %c0_28] : memref<32x32xbf16, #tpu.memory_space<vmem>>, vector<32x32xbf16>
    %cst_29 = arith.constant dense<0.000000e+00> : vector<8x32xf32>
    %75 = tpu.matmul %73, %74, %cst_29 {dimension_numbers = #tpu.dot_dimension_numbers<[1], [0], [0], [1], [0, 0, 1, 1], [], []>} : vector<8x32xbf16>, vector<32x32xbf16>, vector<8x32xf32> -> vector<8x32xf32>
    %c0_30 = arith.constant 0 : index
    %c0_31 = arith.constant 0 : index
    %76 = vector.load %arg12[%c0_30, %c0_31] : memref<1x32xf32, #tpu.memory_space<vmem>>, vector<1x32xf32>
    %77 = vector.broadcast %76 : vector<1x32xf32> to vector<8x32xf32>
    %78 = arith.addf %75, %77 : vector<8x32xf32>
    %79 = arith.addf %9, %78 : vector<8x32xf32>
    %c0_32 = arith.constant 0 : index
    %c0_33 = arith.constant 0 : index
    %80 = vector.load %arg13[%c0_32, %c0_33] : memref<1x32xf32, #tpu.memory_space<vmem>>, vector<1x32xf32>
    %c0_34 = arith.constant 0 : index
    %c0_35 = arith.constant 0 : index
    %81 = vector.load %arg14[%c0_34, %c0_35] : memref<1x32xf32, #tpu.memory_space<vmem>>, vector<1x32xf32>
    %cst_36 = arith.constant dense<0.000000e+00> : vector<8xf32>
    %82 = vector.multi_reduction <add>, %79, %cst_36 [1] : vector<8x32xf32> to vector<8xf32>
    %83 = vector.shape_cast %82 : vector<8xf32> to vector<8x1xf32>
    %cst_37 = arith.constant 3.200000e+01 : f32
    %84 = vector.broadcast %cst_37 : f32 to vector<8x1xf32>
    %85 = arith.divf %83, %84 : vector<8x1xf32>
    %86 = vector.broadcast %85 : vector<8x1xf32> to vector<8x32xf32>
    %87 = arith.subf %79, %86 : vector<8x32xf32>
    %88 = arith.mulf %87, %87 : vector<8x32xf32>
    %cst_38 = arith.constant dense<0.000000e+00> : vector<8xf32>
    %89 = vector.multi_reduction <add>, %88, %cst_38 [1] : vector<8x32xf32> to vector<8xf32>
    %90 = vector.shape_cast %89 : vector<8xf32> to vector<8x1xf32>
    %cst_39 = arith.constant 3.200000e+01 : f32
    %91 = vector.broadcast %cst_39 : f32 to vector<8x1xf32>
    %92 = arith.divf %90, %91 : vector<8x1xf32>
    %cst_40 = arith.constant 9.99999974E-6 : f32
    %93 = vector.broadcast %cst_40 : f32 to vector<8x1xf32>
    %94 = arith.addf %92, %93 : vector<8x1xf32>
    %95 = math.rsqrt %94 : vector<8x1xf32>
    %96 = vector.broadcast %95 : vector<8x1xf32> to vector<8x32xf32>
    %97 = arith.mulf %87, %96 : vector<8x32xf32>
    %98 = vector.broadcast %80 : vector<1x32xf32> to vector<8x32xf32>
    %99 = arith.mulf %97, %98 : vector<8x32xf32>
    %100 = vector.broadcast %81 : vector<1x32xf32> to vector<8x32xf32>
    %101 = arith.addf %99, %100 : vector<8x32xf32>
    %102 = arith.truncf %101 : vector<8x32xf32> to vector<8x32xbf16>
    %c0_41 = arith.constant 0 : index
    %c0_42 = arith.constant 0 : index
    %103 = vector.load %arg15[%c0_41, %c0_42] : memref<32x128xbf16, #tpu.memory_space<vmem>>, vector<32x128xbf16>
    %cst_43 = arith.constant dense<0.000000e+00> : vector<8x128xf32>
    %104 = tpu.matmul %102, %103, %cst_43 {dimension_numbers = #tpu.dot_dimension_numbers<[1], [0], [0], [1], [0, 0, 1, 1], [], []>} : vector<8x32xbf16>, vector<32x128xbf16>, vector<8x128xf32> -> vector<8x128xf32>
    %c0_44 = arith.constant 0 : index
    %c0_45 = arith.constant 0 : index
    %105 = vector.load %arg16[%c0_44, %c0_45] : memref<1x128xf32, #tpu.memory_space<vmem>>, vector<1x128xf32>
    %106 = vector.broadcast %105 : vector<1x128xf32> to vector<8x128xf32>
    %107 = arith.addf %104, %106 : vector<8x128xf32>
    %cst_46 = arith.constant 1.702000e+00 : f32
    %108 = vector.broadcast %cst_46 : f32 to vector<8x128xf32>
    %109 = arith.mulf %108, %107 : vector<8x128xf32>
    %110 = arith.negf %109 : vector<8x128xf32>
    %111 = math.exp %110 : vector<8x128xf32>
    %cst_47 = arith.constant 1.000000e+00 : f32
    %112 = vector.broadcast %cst_47 : f32 to vector<8x128xf32>
    %113 = arith.addf %112, %111 : vector<8x128xf32>
    %114 = arith.divf %112, %113 : vector<8x128xf32>
    %115 = arith.mulf %107, %114 : vector<8x128xf32>
    %116 = arith.truncf %115 : vector<8x128xf32> to vector<8x128xbf16>
    %c0_48 = arith.constant 0 : index
    %c0_49 = arith.constant 0 : index
    %117 = vector.load %arg17[%c0_48, %c0_49] : memref<128x32xbf16, #tpu.memory_space<vmem>>, vector<128x32xbf16>
    %cst_50 = arith.constant dense<0.000000e+00> : vector<8x32xf32>
    %118 = tpu.matmul %116, %117, %cst_50 {dimension_numbers = #tpu.dot_dimension_numbers<[1], [0], [0], [1], [0, 0, 1, 1], [], []>} : vector<8x128xbf16>, vector<128x32xbf16>, vector<8x32xf32> -> vector<8x32xf32>
    %c0_51 = arith.constant 0 : index
    %c0_52 = arith.constant 0 : index
    %119 = vector.load %arg18[%c0_51, %c0_52] : memref<1x32xf32, #tpu.memory_space<vmem>>, vector<1x32xf32>
    %120 = vector.broadcast %119 : vector<1x32xf32> to vector<8x32xf32>
    %121 = arith.addf %118, %120 : vector<8x32xf32>
    %122 = arith.addf %79, %121 : vector<8x32xf32>
    %c0_53 = arith.constant 0 : index
    %c0_54 = arith.constant 0 : index
    %c0_55 = arith.constant 0 : index
    %123 = vector.load %arg19[%c0_53, %c0_54, %c0_55] : memref<1x8x32xf32, #tpu.memory_space<vmem>>, vector<1x8x32xf32>
    %124 = vector.shape_cast %123 : vector<1x8x32xf32> to vector<8x32xf32>
    %125 = vector.shape_cast %122 : vector<8x32xf32> to vector<1x8x32xf32>
    tpu.vector_store %arg19[%c0_53, %c0_54, %c0_55], %125 {strides = array<i32>} : memref<1x8x32xf32, #tpu.memory_space<vmem>>, vector<1x8x32xf32>,
    return
  }
  func.func @transform_0(%arg0: i32, %arg1: i32) -> (i32, i32, i32) {
    %c0_i32 = arith.constant 0 : i32
    %c0_i32_0 = arith.constant 0 : i32
    %c0_i32_1 = arith.constant 0 : i32
    return %arg0, %c0_i32, %c0_i32_0 : i32, i32, i32
  }
  func.func @transform_1(%arg0: i32, %arg1: i32) -> (i32, i32) {
    %c0_i32 = arith.constant 0 : i32
    %c0_i32_0 = arith.constant 0 : i32
    %c0_i32_1 = arith.constant 0 : i32
    return %c0_i32, %c0_i32_0 : i32, i32
  }
  func.func @transform_2(%arg0: i32, %arg1: i32) -> (i32, i32) {
    %c0_i32 = arith.constant 0 : i32
    %c0_i32_0 = arith.constant 0 : i32
    %c0_i32_1 = arith.constant 0 : i32
    return %c0_i32, %c0_i32_0 : i32, i32
  }
  func.func @transform_3(%arg0: i32, %arg1: i32) -> (i32, i32) {
    %c0_i32 = arith.constant 0 : i32
    %c0_i32_0 = arith.constant 0 : i32
    %c0_i32_1 = arith.constant 0 : i32
    return %c0_i32, %c0_i32_0 : i32, i32
  }
  func.func @transform_4(%arg0: i32, %arg1: i32) -> (i32, i32) {
    %c0_i32 = arith.constant 0 : i32
    %c0_i32_0 = arith.constant 0 : i32
    %c0_i32_1 = arith.constant 0 : i32
    return %c0_i32, %c0_i32_0 : i32, i32
  }
  func.func @transform_5(%arg0: i32, %arg1: i32) -> (i32, i32) {
    %c0_i32 = arith.constant 0 : i32
    %c0_i32_0 = arith.constant 0 : i32
    %c0_i32_1 = arith.constant 0 : i32
    return %c0_i32, %c0_i32_0 : i32, i32
  }
  func.func @transform_6(%arg0: i32, %arg1: i32) -> (i32, i32) {
    %c0_i32 = arith.constant 0 : i32
    %c0_i32_0 = arith.constant 0 : i32
    %c0_i32_1 = arith.constant 0 : i32
    return %c0_i32, %c0_i32_0 : i32, i32
  }
  func.func @transform_7(%arg0: i32, %arg1: i32) -> (i32, i32) {
    %c0_i32 = arith.constant 0 : i32
    %c0_i32_0 = arith.constant 0 : i32
    %c0_i32_1 = arith.constant 0 : i32
    return %c0_i32, %c0_i32_0 : i32, i32
  }
  func.func @transform_8(%arg0: i32, %arg1: i32) -> (i32, i32) {
    %c0_i32 = arith.constant 0 : i32
    %c0_i32_0 = arith.constant 0 : i32
    %c0_i32_1 = arith.constant 0 : i32
    return %c0_i32, %c0_i32_0 : i32, i32
  }
  func.func @transform_9(%arg0: i32, %arg1: i32) -> (i32, i32) {
    %c0_i32 = arith.constant 0 : i32
    %c0_i32_0 = arith.constant 0 : i32
    %c0_i32_1 = arith.constant 0 : i32
    return %c0_i32, %c0_i32_0 : i32, i32
  }
  func.func @transform_10(%arg0: i32, %arg1: i32) -> (i32, i32) {
    %c0_i32 = arith.constant 0 : i32
    %c0_i32_0 = arith.constant 0 : i32
    %c0_i32_1 = arith.constant 0 : i32
    return %c0_i32, %c0_i32_0 : i32, i32
  }
  func.func @transform_11(%arg0: i32, %arg1: i32) -> (i32, i32) {
    %c0_i32 = arith.constant 0 : i32
    %c0_i32_0 = arith.constant 0 : i32
    %c0_i32_1 = arith.constant 0 : i32
    return %c0_i32, %c0_i32_0 : i32, i32
  }
  func.func @transform_12(%arg0: i32, %arg1: i32) -> (i32, i32) {
    %c0_i32 = arith.constant 0 : i32
    %c0_i32_0 = arith.constant 0 : i32
    %c0_i32_1 = arith.constant 0 : i32
    return %c0_i32, %c0_i32_0 : i32, i32
  }
  func.func @transform_13(%arg0: i32, %arg1: i32) -> (i32, i32) {
    %c0_i32 = arith.constant 0 : i32
    %c0_i32_0 = arith.constant 0 : i32
    %c0_i32_1 = arith.constant 0 : i32
    return %c0_i32, %c0_i32_0 : i32, i32
  }
  func.func @transform_14(%arg0: i32, %arg1: i32) -> (i32, i32) {
    %c0_i32 = arith.constant 0 : i32
    %c0_i32_0 = arith.constant 0 : i32
    %c0_i32_1 = arith.constant 0 : i32
    return %c0_i32, %c0_i32_0 : i32, i32
  }
  func.func @transform_15(%arg0: i32, %arg1: i32) -> (i32, i32) {
    %c0_i32 = arith.constant 0 : i32
    %c0_i32_0 = arith.constant 0 : i32
    %c0_i32_1 = arith.constant 0 : i32
    return %c0_i32, %c0_i32_0 : i32, i32
  }
  func.func @transform_16(%arg0: i32, %arg1: i32) -> (i32, i32) {
    %c0_i32 = arith.constant 0 : i32
    %c0_i32_0 = arith.constant 0 : i32
    %c0_i32_1 = arith.constant 0 : i32
    return %c0_i32, %c0_i32_0 : i32, i32
  }
  func.func @transform_17(%arg0: i32, %arg1: i32) -> (i32, i32, i32) {
    %c0_i32 = arith.constant 0 : i32
    %c0_i32_0 = arith.constant 0 : i32
    return %arg0, %arg1, %c0_i32 : i32, i32, i32
  }
}

</mosaic_0001>

<llo_original>
// kernel: tpu_custom_call.1
$region0: #{tpu_custom_call.1}
  #allocation0 [shape = 'u32[]', space=smem, size = 0x4, offset = 0x4, fixed_abs, tag = 'smem constant byte address 0x4 - core index']
  #allocation1 [shape = 'u32[72,128]{1,0:T(1,128)}', space=vmem, size = 0x9000, scoped, tag = 'internal scratch']
  #allocation2 [shape = 'bf16[8,32]{1,0:T(8,128)(2,1)}', space=vmem, size = 0x800, scoped, tag = 'scratch operand']
  #allocation3 [shape = 'bf16[8,32]{1,0:T(8,128)(2,1)}', space=vmem, size = 0x800, scoped, tag = 'scratch operand']
  %s0 = inlined_call_operand.vmem [shape: f32[2,8,32], index: 0, kind: input, shape index: {}]
  %s1 = inlined_call_operand.hbm [shape: f32[1,32], index: 1, kind: input, shape index: {}]
  %s2 = inlined_call_operand.vmem [shape: f32[1,32], index: 2, kind: input, shape index: {}]
  %s3 = inlined_call_operand.vmem [shape: bf16[32,32], index: 3, kind: input, shape index: {}]
  %s4 = inlined_call_operand.vmem [shape: bf16[32,32], index: 4, kind: input, shape index: {}]
  %s5 = inlined_call_operand.vmem [shape: bf16[32,32], index: 5, kind: input, shape index: {}]
  %s6 = inlined_call_operand.vmem [shape: f32[1,32], index: 6, kind: input, shape index: {}]
  %s7 = inlined_call_operand.vmem [shape: f32[1,32], index: 7, kind: input, shape index: {}]
  %s8 = inlined_call_operand.vmem [shape: f32[1,32], index: 8, kind: input, shape index: {}]
  %s9 = inlined_call_operand.vmem [shape: bf16[32,32], index: 9, kind: input, shape index: {}]
  %s10 = inlined_call_operand.vmem [shape: f32[1,32], index: 10, kind: input, shape index: {}]
  %s11 = inlined_call_operand.vmem [shape: f32[1,32], index: 11, kind: input, shape index: {}]
  %s12 = inlined_call_operand.vmem [shape: f32[1,32], index: 12, kind: input, shape index: {}]
  %s13 = inlined_call_operand.hbm [shape: bf16[32,128], index: 13, kind: input, shape index: {}]
  %s14 = inlined_call_operand.vmem [shape: f32[1,128], index: 14, kind: input, shape index: {}]
  %s15 = inlined_call_operand.vmem [shape: bf16[128,32], index: 15, kind: input, shape index: {}]
  %s16 = inlined_call_operand.vmem [shape: f32[1,32], index: 16, kind: input, shape index: {}]
  %s17 = inlined_call_operand.hbm [shape: f32[2,8,32], index: 17, kind: output, shape index: {}]
  %s18 = sld [smem:[#allocation0]]
  $region113: #{tpu_custom_call.1} parent=0
    _
  %s20 = ssub.s32 1, %s18
  %s21 = scalar_select 0, %s20, %s18
  $region1: #{tpu_custom_call.1} parent=0
    #allocation4 [shape = 'u8[512]{0}', space=vmem, size = 0x400, scoped, tag = 'input window, operand 1, single buffered']
    #allocation5 [shape = 's32[2]{0}', space=sflag, size = 0x8, scoped, tag = 'scoped memory for tpu_custom_call.1']
    #allocation6 [shape = 's32[2]{0}', space=sflag, size = 0x8, scoped, tag = 'scoped memory for tpu_custom_call.1']
    #allocation7 [shape = 'u8[8192]{0}', space=vmem, size = 0x2000, scoped, tag = 'input window, operand 13, single buffered']
    #allocation8 [shape = 's32[1]{0}', space=sflag, size = 0x4, scoped, tag = 'scoped memory for tpu_custom_call.1']
    #allocation9 [shape = 'u8[8192]{0}', space=vmem, size = 0x2000, scoped, tag = 'output window, operand 0']
    %22 = vsyncpa [#allocation5], 0
    %23 = vsyncpa [#allocation8], 0
    %24 = vsyncpa [#allocation6], 0
    %s25 = scalar_lea.sflag [#allocation6], 1
    %26 = vsyncpa %s25, 0
    loop: start=0, step=1, limit=4
    $region2: #{tpu_custom_call.1} parent=1 // loop_pre_header
      _
    $region3: #{tpu_custom_call.1} parent=1 // loop_header
      %s28 = sphi 0, %s32
      %p29 = scmp.ge.s32.totalorder %s28, 4
      %s35 = sphi 0, %s47
      %s36 = sphi 0, %s43
      %s37 = sphi 0, %s35
      %s38 = sphi 0, %s36
      %s39 = sphi 0, %s37
      %s40 = sphi 0, %s38
      %s50 = sphi 0, %s52
      %s53 = sphi 0, %s50
      %s54 = sphi 0, %s53
      %s70 = sphi 0, %s54
      %s74 = sphi 0, %s74
      %s76 = sphi 0, %s74
      %s77 = sphi 0, %s76
      %s91 = sphi 0, %s77
      %s95 = sphi 0, %s95
      %s97 = sphi 0, %s95
      %s98 = sphi 0, %s97
      %s112 = sphi 0, %s98
      %s116 = sphi 0, %s116
      %s118 = sphi 0, %s116
      %s119 = sphi 0, %s118
      %s133 = sphi 0, %s119
      %s137 = sphi 0, %s137
      %s139 = sphi 0, %s137
      %s140 = sphi 0, %s139
      %s154 = sphi 0, %s140
      %s158 = sphi 0, %s158
      %s160 = sphi 0, %s158
      %s161 = sphi 0, %s160
      %s175 = sphi 0, %s161
      %s179 = sphi 0, %s179
      %s181 = sphi 0, %s179
      %s182 = sphi 0, %s181
      %s196 = sphi 0, %s182
      %s200 = sphi 0, %s200
      %s202 = sphi 0, %s200
      %s203 = sphi 0, %s202
      %s217 = sphi 0, %s203
      %s221 = sphi 0, %s221
      %s223 = sphi 0, %s221
      %s224 = sphi 0, %s223
      %s238 = sphi 0, %s224
      %s242 = sphi 0, %s242
      %s244 = sphi 0, %s242
      %s245 = sphi 0, %s244
      %s259 = sphi 0, %s245
      %s263 = sphi 0, %s263
      %s265 = sphi 0, %s263
      %s266 = sphi 0, %s265
      %s280 = sphi 0, %s266
      %s284 = sphi 0, %s284
      %s286 = sphi 0, %s284
      %s287 = sphi 0, %s286
      %s301 = sphi 0, %s287
      %s305 = sphi 0, %s305
      %s307 = sphi 0, %s305
      %s308 = sphi 0, %s307
      %s322 = sphi 0, %s308
      %s326 = sphi 0, %s326
      %s328 = sphi 0, %s326
      %s329 = sphi 0, %s328
      %s343 = sphi 0, %s329
      %s347 = sphi 0, %s347
      %s349 = sphi 0, %s347
      %s350 = sphi 0, %s349
      %s364 = sphi 0, %s350
      %s368 = sphi 0, %s368
      %s370 = sphi 0, %s368
      %s371 = sphi 0, %s370
      %s385 = sphi 0, %s371
      %s389 = sphi 0, %s389
      %s391 = sphi 0, %s389
      %s392 = sphi 0, %s391
      %s406 = sphi 0, %s392
      %s414 = sphi 0, %s416
      %s417 = sphi 0, %s414
      %s418 = sphi 0, %s417
      %s434 = sphi 0, %s418
    $region4: #{tpu_custom_call.1} parent=1 // loop_header_branch
      %31 = sbr.rel (%p29) target = $region8
    $region5: #{tpu_custom_call.1} parent=1 // loop_body
      %s33 = ssub.s32 %s28, 1
      %s34 = ssub.s32 %s28, 2
      %s41 = sadd.s32 1, %s36
      %p42 = scmp.ge.s32.totalorder %s41, 1
      %s43 = scalar_select %p42, 0, %s41
      %s44 = sadd.s32 1, %s35
      %s45 = scalar_select %p42, %s44, %s35
      %p46 = scmp.ge.s32.totalorder %s45, 2
      %s47 = scalar_select %p46, 0, %s45
      %s48 = ssub.s32 %s35, %s47
      %p49 = scmp.eq.s32.totalorder %s48, 0
      %s51 = sadd.s32 %s50, 1
      %s52 = scalar_select %p49, %s50, %s51
      %p55 = pneg %p49
      %p56 = scmp.eq.s32.totalorder %s28, 1
      %p57 = por %p55, %p56
      %p58 = scmp.ne.s32.totalorder %s50, %s53
      %p59 = scmp.eq.s32.totalorder %s28, 0
      %p60 = por %p58, %p59
      %p61 = scmp.ne.s32.totalorder %s50, %s53
      %p62 = scmp.eq.s32.totalorder %s33, 1
      %p63 = por %p61, %p62
      %p64 = scmp.ne.s32.totalorder %s53, %s54
      %p65 = scmp.eq.s32.totalorder %s33, 0
      %p66 = por %p64, %p65
      %p67 = scmp.ne.s32.totalorder %s53, %s54
      %p68 = scmp.eq.s32.totalorder %s34, 1
      %p69 = por %p67, %p68
      %p71 = scmp.ne.s32.totalorder %s54, %s70
      %p72 = scmp.eq.s32.totalorder %s34, 0
      %p73 = por %p71, %p72
      %s75 = sadd.s32 %s74, 1
      %p78 = scmp.eq.s32.totalorder %s28, 1
      %p79 = scmp.ne.s32.totalorder %s74, %s76
      %p80 = scmp.eq.s32.totalorder %s28, 0
      %p81 = por %p79, %p80
      %p82 = scmp.ne.s32.totalorder %s74, %s76
      %p83 = scmp.eq.s32.totalorder %s33, 1
      %p84 = por %p82, %p83
      %p85 = scmp.ne.s32.totalorder %s76, %s77
      %p86 = scmp.eq.s32.totalorder %s33, 0
      %p87 = por %p85, %p86
      %p88 = scmp.ne.s32.totalorder %s76, %s77
      %p89 = scmp.eq.s32.totalorder %s34, 1
      %p90 = por %p88, %p89
      %p92 = scmp.ne.s32.totalorder %s77, %s91
      %p93 = scmp.eq.s32.totalorder %s34, 0
      %p94 = por %p92, %p93
      %s96 = sadd.s32 %s95, 1
      %p99 = scmp.eq.s32.totalorder %s28, 1
      %p100 = scmp.ne.s32.totalorder %s95, %s97
      %p101 = scmp.eq.s32.totalorder %s28, 0
      %p102 = por %p100, %p101
      %p103 = scmp.ne.s32.totalorder %s95, %s97
      %p104 = scmp.eq.s32.totalorder %s33, 1
      %p105 = por %p103, %p104
      %p106 = scmp.ne.s32.totalorder %s97, %s98
      %p107 = scmp.eq.s32.totalorder %s33, 0
      %p108 = por %p106, %p107
      %p109 = scmp.ne.s32.totalorder %s97, %s98
      %p110 = scmp.eq.s32.totalorder %s34, 1
      %p111 = por %p109, %p110
      %p113 = scmp.ne.s32.totalorder %s98, %s112
      %p114 = scmp.eq.s32.totalorder %s34, 0
      %p115 = por %p113, %p114
      %s117 = sadd.s32 %s116, 1
      %p120 = scmp.eq.s32.totalorder %s28, 1
      %p121 = scmp.ne.s32.totalorder %s116, %s118
      %p122 = scmp.eq.s32.totalorder %s28, 0
      %p123 = por %p121, %p122
      %p124 = scmp.ne.s32.totalorder %s116, %s118
      %p125 = scmp.eq.s32.totalorder %s33, 1
      %p126 = por %p124, %p125
      %p127 = scmp.ne.s32.totalorder %s118, %s119
      %p128 = scmp.eq.s32.totalorder %s33, 0
      %p129 = por %p127, %p128
      %p130 = scmp.ne.s32.totalorder %s118, %s119
      %p131 = scmp.eq.s32.totalorder %s34, 1
      %p132 = por %p130, %p131
      %p134 = scmp.ne.s32.totalorder %s119, %s133
      %p135 = scmp.eq.s32.totalorder %s34, 0
      %p136 = por %p134, %p135
      %s138 = sadd.s32 %s137, 1
      %p141 = scmp.eq.s32.totalorder %s28, 1
      %p142 = scmp.ne.s32.totalorder %s137, %s139
      %p143 = scmp.eq.s32.totalorder %s28, 0
      %p144 = por %p142, %p143
      %p145 = scmp.ne.s32.totalorder %s137, %s139
      %p146 = scmp.eq.s32.totalorder %s33, 1
      %p147 = por %p145, %p146
      %p148 = scmp.ne.s32.totalorder %s139, %s140
      %p149 = scmp.eq.s32.totalorder %s33, 0
      %p150 = por %p148, %p149
      %p151 = scmp.ne.s32.totalorder %s139, %s140
      %p152 = scmp.eq.s32.totalorder %s34, 1
      %p153 = por %p151, %p152
      %p155 = scmp.ne.s32.totalorder %s140, %s154
      %p156 = scmp.eq.s32.totalorder %s34, 0
      %p157 = por %p155, %p156
      %s159 = sadd.s32 %s158, 1
      %p162 = scmp.eq.s32.totalorder %s28, 1
      %p163 = scmp.ne.s32.totalorder %s158, %s160
      %p164 = scmp.eq.s32.totalorder %s28, 0
      %p165 = por %p163, %p164
      %p166 = scmp.ne.s32.totalorder %s158, %s160
      %p167 = scmp.eq.s32.totalorder %s33, 1
      %p168 = por %p166, %p167
      %p169 = scmp.ne.s32.totalorder %s160, %s161
      %p170 = scmp.eq.s32.totalorder %s33, 0
      %p171 = por %p169, %p170
      %p172 = scmp.ne.s32.totalorder %s160, %s161
      %p173 = scmp.eq.s32.totalorder %s34, 1
      %p174 = por %p172, %p173
      %p176 = scmp.ne.s32.totalorder %s161, %s175
      %p177 = scmp.eq.s32.totalorder %s34, 0
      %p178 = por %p176, %p177
      %s180 = sadd.s32 %s179, 1
      %p183 = scmp.eq.s32.totalorder %s28, 1
      %p184 = scmp.ne.s32.totalorder %s179, %s181
      %p185 = scmp.eq.s32.totalorder %s28, 0
      %p186 = por %p184, %p185
      %p187 = scmp.ne.s32.totalorder %s179, %s181
      %p188 = scmp.eq.s32.totalorder %s33, 1
      %p189 = por %p187, %p188
      %p190 = scmp.ne.s32.totalorder %s181, %s182
      %p191 = scmp.eq.s32.totalorder %s33, 0
      %p192 = por %p190, %p191
      %p193 = scmp.ne.s32.totalorder %s181, %s182
      %p194 = scmp.eq.s32.totalorder %s34, 1
      %p195 = por %p193, %p194
      %p197 = scmp.ne.s32.totalorder %s182, %s196
      %p198 = scmp.eq.s32.totalorder %s34, 0
      %p199 = por %p197, %p198
      %s201 = sadd.s32 %s200, 1
      %p204 = scmp.eq.s32.totalorder %s28, 1
      %p205 = scmp.ne.s32.totalorder %s200, %s202
      %p206 = scmp.eq.s32.totalorder %s28, 0
      %p207 = por %p205, %p206
      %p208 = scmp.ne.s32.totalorder %s200, %s202
      %p209 = scmp.eq.s32.totalorder %s33, 1
      %p210 = por %p208, %p209
      %p211 = scmp.ne.s32.totalorder %s202, %s203
      %p212 = scmp.eq.s32.totalorder %s33, 0
      %p213 = por %p211, %p212
      %p214 = scmp.ne.s32.totalorder %s202, %s203
      %p215 = scmp.eq.s32.totalorder %s34, 1
      %p216 = por %p214, %p215
      %p218 = scmp.ne.s32.totalorder %s203, %s217
      %p219 = scmp.eq.s32.totalorder %s34, 0
      %p220 = por %p218, %p219
      %s222 = sadd.s32 %s221, 1
      %p225 = scmp.eq.s32.totalorder %s28, 1
      %p226 = scmp.ne.s32.totalorder %s221, %s223
      %p227 = scmp.eq.s32.totalorder %s28, 0
      %p228 = por %p226, %p227
      %p229 = scmp.ne.s32.totalorder %s221, %s223
      %p230 = scmp.eq.s32.totalorder %s33, 1
      %p231 = por %p229, %p230
      %p232 = scmp.ne.s32.totalorder %s223, %s224
      %p233 = scmp.eq.s32.totalorder %s33, 0
      %p234 = por %p232, %p233
      %p235 = scmp.ne.s32.totalorder %s223, %s224
      %p236 = scmp.eq.s32.totalorder %s34, 1
      %p237 = por %p235, %p236
      %p239 = scmp.ne.s32.totalorder %s224, %s238
      %p240 = scmp.eq.s32.totalorder %s34, 0
      %p241 = por %p239, %p240
      %s243 = sadd.s32 %s242, 1
      %p246 = scmp.eq.s32.totalorder %s28, 1
      %p247 = scmp.ne.s32.totalorder %s242, %s244
      %p248 = scmp.eq.s32.totalorder %s28, 0
      %p249 = por %p247, %p248
      %p250 = scmp.ne.s32.totalorder %s242, %s244
      %p251 = scmp.eq.s32.totalorder %s33, 1
      %p252 = por %p250, %p251
      %p253 = scmp.ne.s32.totalorder %s244, %s245
      %p254 = scmp.eq.s32.totalorder %s33, 0
      %p255 = por %p253, %p254
      %p256 = scmp.ne.s32.totalorder %s244, %s245
      %p257 = scmp.eq.s32.totalorder %s34, 1
      %p258 = por %p256, %p257
      %p260 = scmp.ne.s32.totalorder %s245, %s259
      %p261 = scmp.eq.s32.totalorder %s34, 0
      %p262 = por %p260, %p261
      %s264 = sadd.s32 %s263, 1
      %p267 = scmp.eq.s32.totalorder %s28, 1
      %p268 = scmp.ne.s32.totalorder %s263, %s265
      %p269 = scmp.eq.s32.totalorder %s28, 0
      %p270 = por %p268, %p269
      %p271 = scmp.ne.s32.totalorder %s263, %s265
      %p272 = scmp.eq.s32.totalorder %s33, 1
      %p273 = por %p271, %p272
      %p274 = scmp.ne.s32.totalorder %s265, %s266
      %p275 = scmp.eq.s32.totalorder %s33, 0
      %p276 = por %p274, %p275
      %p277 = scmp.ne.s32.totalorder %s265, %s266
      %p278 = scmp.eq.s32.totalorder %s34, 1
      %p279 = por %p277, %p278
      %p281 = scmp.ne.s32.totalorder %s266, %s280
      %p282 = scmp.eq.s32.totalorder %s34, 0
      %p283 = por %p281, %p282
      %s285 = sadd.s32 %s284, 1
      %p288 = scmp.eq.s32.totalorder %s28, 1
      %p289 = scmp.ne.s32.totalorder %s284, %s286
      %p290 = scmp.eq.s32.totalorder %s28, 0
      %p291 = por %p289, %p290
      %p292 = scmp.ne.s32.totalorder %s284, %s286
      %p293 = scmp.eq.s32.totalorder %s33, 1
      %p294 = por %p292, %p293
      %p295 = scmp.ne.s32.totalorder %s286, %s287
      %p296 = scmp.eq.s32.totalorder %s33, 0
      %p297 = por %p295, %p296
      %p298 = scmp.ne.s32.totalorder %s286, %s287
      %p299 = scmp.eq.s32.totalorder %s34, 1
      %p300 = por %p298, %p299
      %p302 = scmp.ne.s32.totalorder %s287, %s301
      %p303 = scmp.eq.s32.totalorder %s34, 0
      %p304 = por %p302, %p303
      %s306 = sadd.s32 %s305, 1
      %p309 = scmp.eq.s32.totalorder %s28, 1
      %p310 = scmp.ne.s32.totalorder %s305, %s307
      %p311 = scmp.eq.s32.totalorder %s28, 0
      %p312 = por %p310, %p311
      %p313 = scmp.ne.s32.totalorder %s305, %s307
      %p314 = scmp.eq.s32.totalorder %s33, 1
      %p315 = por %p313, %p314
      %p316 = scmp.ne.s32.totalorder %s307, %s308
      %p317 = scmp.eq.s32.totalorder %s33, 0
      %p318 = por %p316, %p317
      %p319 = scmp.ne.s32.totalorder %s307, %s308
      %p320 = scmp.eq.s32.totalorder %s34, 1
      %p321 = por %p319, %p320
      %p323 = scmp.ne.s32.totalorder %s308, %s322
      %p324 = scmp.eq.s32.totalorder %s34, 0
      %p325 = por %p323, %p324
      %s327 = sadd.s32 %s326, 1
      %p330 = scmp.eq.s32.totalorder %s28, 1
      %p331 = scmp.ne.s32.totalorder %s326, %s328
      %p332 = scmp.eq.s32.totalorder %s28, 0
      %p333 = por %p331, %p332
      %p334 = scmp.ne.s32.totalorder %s326, %s328
      %p335 = scmp.eq.s32.totalorder %s33, 1
      %p336 = por %p334, %p335
      %p337 = scmp.ne.s32.totalorder %s328, %s329
      %p338 = scmp.eq.s32.totalorder %s33, 0
      %p339 = por %p337, %p338
      %p340 = scmp.ne.s32.totalorder %s328, %s329
      %p341 = scmp.eq.s32.totalorder %s34, 1
      %p342 = por %p340, %p341
      %p344 = scmp.ne.s32.totalorder %s329, %s343
      %p345 = scmp.eq.s32.totalorder %s34, 0
      %p346 = por %p344, %p345
      %s348 = sadd.s32 %s347, 1
      %p351 = scmp.eq.s32.totalorder %s28, 1
      %p352 = scmp.ne.s32.totalorder %s347, %s349
      %p353 = scmp.eq.s32.totalorder %s28, 0
      %p354 = por %p352, %p353
      %p355 = scmp.ne.s32.totalorder %s347, %s349
      %p356 = scmp.eq.s32.totalorder %s33, 1
      %p357 = por %p355, %p356
      %p358 = scmp.ne.s32.totalorder %s349, %s350
      %p359 = scmp.eq.s32.totalorder %s33, 0
      %p360 = por %p358, %p359
      %p361 = scmp.ne.s32.totalorder %s349, %s350
      %p362 = scmp.eq.s32.totalorder %s34, 1
      %p363 = por %p361, %p362
      %p365 = scmp.ne.s32.totalorder %s350, %s364
      %p366 = scmp.eq.s32.totalorder %s34, 0
      %p367 = por %p365, %p366
      %s369 = sadd.s32 %s368, 1
      %p372 = scmp.eq.s32.totalorder %s28, 1
      %p373 = scmp.ne.s32.totalorder %s368, %s370
      %p374 = scmp.eq.s32.totalorder %s28, 0
      %p375 = por %p373, %p374
      %p376 = scmp.ne.s32.totalorder %s368, %s370
      %p377 = scmp.eq.s32.totalorder %s33, 1
      %p378 = por %p376, %p377
      %p379 = scmp.ne.s32.totalorder %s370, %s371
      %p380 = scmp.eq.s32.totalorder %s33, 0
      %p381 = por %p379, %p380
      %p382 = scmp.ne.s32.totalorder %s370, %s371
      %p383 = scmp.eq.s32.totalorder %s34, 1
      %p384 = por %p382, %p383
      %p386 = scmp.ne.s32.totalorder %s371, %s385
      %p387 = scmp.eq.s32.totalorder %s34, 0
      %p388 = por %p386, %p387
      %s390 = sadd.s32 %s389, 1
      %p393 = scmp.eq.s32.totalorder %s28, 1
      %p394 = scmp.ne.s32.totalorder %s389, %s391
      %p395 = scmp.eq.s32.totalorder %s28, 0
      %p396 = por %p394, %p395
      %p397 = scmp.ne.s32.totalorder %s389, %s391
      %p398 = scmp.eq.s32.totalorder %s33, 1
      %p399 = por %p397, %p398
      %p400 = scmp.ne.s32.totalorder %s391, %s392
      %p401 = scmp.eq.s32.totalorder %s33, 0
      %p402 = por %p400, %p401
      %p403 = scmp.ne.s32.totalorder %s391, %s392
      %p404 = scmp.eq.s32.totalorder %s34, 1
      %p405 = por %p403, %p404
      %p407 = scmp.ne.s32.totalorder %s392, %s406
      %p408 = scmp.eq.s32.totalorder %s34, 0
      %p409 = por %p407, %p408
      %s410 = ssub.s32 %s35, %s47
      %s411 = ssub.s32 %s36, %s43
      %s412 = sor.u32 %s410, %s411
      %p413 = scmp.eq.s32.totalorder %s412, 0
      %s415 = sadd.s32 %s414, 1
      %s416 = scalar_select %p413, %s414, %s415
      %p419 = pneg %p413
      %p420 = scmp.eq.s32.totalorder %s28, 1
      %p421 = por %p419, %p420
      %p422 = scmp.ne.s32.totalorder %s414, %s417
      %p423 = scmp.eq.s32.totalorder %s28, 0
      %p424 = por %p422, %p423
      %p425 = scmp.ne.s32.totalorder %s414, %s417
      %p426 = scmp.eq.s32.totalorder %s33, 1
      %p427 = por %p425, %p426
      %p428 = scmp.ne.s32.totalorder %s417, %s418
      %p429 = scmp.eq.s32.totalorder %s33, 0
      %p430 = por %p428, %p429
      %p431 = scmp.ne.s32.totalorder %s417, %s418
      %p432 = scmp.eq.s32.totalorder %s34, 1
      %p433 = por %p431, %p432
      %p435 = scmp.ne.s32.totalorder %s418, %s434
      %p436 = scmp.eq.s32.totalorder %s34, 0
      %p437 = por %p435, %p436
      %p438 = scmp.le.s32.totalorder 1, %s28
      %p439 = scmp.lt.s32.totalorder %s28, 3
      %p440 = pnand %p438, %p439
      %p441 = pneg %p440
      // Predicated region
      $region9: #{tpu_custom_call.1} parent=5 // pred_check
        _
      $region10: #{tpu_custom_call.1} parent=5 // pred_check_branch
        %443 = sbr.rel (%p440) target = $region12
      $region11: #{tpu_custom_call.1} parent=5 // pred_region
        %s444 = ssub.s32 %s28, 1
        // Predicated region
        $region13: #{tpu_custom_call.1} parent=11 // pred_check
          %p445 = pneg %p87
        $region14: #{tpu_custom_call.1} parent=11 // pred_check_branch
          %447 = sbr.rel (%p445) target = $region16
        $region15: #{tpu_custom_call.1} parent=11 // pred_region
          %449 = vsyncadd [#allocation5], 0
          %s451 = sshll.u32 %s1, 4
          %s452 = int_to_ptr.hbm [resolvable:$true] %s451
          %s453 = sshll.u32 [#allocation4], 4
          %s454 = int_to_ptr.vmem [resolvable:$true] %s453
          %456 = dma.hbm_to_vmem [thread:$0]  %s452, 16, %s454, [#allocation5]
        $region16: #{tpu_custom_call.1} parent=11 // pred_fallthru
          _
        // Predicated region
        $region17: #{tpu_custom_call.1} parent=11 // pred_check
          %p457 = pneg %p108
        $region18: #{tpu_custom_call.1} parent=11 // pred_check_branch
          %459 = sbr.rel (%p457) target = $region20
        $region19: #{tpu_custom_call.1} parent=11 // pred_region
          _
        $region20: #{tpu_custom_call.1} parent=11 // pred_fallthru
          _
        // Predicated region
        $region21: #{tpu_custom_call.1} parent=11 // pred_check
          %p460 = pneg %p129
        $region22: #{tpu_custom_call.1} parent=11 // pred_check_branch
          %462 = sbr.rel (%p460) target = $region24
        $region23: #{tpu_custom_call.1} parent=11 // pred_region
          _
        $region24: #{tpu_custom_call.1} parent=11 // pred_fallthru
          _
        // Predicated region
        $region25: #{tpu_custom_call.1} parent=11 // pred_check
          %p463 = pneg %p150
        $region26: #{tpu_custom_call.1} parent=11 // pred_check_branch
          %465 = sbr.rel (%p463) target = $region28
        $region27: #{tpu_custom_call.1} parent=11 // pred_region
          _
        $region28: #{tpu_custom_call.1} parent=11 // pred_fallthru
          _
        // Predicated region
        $region29: #{tpu_custom_call.1} parent=11 // pred_check
          %p466 = pneg %p171
        $region30: #{tpu_custom_call.1} parent=11 // pred_check_branch
          %468 = sbr.rel (%p466) target = $region32
        $region31: #{tpu_custom_call.1} parent=11 // pred_region
          _
        $region32: #{tpu_custom_call.1} parent=11 // pred_fallthru
          _
        // Predicated region
        $region33: #{tpu_custom_call.1} parent=11 // pred_check
          %p469 = pneg %p192
        $region34: #{tpu_custom_call.1} parent=11 // pred_check_branch
          %471 = sbr.rel (%p469) target = $region36
        $region35: #{tpu_custom_call.1} parent=11 // pred_region
          _
        $region36: #{tpu_custom_call.1} parent=11 // pred_fallthru
          _
        // Predicated region
        $region37: #{tpu_custom_call.1} parent=11 // pred_check
          %p472 = pneg %p213
        $region38: #{tpu_custom_call.1} parent=11 // pred_check_branch
          %474 = sbr.rel (%p472) target = $region40
        $region39: #{tpu_custom_call.1} parent=11 // pred_region
          _
        $region40: #{tpu_custom_call.1} parent=11 // pred_fallthru
          _
        // Predicated region
        $region41: #{tpu_custom_call.1} parent=11 // pred_check
          %p475 = pneg %p234
        $region42: #{tpu_custom_call.1} parent=11 // pred_check_branch
          %477 = sbr.rel (%p475) target = $region44
        $region43: #{tpu_custom_call.1} parent=11 // pred_region
          _
        $region44: #{tpu_custom_call.1} parent=11 // pred_fallthru
          _
        // Predicated region
        $region45: #{tpu_custom_call.1} parent=11 // pred_check
          %p478 = pneg %p255
        $region46: #{tpu_custom_call.1} parent=11 // pred_check_branch
          %480 = sbr.rel (%p478) target = $region48
        $region47: #{tpu_custom_call.1} parent=11 // pred_region
          _
        $region48: #{tpu_custom_call.1} parent=11 // pred_fallthru
          _
        // Predicated region
        $region49: #{tpu_custom_call.1} parent=11 // pred_check
          %p481 = pneg %p276
        $region50: #{tpu_custom_call.1} parent=11 // pred_check_branch
          %483 = sbr.rel (%p481) target = $region52
        $region51: #{tpu_custom_call.1} parent=11 // pred_region
          _
        $region52: #{tpu_custom_call.1} parent=11 // pred_fallthru
          _
        // Predicated region
        $region53: #{tpu_custom_call.1} parent=11 // pred_check
          %p484 = pneg %p297
        $region54: #{tpu_custom_call.1} parent=11 // pred_check_branch
          %486 = sbr.rel (%p484) target = $region56
        $region55: #{tpu_custom_call.1} parent=11 // pred_region
          _
        $region56: #{tpu_custom_call.1} parent=11 // pred_fallthru
          _
        // Predicated region
        $region57: #{tpu_custom_call.1} parent=11 // pred_check
          %p487 = pneg %p318
        $region58: #{tpu_custom_call.1} parent=11 // pred_check_branch
          %489 = sbr.rel (%p487) target = $region60
        $region59: #{tpu_custom_call.1} parent=11 // pred_region
          _
        $region60: #{tpu_custom_call.1} parent=11 // pred_fallthru
          _
        // Predicated region
        $region61: #{tpu_custom_call.1} parent=11 // pred_check
          %p490 = pneg %p339
        $region62: #{tpu_custom_call.1} parent=11 // pred_check_branch
          %492 = sbr.rel (%p490) target = $region64
        $region63: #{tpu_custom_call.1} parent=11 // pred_region
          %494 = vsyncadd [#allocation8], 0
          %s495 = sshll.u32 %s13, 4
          %s496 = int_to_ptr.hbm [resolvable:$true] %s495
          %s497 = sshll.u32 [#allocation7], 4
          %s498 = int_to_ptr.vmem [resolvable:$true] %s497
          %503 = dma.hbm_to_vmem [thread:$0]  %s496, 256, %s498, [#allocation8], 64, 64, 4
        $region64: #{tpu_custom_call.1} parent=11 // pred_fallthru
          _
        // Predicated region
        $region65: #{tpu_custom_call.1} parent=11 // pred_check
          %p504 = pneg %p360
        $region66: #{tpu_custom_call.1} parent=11 // pred_check_branch
          %506 = sbr.rel (%p504) target = $region68
        $region67: #{tpu_custom_call.1} parent=11 // pred_region
          _
        $region68: #{tpu_custom_call.1} parent=11 // pred_fallthru
          _
        // Predicated region
        $region69: #{tpu_custom_call.1} parent=11 // pred_check
          %p507 = pneg %p381
        $region70: #{tpu_custom_call.1} parent=11 // pred_check_branch
          %509 = sbr.rel (%p507) target = $region72
        $region71: #{tpu_custom_call.1} parent=11 // pred_region
          _
        $region72: #{tpu_custom_call.1} parent=11 // pred_fallthru
          _
        // Predicated region
        $region73: #{tpu_custom_call.1} parent=11 // pred_check
          %p510 = pneg %p402
        $region74: #{tpu_custom_call.1} parent=11 // pred_check_branch
          %512 = sbr.rel (%p510) target = $region76
        $region75: #{tpu_custom_call.1} parent=11 // pred_region
          _
        $region76: #{tpu_custom_call.1} parent=11 // pred_fallthru
          _
      $region12: #{tpu_custom_call.1} parent=5 // pred_fallthru
        _
      %p513 = scmp.lt.s32.totalorder %s28, 2
      // Predicated region
      $region77: #{tpu_custom_call.1} parent=5 // pred_check
        %p514 = pneg %p513
      $region78: #{tpu_custom_call.1} parent=5 // pred_check_branch
        %516 = sbr.rel (%p514) target = $region80
      $region79: #{tpu_custom_call.1} parent=5 // pred_region
        // Predicated region
        $region81: #{tpu_custom_call.1} parent=79 // pred_check
          %p517 = pneg %p60
        $region82: #{tpu_custom_call.1} parent=79 // pred_check_branch
          %519 = sbr.rel (%p517) target = $region84
        $region83: #{tpu_custom_call.1} parent=79 // pred_region
          %p520 = scmp.lt.s32.totalorder %s35, 1
          %s521 = scalar_select %p520, %s35, 1
          %s522 = smul.addr %s521, 8
          %s523 = scalar_lea.vmem %s0, %s522
        $region84: #{tpu_custom_call.1} parent=79 // pred_fallthru
          _
      $region80: #{tpu_custom_call.1} parent=5 // pred_fallthru
        _
      %p524 = scmp.le.s32.totalorder 1, %s28
      %p525 = scmp.lt.s32.totalorder %s28, 3
      %p526 = pnand %p524, %p525
      %p527 = pneg %p526
      // Predicated region
      $region85: #{tpu_custom_call.1} parent=5 // pred_check
        _
      $region86: #{tpu_custom_call.1} parent=5 // pred_check_branch
        %529 = sbr.rel (%p526) target = $region88
      $region87: #{tpu_custom_call.1} parent=5 // pred_region
        %s530 = ssub.s32 %s28, 1
        // Predicated region
        $region89: #{tpu_custom_call.1} parent=87 // pred_check
          %p531 = pneg %p87
        $region90: #{tpu_custom_call.1} parent=87 // pred_check_branch
          %533 = sbr.rel (%p531) target = $region92
        $region91: #{tpu_custom_call.1} parent=87 // pred_region
          %535 = dma.done [#allocation5], 16
        $region92: #{tpu_custom_call.1} parent=87 // pred_fallthru
          _
        // Predicated region
        $region93: #{tpu_custom_call.1} parent=87 // pred_check
          %p536 = pneg %p339
        $region94: #{tpu_custom_call.1} parent=87 // pred_check_branch
          %538 = sbr.rel (%p536) target = $region96
        $region95: #{tpu_custom_call.1} parent=87 // pred_region
          %540 = dma.done [#allocation8], 256
        $region96: #{tpu_custom_call.1} parent=87 // pred_fallthru
          _
        %p541 = scmp.lt.s32.totalorder %s37, 1
        %s542 = scalar_select %p541, %s37, 1
        %s543 = smul.addr %s542, 8
        %s544 = scalar_lea.vmem %s0, %s543
        %p545 = pneg %p66
        %p546 = pneg %p63
        %p547 = pneg %p87
        %p548 = pneg %p84
        %p549 = pneg %p108
        %p550 = pneg %p105
        %p551 = pneg %p129
        %p552 = pneg %p126
        %p553 = pneg %p150
        %p554 = pneg %p147
        %p555 = pneg %p171
        %p556 = pneg %p168
        %p557 = pneg %p192
        %p558 = pneg %p189
        %p559 = pneg %p213
        %p560 = pneg %p210
        %p561 = pneg %p234
        %p562 = pneg %p231
        %p563 = pneg %p255
        %p564 = pneg %p252
        %p565 = pneg %p276
        %p566 = pneg %p273
        %p567 = pneg %p297
        %p568 = pneg %p294
        %p569 = pneg %p318
        %p570 = pneg %p315
        %p571 = pneg %p339
        %p572 = pneg %p336
        %p573 = pneg %p360
        %p574 = pneg %p357
        %p575 = pneg %p381
        %p576 = pneg %p378
        %p577 = pneg %p402
        %p578 = pneg %p399
        %p579 = pneg %p430
        %p580 = pneg %p427
        %s581 = sand.u32 %s417, 1
        %s582 = scalar_lea.sflag [#allocation6], %s581
        %s583 = sand.u32 %s417, 1
        %s584 = smul.addr %s583, 8
        %s585 = scalar_lea.vmem [#allocation9], %s584
        %p586 = scmp.lt.s32.totalorder %s37, 1
        %s587 = scalar_select %p586, %s37, 1
        %s588 = smul.addr %s587, 8
        %s589 = scalar_lea.vmem %s0, %s588
        %v591 = vld [vmem:[#allocation4] sm:$0x1]
        %v592 = vld [vmem:[%s2] sm:$0x1]
        %p593 = scmp.eq.s32.totalorder %s38, 0
        // Predicated region
        $region97: #{tpu_custom_call.1} parent=87 // pred_check
          %p594 = pneg %p593
        $region98: #{tpu_custom_call.1} parent=87 // pred_check_branch
          %596 = sbr.rel (%p594) target = $region100
        $region99: #{tpu_custom_call.1} parent=87 // pred_region
          %v597 = vld [vmem:[%s589] sm:$0xff]
          %vm598 = vcmask 261120
          %v599 = vsel %vm598, %v597, 0.0
          %600 = vadd.xlane.f32.xlu0 %v599
          %v601 = vpop.xlane.xlu0 %600
          %v602 = vrcp.pop 32.0
          %v603 = vmul.f32 32.0, %v602
          %v604 = vsub.f32 1.0, %v603
          %v605 = vmul.f32 %v602, %v604
          %v606 = vadd.f32 %v602, %v605
          %vm607 = vweird.f32 %v602
          %v608 = vsel %vm607, %v602, %v606
          %v609 = vmul.f32 %v601, %v608
          %v610 = vsub.f32 %v597, %v609
          %v611 = vmul.f32 %v610, %v610
          %v612 = vsel %vm598, %v611, 0.0
          %613 = vadd.xlane.f32.xlu0 %v612
          %v614 = vpop.xlane.xlu0 %613
          %v615 = vmul.f32 %v614, %v608
          %v616 = vadd.f32 %v615, 1e-05
          %v617 = vrsqrt.pop %v616
          %v618 = vmul.f32 %v617, %v616
          %v619 = vmul.f32 %v618, %v617
          %v620 = vmul.f32 0.5, %v619
          %v621 = vsub.f32 1.5, %v620
          %v622 = vmul.f32 %v617, %v621
          %vm623 = vweird.f32 %v616
          %vm624 = vweird.f32 %v617
          %vm625 = vmor %vm623, %vm624
          %v626 = vsel %vm625, %v617, %v622
          %v627 = vmul.f32 %v610, %v626
          %v629 = vperm.slane %v591, 0
          %v631 = vmul.f32 %v627, %v629
          %v633 = vperm.slane %v592, 0
          %v635 = vadd.f32 %v631, %v633
          %v636 = vpack.c.bf16 %v635, %v635
          %v637 = vld [vmem:[%s4] sm:$0xf]
          %v638 = vld [vmem:[%s4 + $0x4] sm:$0xf]
          %v639 = vld [vmem:[%s4 + $0x8] sm:$0xf]
          %v640 = vld [vmem:[%s4 + $0xc] sm:$0xf]
          %v641 = vld [vmem:[%s7] sm:$0x1]
          %v643 = vperm.slane %v641, 0
          %v649 = vunpack.c.l.b16 %v637
          %v650 = vunpack.c.l.b16 %v638
          %v651 = vunpack.c.l.b16 %v639
          %v652 = vunpack.c.l.b16 %v640
          %v653 = vpack.c.b16 %v650, %v649
          %v654 = vpack.c.b16 %v652, %v651
          %v658 = vsel %vm598, %v636, 0
          %660 = vmatpush.bf16.msra.mxu0 0
          %661 = vmatpush.bf16.msra.mxu0 0
          %662 = vmatpush.bf16.msra.mxu0 0
          %663 = vmatpush.bf16.msra.mxu0 0
          %664 = vmatpush.bf16.msra.mxu0 0
          %665 = vmatpush.bf16.msra.mxu0 0
          %666 = vmatpush.bf16.msra.mxu0 %v654
          %667 = vmatpush.bf16.msra.mxu0 %v653
          %668 = vmatmul.bf16.gmra.mxu0 %v658
          %v669 = vpop.f32.mrf.mxu0
          %v670 = vadd.f32 %v643, %v669
          %v671 = vpop.f32.mrf.mxu0
          %672 = vdwg.mxu0
          %v673 = vld [vmem:[%s5] sm:$0xf]
          %v674 = vld [vmem:[%s5 + $0x4] sm:$0xf]
          %v675 = vld [vmem:[%s5 + $0x8] sm:$0xf]
          %v676 = vld [vmem:[%s5 + $0xc] sm:$0xf]
          %v677 = vld [vmem:[%s8] sm:$0x1]
          %v679 = vperm.slane %v677, 0
          %v685 = vunpack.c.l.b16 %v673
          %v686 = vunpack.c.l.b16 %v674
          %v687 = vunpack.c.l.b16 %v675
          %v688 = vunpack.c.l.b16 %v676
          %v689 = vpack.c.b16 %v686, %v685
          %v690 = vpack.c.b16 %v688, %v687
          %693 = vmatpush.bf16.msra.mxu0 0
          %694 = vmatpush.bf16.msra.mxu0 0
          %695 = vmatpush.bf16.msra.mxu0 0
          %696 = vmatpush.bf16.msra.mxu0 0
          %697 = vmatpush.bf16.msra.mxu0 0
          %698 = vmatpush.bf16.msra.mxu0 0
          %699 = vmatpush.bf16.msra.mxu0 %v690
          %700 = vmatpush.bf16.msra.mxu0 %v689
          %701 = vmatmul.bf16.gmra.mxu0 %v658
          %v702 = vpop.f32.mrf.mxu0
          %v703 = vadd.f32 %v679, %v702
          %v704 = vpop.f32.mrf.mxu0
          %705 = vdwg.mxu0
          %v706 = vpack.c.bf16 %v670, %v670
          %vm707 = vcmask 257024
          %708 = vst.msk [vmem:[#allocation2] sm:$0xf] %vm707, %v706
          %v709 = vpack.c.bf16 %v703, %v703
          %710 = vst.msk [vmem:[#allocation3] sm:$0xf] %vm707, %v709
        $region100: #{tpu_custom_call.1} parent=87 // pred_fallthru
          _
        %s711 = smul.u32 %s38, 8
        %s712 = scalar_lea.vmem %s589, %s711
        %v713 = vld [vmem:[%s712] sm:$0xff]
        %vm714 = vcmask 261120
        %v715 = vsel %vm714, %v713, 0.0
        %716 = vadd.xlane.f32.xlu0 %v715
        %v717 = vpop.xlane.xlu0 %716
        %v718 = vrcp.pop 32.0
        %v719 = vmul.f32 32.0, %v718
        %v720 = vsub.f32 1.0, %v719
        %v721 = vmul.f32 %v718, %v720
        %v722 = vadd.f32 %v718, %v721
        %vm723 = vweird.f32 %v718
        %v724 = vsel %vm723, %v718, %v722
        %v725 = vmul.f32 %v717, %v724
        %v726 = vsub.f32 %v713, %v725
        %v727 = vmul.f32 %v726, %v726
        %v728 = vsel %vm714, %v727, 0.0
        %729 = vadd.xlane.f32.xlu0 %v728
        %v730 = vpop.xlane.xlu0 %729
        %v731 = vmul.f32 %v730, %v724
        %v732 = vadd.f32 %v731, 1e-05
        %v733 = vrsqrt.pop %v732
        %v734 = vmul.f32 %v733, %v732
        %v735 = vmul.f32 %v734, %v733
        %v736 = vmul.f32 0.5, %v735
        %v737 = vsub.f32 1.5, %v736
        %v738 = vmul.f32 %v733, %v737
        %vm739 = vweird.f32 %v732
        %vm740 = vweird.f32 %v733
        %vm741 = vmor %vm739, %vm740
        %v742 = vsel %vm741, %v733, %v738
        %v743 = vmul.f32 %v726, %v742
        %v745 = vperm.slane %v591, 0
        %v747 = vmul.f32 %v743, %v745
        %v749 = vperm.slane %v592, 0
        %v751 = vadd.f32 %v747, %v749
        %v752 = vpack.c.bf16 %v751, %v751
        %v753 = vld [vmem:[%s3] sm:$0xf]
        %v754 = vld [vmem:[%s3 + $0x4] sm:$0xf]
        %v755 = vld [vmem:[%s3 + $0x8] sm:$0xf]
        %v756 = vld [vmem:[%s3 + $0xc] sm:$0xf]
        %v757 = vld [vmem:[%s6] sm:$0x1]
        %v759 = vperm.slane %v757, 0
        %v765 = vunpack.c.l.b16 %v753
        %v766 = vunpack.c.l.b16 %v754
        %v767 = vunpack.c.l.b16 %v755
        %v768 = vunpack.c.l.b16 %v756
        %v769 = vpack.c.b16 %v766, %v765
        %v770 = vpack.c.b16 %v768, %v767
        %v774 = vsel %vm714, %v752, 0
        %776 = vmatpush.bf16.msra.mxu0 0
        %777 = vmatpush.bf16.msra.mxu0 0
        %778 = vmatpush.bf16.msra.mxu0 0
        %779 = vmatpush.bf16.msra.mxu0 0
        %780 = vmatpush.bf16.msra.mxu0 0
        %781 = vmatpush.bf16.msra.mxu0 0
        %782 = vmatpush.bf16.msra.mxu0 %v770
        %783 = vmatpush.bf16.msra.mxu0 %v769
        %784 = vmatmul.bf16.gmra.mxu0 %v774
        %v785 = vpop.f32.mrf.mxu0
        %v786 = vadd.f32 %v759, %v785
        %v787 = vpop.f32.mrf.mxu0
        %788 = vdwg.mxu0
        %v789 = vmul.f32 %v786, 0.35355338
        %v790 = vpack.c.bf16 %v789, %v789
        %792 = vrot.lane.b32.xlu0 %v790, 120
        %v793 = vpop.permute.xlu0 %792
        %794 = vrot.lane.b32.xlu0 %v790, 112
        %v795 = vpop.permute.xlu0 %794
        %796 = vrot.lane.b32.xlu0 %v790, 104
        %v797 = vpop.permute.xlu0 %796
        %v800 = vpack.i.b16 %v793, %v790
        %v801 = vshrl.u32 %v790, 16
        %v802 = vshrl.u32 %v793, 16
        %v803 = vpack.i.b16 %v802, %v801
        %v806 = vpack.i.b16 %v797, %v795
        %v807 = vshrl.u32 %v795, 16
        %v808 = vshrl.u32 %v797, 16
        %v809 = vpack.i.b16 %v808, %v807
        %v812 = vunpack.c.l.s4 1983009808
        %v813 = vunpack.c.0.s8 %v812
        %v814 = vperm.slane %v800, %v813
        %v817 = vunpack.c.l.s4 1983009808
        %v818 = vunpack.c.0.s8 %v817
        %v819 = vperm.slane %v806, %v818
        %v820 = vrot.slane %v819, 4
        %vm821 = vcmask 1047556
        %v822 = vsel %vm821, %v820, %v814
        %v823 = vrot.slane %v814, 4
        %v824 = vsel %vm821, %v819, %v823
        %v826 = vunpack.c.l.s4 1934713408
        %v827 = vunpack.c.0.s8 %v826
        %v828 = vperm.slane %v822, %v827
        %v830 = vunpack.c.l.s4 1934713408
        %v831 = vunpack.c.0.s8 %v830
        %v832 = vperm.slane %v824, %v831
        %v833 = vrot.slane %v828, 4
        %v834 = vsel %vm821, 0, %v833
        %v835 = vrot.slane %v832, 4
        %v836 = vsel %vm821, 0, %v835
        %v839 = vunpack.c.l.s4 1983009808
        %v840 = vunpack.c.0.s8 %v839
        %v841 = vperm.slane %v803, %v840
        %v844 = vunpack.c.l.s4 1983009808
        %v845 = vunpack.c.0.s8 %v844
        %v846 = vperm.slane %v809, %v845
        %v847 = vrot.slane %v846, 4
        %v848 = vsel %vm821, %v847, %v841
        %v849 = vrot.slane %v841, 4
        %v850 = vsel %vm821, %v846, %v849
        %v852 = vunpack.c.l.s4 1934713408
        %v853 = vunpack.c.0.s8 %v852
        %v854 = vperm.slane %v848, %v853
        %v856 = vunpack.c.l.s4 1934713408
        %v857 = vunpack.c.0.s8 %v856
        %v858 = vperm.slane %v850, %v857
        %v859 = vrot.slane %v854, 4
        %v860 = vsel %vm821, 0, %v859
        %v861 = vrot.slane %v858, 4
        %v862 = vsel %vm821, 0, %v861
        %v863 = vsel %vm821, %v835, %v828
        %v865 = vunpack.c.l.s4 1983009808
        %v866 = vunpack.c.0.s8 %v865
        %v867 = vperm.slane %v863, %v866
        %v868 = vrot.slane %v836, 4
        %v869 = vsel %vm821, %v868, %v834
        %v871 = vunpack.c.l.s4 1983009808
        %v872 = vunpack.c.0.s8 %v871
        %v873 = vperm.slane %v869, %v872
        %v874 = vrot.slane %v873, 4
        %v875 = vsel %vm821, %v874, %v867
        %v877 = vunpack.c.l.s4 1934713408
        %v878 = vunpack.c.0.s8 %v877
        %v879 = vperm.slane %v875, %v878
        %v880 = vrot.slane %v879, 4
        %v881 = vsel %vm821, 0, %v880
        %v882 = vsel %vm821, %v861, %v854
        %v884 = vunpack.c.l.s4 1983009808
        %v885 = vunpack.c.0.s8 %v884
        %v886 = vperm.slane %v882, %v885
        %v887 = vrot.slane %v862, 4
        %v888 = vsel %vm821, %v887, %v860
        %v890 = vunpack.c.l.s4 1983009808
        %v891 = vunpack.c.0.s8 %v890
        %v892 = vperm.slane %v888, %v891
        %v893 = vrot.slane %v892, 4
        %v894 = vsel %vm821, %v893, %v886
        %v896 = vunpack.c.l.s4 1934713408
        %v897 = vunpack.c.0.s8 %v896
        %v898 = vperm.slane %v894, %v897
        %v899 = vrot.slane %v898, 4
        %v900 = vsel %vm821, 0, %v899
        %v903 = vpack.i.b16 %v898, %v879
        %v904 = vshrl.u32 %v879, 16
        %v905 = vshrl.u32 %v898, 16
        %v906 = vpack.i.b16 %v905, %v904
        %v909 = vpack.i.b16 %v900, %v881
        %v910 = vshrl.u32 %v881, 16
        %v911 = vshrl.u32 %v900, 16
        %v912 = vpack.i.b16 %v911, %v910
        %v913 = vld [vmem:[#allocation2] sm:$0xf]
        %v914 = vld [vmem:[#allocation3] sm:$0xf]
        %916 = vrot.lane.b32.xlu0 %v913, 120
        %v917 = vpop.permute.xlu0 %916
        %918 = vrot.lane.b32.xlu0 %v913, 112
        %v919 = vpop.permute.xlu0 %918
        %920 = vrot.lane.b32.xlu0 %v913, 104
        %v921 = vpop.permute.xlu0 %920
        %v924 = vpack.i.b16 %v917, %v913
        %v925 = vshrl.u32 %v913, 16
        %v926 = vshrl.u32 %v917, 16
        %v927 = vpack.i.b16 %v926, %v925
        %v930 = vpack.i.b16 %v921, %v919
        %v931 = vshrl.u32 %v919, 16
        %v932 = vshrl.u32 %v921, 16
        %v933 = vpack.i.b16 %v932, %v931
        %v936 = vunpack.c.l.s4 1983009808
        %v937 = vunpack.c.0.s8 %v936
        %v938 = vperm.slane %v924, %v937
        %v941 = vunpack.c.l.s4 1983009808
        %v942 = vunpack.c.0.s8 %v941
        %v943 = vperm.slane %v930, %v942
        %v944 = vrot.slane %v943, 4
        %v945 = vsel %vm821, %v944, %v938
        %v946 = vrot.slane %v938, 4
        %v947 = vsel %vm821, %v943, %v946
        %v949 = vunpack.c.l.s4 1934713408
        %v950 = vunpack.c.0.s8 %v949
        %v951 = vperm.slane %v945, %v950
        %v953 = vunpack.c.l.s4 1934713408
        %v954 = vunpack.c.0.s8 %v953
        %v955 = vperm.slane %v947, %v954
        %v956 = vrot.slane %v951, 4
        %v957 = vsel %vm821, 0, %v956
        %v958 = vrot.slane %v955, 4
        %v959 = vsel %vm821, 0, %v958
        %v962 = vunpack.c.l.s4 1983009808
        %v963 = vunpack.c.0.s8 %v962
        %v964 = vperm.slane %v927, %v963
        %v967 = vunpack.c.l.s4 1983009808
        %v968 = vunpack.c.0.s8 %v967
        %v969 = vperm.slane %v933, %v968
        %v970 = vrot.slane %v969, 4
        %v971 = vsel %vm821, %v970, %v964
        %v972 = vrot.slane %v964, 4
        %v973 = vsel %vm821, %v969, %v972
        %v975 = vunpack.c.l.s4 1934713408
        %v976 = vunpack.c.0.s8 %v975
        %v977 = vperm.slane %v971, %v976
        %v979 = vunpack.c.l.s4 1934713408
        %v980 = vunpack.c.0.s8 %v979
        %v981 = vperm.slane %v973, %v980
        %v982 = vrot.slane %v977, 4
        %v983 = vsel %vm821, 0, %v982
        %v984 = vrot.slane %v981, 4
        %v985 = vsel %vm821, 0, %v984
        %v986 = vsel %vm821, %v958, %v951
        %v988 = vunpack.c.l.s4 1983009808
        %v989 = vunpack.c.0.s8 %v988
        %v990 = vperm.slane %v986, %v989
        %v991 = vrot.slane %v959, 4
        %v992 = vsel %vm821, %v991, %v957
        %v994 = vunpack.c.l.s4 1983009808
        %v995 = vunpack.c.0.s8 %v994
        %v996 = vperm.slane %v992, %v995
        %v997 = vrot.slane %v996, 4
        %v998 = vsel %vm821, %v997, %v990
        %v1000 = vunpack.c.l.s4 1934713408
        %v1001 = vunpack.c.0.s8 %v1000
        %v1002 = vperm.slane %v998, %v1001
        %v1003 = vrot.slane %v1002, 4
        %v1004 = vsel %vm821, 0, %v1003
        %v1005 = vsel %vm821, %v984, %v977
        %v1007 = vunpack.c.l.s4 1983009808
        %v1008 = vunpack.c.0.s8 %v1007
        %v1009 = vperm.slane %v1005, %v1008
        %v1010 = vrot.slane %v985, 4
        %v1011 = vsel %vm821, %v1010, %v983
        %v1013 = vunpack.c.l.s4 1983009808
        %v1014 = vunpack.c.0.s8 %v1013
        %v1015 = vperm.slane %v1011, %v1014
        %v1016 = vrot.slane %v1015, 4
        %v1017 = vsel %vm821, %v1016, %v1009
        %v1019 = vunpack.c.l.s4 1934713408
        %v1020 = vunpack.c.0.s8 %v1019
        %v1021 = vperm.slane %v1017, %v1020
        %v1022 = vrot.slane %v1021, 4
        %v1023 = vsel %vm821, 0, %v1022
        %v1026 = vpack.i.b16 %v1021, %v1002
        %v1027 = vshrl.u32 %v1002, 16
        %v1028 = vshrl.u32 %v1021, 16
        %v1029 = vpack.i.b16 %v1028, %v1027
        %v1032 = vpack.i.b16 %v1023, %v1004
        %v1033 = vshrl.u32 %v1004, 16
        %v1034 = vshrl.u32 %v1023, 16
        %v1035 = vpack.i.b16 %v1034, %v1033
        %1037 = vrot.lane.b32.xlu0 %v914, 120
        %v1038 = vpop.permute.xlu0 %1037
        %1039 = vrot.lane.b32.xlu0 %v914, 112
        %v1040 = vpop.permute.xlu0 %1039
        %1041 = vrot.lane.b32.xlu0 %v914, 104
        %v1042 = vpop.permute.xlu0 %1041
        %v1045 = vpack.i.b16 %v1038, %v914
        %v1046 = vshrl.u32 %v914, 16
        %v1047 = vshrl.u32 %v1038, 16
        %v1048 = vpack.i.b16 %v1047, %v1046
        %v1051 = vpack.i.b16 %v1042, %v1040
        %v1052 = vshrl.u32 %v1040, 16
        %v1053 = vshrl.u32 %v1042, 16
        %v1054 = vpack.i.b16 %v1053, %v1052
        %v1057 = vunpack.c.l.s4 1983009808
        %v1058 = vunpack.c.0.s8 %v1057
        %v1059 = vperm.slane %v1045, %v1058
        %v1062 = vunpack.c.l.s4 1983009808
        %v1063 = vunpack.c.0.s8 %v1062
        %v1064 = vperm.slane %v1051, %v1063
        %v1065 = vrot.slane %v1064, 4
        %v1066 = vsel %vm821, %v1065, %v1059
        %v1067 = vrot.slane %v1059, 4
        %v1068 = vsel %vm821, %v1064, %v1067
        %v1070 = vunpack.c.l.s4 1934713408
        %v1071 = vunpack.c.0.s8 %v1070
        %v1072 = vperm.slane %v1066, %v1071
        %v1074 = vunpack.c.l.s4 1934713408
        %v1075 = vunpack.c.0.s8 %v1074
        %v1076 = vperm.slane %v1068, %v1075
        %v1077 = vrot.slane %v1072, 4
        %v1078 = vsel %vm821, 0, %v1077
        %v1079 = vrot.slane %v1076, 4
        %v1080 = vsel %vm821, 0, %v1079
        %v1083 = vunpack.c.l.s4 1983009808
        %v1084 = vunpack.c.0.s8 %v1083
        %v1085 = vperm.slane %v1048, %v1084
        %v1088 = vunpack.c.l.s4 1983009808
        %v1089 = vunpack.c.0.s8 %v1088
        %v1090 = vperm.slane %v1054, %v1089
        %v1091 = vrot.slane %v1090, 4
        %v1092 = vsel %vm821, %v1091, %v1085
        %v1093 = vrot.slane %v1085, 4
        %v1094 = vsel %vm821, %v1090, %v1093
        %v1096 = vunpack.c.l.s4 1934713408
        %v1097 = vunpack.c.0.s8 %v1096
        %v1098 = vperm.slane %v1092, %v1097
        %v1100 = vunpack.c.l.s4 1934713408
        %v1101 = vunpack.c.0.s8 %v1100
        %v1102 = vperm.slane %v1094, %v1101
        %v1103 = vrot.slane %v1098, 4
        %v1104 = vsel %vm821, 0, %v1103
        %v1105 = vrot.slane %v1102, 4
        %v1106 = vsel %vm821, 0, %v1105
        %v1107 = vsel %vm821, %v1079, %v1072
        %v1109 = vunpack.c.l.s4 1983009808
        %v1110 = vunpack.c.0.s8 %v1109
        %v1111 = vperm.slane %v1107, %v1110
        %v1112 = vrot.slane %v1080, 4
        %v1113 = vsel %vm821, %v1112, %v1078
        %v1115 = vunpack.c.l.s4 1983009808
        %v1116 = vunpack.c.0.s8 %v1115
        %v1117 = vperm.slane %v1113, %v1116
        %v1118 = vrot.slane %v1117, 4
        %v1119 = vsel %vm821, %v1118, %v1111
        %v1121 = vunpack.c.l.s4 1934713408
        %v1122 = vunpack.c.0.s8 %v1121
        %v1123 = vperm.slane %v1119, %v1122
        %v1124 = vrot.slane %v1123, 4
        %v1125 = vsel %vm821, 0, %v1124
        %v1126 = vsel %vm821, %v1105, %v1098
        %v1128 = vunpack.c.l.s4 1983009808
        %v1129 = vunpack.c.0.s8 %v1128
        %v1130 = vperm.slane %v1126, %v1129
        %v1131 = vrot.slane %v1106, 4
        %v1132 = vsel %vm821, %v1131, %v1104
        %v1134 = vunpack.c.l.s4 1983009808
        %v1135 = vunpack.c.0.s8 %v1134
        %v1136 = vperm.slane %v1132, %v1135
        %v1137 = vrot.slane %v1136, 4
        %v1138 = vsel %vm821, %v1137, %v1130
        %v1140 = vunpack.c.l.s4 1934713408
        %v1141 = vunpack.c.0.s8 %v1140
        %v1142 = vperm.slane %v1138, %v1141
        %v1143 = vrot.slane %v1142, 4
        %v1144 = vsel %vm821, 0, %v1143
        %v1147 = vpack.i.b16 %v1142, %v1123
        %v1148 = vshrl.u32 %v1123, 16
        %v1149 = vshrl.u32 %v1142, 16
        %v1150 = vpack.i.b16 %v1149, %v1148
        %v1153 = vpack.i.b16 %v1144, %v1125
        %v1154 = vshrl.u32 %v1125, 16
        %v1155 = vshrl.u32 %v1144, 16
        %v1156 = vpack.i.b16 %v1155, %v1154
        %vm1157 = vcmask 64512
        %v1159 = vsel %vm1157, %v903, 0
        %v1162 = vsel %vm1157, %v1026, 0
        %1164 = vmatpush.bf16.xpose.msra.mxu0 0
        %1165 = vmatpush.bf16.xpose.msra.mxu0 0
        %1166 = vmatpush.bf16.xpose.msra.mxu0 0
        %1167 = vmatpush.bf16.xpose.msra.mxu0 0
        %1168 = vmatpush.bf16.xpose.msra.mxu0 0
        %1169 = vmatpush.bf16.xpose.msra.mxu0 0
        %1170 = vmatpush.bf16.xpose.msra.mxu0 0
        %1171 = vmatpush.bf16.xpose.msra.mxu0 %v1162
        %1172 = vmatmul.bf16.gmra.mxu0 %v1159
        %v1173 = vpop.f32.mrf.mxu0
        %v1174 = vadd.f32 0.0, %v1173
        %v1175 = vpop.f32.mrf.mxu0
        %1176 = vdwg.mxu0
        %v1178 = vsel %vm1157, %v906, 0
        %v1181 = vsel %vm1157, %v1029, 0
        %1183 = vmatpush.bf16.xpose.msra.mxu0 0
        %1184 = vmatpush.bf16.xpose.msra.mxu0 0
        %1185 = vmatpush.bf16.xpose.msra.mxu0 0
        %1186 = vmatpush.bf16.xpose.msra.mxu0 0
        %1187 = vmatpush.bf16.xpose.msra.mxu0 0
        %1188 = vmatpush.bf16.xpose.msra.mxu0 0
        %1189 = vmatpush.bf16.xpose.msra.mxu0 0
        %1190 = vmatpush.bf16.xpose.msra.mxu0 %v1181
        %1191 = vmatmul.bf16.gmra.mxu0 %v1178
        %v1192 = vpop.f32.mrf.mxu0
        %v1193 = vadd.f32 0.0, %v1192
        %v1194 = vpop.f32.mrf.mxu0
        %1195 = vdwg.mxu0
        %v1197 = vsel %vm1157, %v909, 0
        %v1200 = vsel %vm1157, %v1032, 0
        %1202 = vmatpush.bf16.xpose.msra.mxu0 0
        %1203 = vmatpush.bf16.xpose.msra.mxu0 0
        %1204 = vmatpush.bf16.xpose.msra.mxu0 0
        %1205 = vmatpush.bf16.xpose.msra.mxu0 0
        %1206 = vmatpush.bf16.xpose.msra.mxu0 0
        %1207 = vmatpush.bf16.xpose.msra.mxu0 0
        %1208 = vmatpush.bf16.xpose.msra.mxu0 0
        %1209 = vmatpush.bf16.xpose.msra.mxu0 %v1200
        %1210 = vmatmul.bf16.gmra.mxu0 %v1197
        %v1211 = vpop.f32.mrf.mxu0
        %v1212 = vadd.f32 0.0, %v1211
        %v1213 = vpop.f32.mrf.mxu0
        %1214 = vdwg.mxu0
        %v1216 = vsel %vm1157, %v912, 0
        %v1219 = vsel %vm1157, %v1035, 0
        %1221 = vmatpush.bf16.xpose.msra.mxu0 0
        %1222 = vmatpush.bf16.xpose.msra.mxu0 0
        %1223 = vmatpush.bf16.xpose.msra.mxu0 0
        %1224 = vmatpush.bf16.xpose.msra.mxu0 0
        %1225 = vmatpush.bf16.xpose.msra.mxu0 0
        %1226 = vmatpush.bf16.xpose.msra.mxu0 0
        %1227 = vmatpush.bf16.xpose.msra.mxu0 0
        %1228 = vmatpush.bf16.xpose.msra.mxu0 %v1219
        %1229 = vmatmul.bf16.gmra.mxu0 %v1216
        %v1230 = vpop.f32.mrf.mxu0
        %v1231 = vadd.f32 0.0, %v1230
        %v1232 = vpop.f32.mrf.mxu0
        %1233 = vdwg.mxu0
        %v1234 = vsel %vm1157, %v1174, -inf
        %1235 = vmax.xlane.f32.xlu0 %v1234
        %v1236 = vpop.xlane.xlu0 %1235
        %v1237 = vsel %vm1157, %v1193, -inf
        %1238 = vmax.xlane.f32.xlu0 %v1237
        %v1239 = vpop.xlane.xlu0 %1238
        %v1240 = vsel %vm1157, %v1212, -inf
        %1241 = vmax.xlane.f32.xlu0 %v1240
        %v1242 = vpop.xlane.xlu0 %1241
        %v1243 = vsel %vm1157, %v1231, -inf
        %1244 = vmax.xlane.f32.xlu0 %v1243
        %v1245 = vpop.xlane.xlu0 %1244
        %v1246 = vsub.f32 -inf, %v1236
        %v1247 = vsub.f32 -inf, %v1239
        %v1248 = vsub.f32 -inf, %v1242
        %v1249 = vsub.f32 -inf, %v1245
        %v1250 = vmul.f32 %v1246, 1.442695
        %v1251 = vpow.pop %v1250
        %v1252 = vmul.f32 %v1247, 1.442695
        %v1253 = vpow.pop %v1252
        %v1254 = vmul.f32 %v1248, 1.442695
        %v1255 = vpow.pop %v1254
        %v1256 = vmul.f32 %v1249, 1.442695
        %v1257 = vpow.pop %v1256
        %v1258 = vsub.f32 %v1174, %v1236
        %v1259 = vsub.f32 %v1193, %v1239
        %v1260 = vsub.f32 %v1212, %v1242
        %v1261 = vsub.f32 %v1231, %v1245
        %v1262 = vmul.f32 %v1258, 1.442695
        %v1263 = vpow.pop %v1262
        %v1264 = vmul.f32 %v1259, 1.442695
        %v1265 = vpow.pop %v1264
        %v1266 = vmul.f32 %v1260, 1.442695
        %v1267 = vpow.pop %v1266
        %v1268 = vmul.f32 %v1261, 1.442695
        %v1269 = vpow.pop %v1268
        %v1270 = vmul.f32 %v1251, 0.0
        %v1271 = vmul.f32 %v1253, 0.0
        %v1272 = vmul.f32 %v1255, 0.0
        %v1273 = vmul.f32 %v1257, 0.0
        %v1274 = vsel %vm1157, %v1263, 0.0
        %1275 = vadd.xlane.f32.xlu0 %v1274
        %v1276 = vpop.xlane.xlu0 %1275
        %v1277 = vsel %vm1157, %v1265, 0.0
        %1278 = vadd.xlane.f32.xlu0 %v1277
        %v1279 = vpop.xlane.xlu0 %1278
        %v1280 = vsel %vm1157, %v1267, 0.0
        %1281 = vadd.xlane.f32.xlu0 %v1280
        %v1282 = vpop.xlane.xlu0 %1281
        %v1283 = vsel %vm1157, %v1269, 0.0
        %1284 = vadd.xlane.f32.xlu0 %v1283
        %v1285 = vpop.xlane.xlu0 %1284
        %v1286 = vadd.f32 %v1270, %v1276
        %v1287 = vadd.f32 %v1271, %v1279
        %v1288 = vadd.f32 %v1272, %v1282
        %v1289 = vadd.f32 %v1273, %v1285
        %v1290 = vpack.c.bf16 %v1263, %v1263
        %v1291 = vpack.c.bf16 %v1265, %v1265
        %v1292 = vpack.c.bf16 %v1267, %v1267
        %v1293 = vpack.c.bf16 %v1269, %v1269
        %v1295 = vsel %vm1157, %v1290, 0
        %vm1297 = vcmask 1043456
        %v1299 = vsel %vm1297, %v1147, 0
        %1301 = vmatpush.bf16.msra.mxu0 0
        %1302 = vmatpush.bf16.msra.mxu0 0
        %1303 = vmatpush.bf16.msra.mxu0 0
        %1304 = vmatpush.bf16.msra.mxu0 0
        %1305 = vmatpush.bf16.msra.mxu0 0
        %1306 = vmatpush.bf16.msra.mxu0 0
        %1307 = vmatpush.bf16.msra.mxu0 0
        %1308 = vmatpush.bf16.msra.mxu0 %v1299
        %1309 = vmatmul.bf16.gmra.mxu0 %v1295
        %v1310 = vpop.f32.mrf.mxu0
        %v1311 = vadd.f32 0.0, %v1310
        %v1312 = vpop.f32.mrf.mxu0
        %1313 = vdwg.mxu0
        %v1315 = vsel %vm1157, %v1291, 0
        %v1318 = vsel %vm1297, %v1150, 0
        %1320 = vmatpush.bf16.msra.mxu0 0
        %1321 = vmatpush.bf16.msra.mxu0 0
        %1322 = vmatpush.bf16.msra.mxu0 0
        %1323 = vmatpush.bf16.msra.mxu0 0
        %1324 = vmatpush.bf16.msra.mxu0 0
        %1325 = vmatpush.bf16.msra.mxu0 0
        %1326 = vmatpush.bf16.msra.mxu0 0
        %1327 = vmatpush.bf16.msra.mxu0 %v1318
        %1328 = vmatmul.bf16.gmra.mxu0 %v1315
        %v1329 = vpop.f32.mrf.mxu0
        %v1330 = vadd.f32 0.0, %v1329
        %v1331 = vpop.f32.mrf.mxu0
        %1332 = vdwg.mxu0
        %v1334 = vsel %vm1157, %v1292, 0
        %v1337 = vsel %vm1297, %v1153, 0
        %1339 = vmatpush.bf16.msra.mxu0 0
        %1340 = vmatpush.bf16.msra.mxu0 0
        %1341 = vmatpush.bf16.msra.mxu0 0
        %1342 = vmatpush.bf16.msra.mxu0 0
        %1343 = vmatpush.bf16.msra.mxu0 0
        %1344 = vmatpush.bf16.msra.mxu0 0
        %1345 = vmatpush.bf16.msra.mxu0 0
        %1346 = vmatpush.bf16.msra.mxu0 %v1337
        %1347 = vmatmul.bf16.gmra.mxu0 %v1334
        %v1348 = vpop.f32.mrf.mxu0
        %v1349 = vadd.f32 0.0, %v1348
        %v1350 = vpop.f32.mrf.mxu0
        %1351 = vdwg.mxu0
        %v1353 = vsel %vm1157, %v1293, 0
        %v1356 = vsel %vm1297, %v1156, 0
        %1358 = vmatpush.bf16.msra.mxu0 0
        %1359 = vmatpush.bf16.msra.mxu0 0
        %1360 = vmatpush.bf16.msra.mxu0 0
        %1361 = vmatpush.bf16.msra.mxu0 0
        %1362 = vmatpush.bf16.msra.mxu0 0
        %1363 = vmatpush.bf16.msra.mxu0 0
        %1364 = vmatpush.bf16.msra.mxu0 0
        %1365 = vmatpush.bf16.msra.mxu0 %v1356
        %1366 = vmatmul.bf16.gmra.mxu0 %v1353
        %v1367 = vpop.f32.mrf.mxu0
        %v1368 = vadd.f32 0.0, %v1367
        %v1369 = vpop.f32.mrf.mxu0
        %1370 = vdwg.mxu0
        %v1371 = vadd.f32 %v1270, %v1311
        %v1372 = vadd.f32 %v1271, %v1330
        %v1373 = vadd.f32 %v1272, %v1349
        %v1374 = vadd.f32 %v1273, %v1368
        %v1375 = vrcp.pop %v1286
        %v1376 = vrcp.pop %v1287
        %v1377 = vrcp.pop %v1288
        %v1378 = vrcp.pop %v1289
        %v1379 = vmul.f32 %v1371, %v1375
        %v1380 = vmul.f32 %v1372, %v1376
        %v1381 = vmul.f32 %v1373, %v1377
        %v1382 = vmul.f32 %v1374, %v1378
        %v1383 = vrot.slane %v1381, 4
        %vm1384 = vcmask 1047556
        %v1385 = vsel %vm1384, %v1383, %v1379
        %v1386 = vrot.slane %v1379, 4
        %v1387 = vsel %vm1384, %v1381, %v1386
        %v1389 = vunpack.c.l.s4 1983009808
        %v1390 = vunpack.c.0.s8 %v1389
        %v1391 = vperm.slane %v1385, %v1390
        %v1393 = vunpack.c.l.s4 1983009808
        %v1394 = vunpack.c.0.s8 %v1393
        %v1395 = vperm.slane %v1387, %v1394
        %v1396 = vrot.slane %v1382, 4
        %v1397 = vsel %vm1384, %v1396, %v1380
        %v1398 = vrot.slane %v1380, 4
        %v1399 = vsel %vm1384, %v1382, %v1398
        %v1401 = vunpack.c.l.s4 1983009808
        %v1402 = vunpack.c.0.s8 %v1401
        %v1403 = vperm.slane %v1397, %v1402
        %v1405 = vunpack.c.l.s4 1983009808
        %v1406 = vunpack.c.0.s8 %v1405
        %v1407 = vperm.slane %v1399, %v1406
        %v1408 = vrot.slane %v1403, 4
        %v1409 = vsel %vm1384, %v1408, %v1391
        %v1410 = vrot.slane %v1391, 4
        %v1411 = vsel %vm1384, %v1403, %v1410
        %v1413 = vunpack.c.l.s4 1934713408
        %v1414 = vunpack.c.0.s8 %v1413
        %v1415 = vperm.slane %v1409, %v1414
        %v1417 = vunpack.c.l.s4 1934713408
        %v1418 = vunpack.c.0.s8 %v1417
        %v1419 = vperm.slane %v1411, %v1418
        %v1420 = vrot.slane %v1407, 4
        %v1421 = vsel %vm1384, %v1420, %v1395
        %v1422 = vrot.slane %v1395, 4
        %v1423 = vsel %vm1384, %v1407, %v1422
        %v1425 = vunpack.c.l.s4 1934713408
        %v1426 = vunpack.c.0.s8 %v1425
        %v1427 = vperm.slane %v1421, %v1426
        %v1429 = vunpack.c.l.s4 1934713408
        %v1430 = vunpack.c.0.s8 %v1429
        %v1431 = vperm.slane %v1423, %v1430
        %v1432 = vrot.slane %v1415, 4
        %v1433 = vsel %vm1384, 0.0, %v1432
        %v1434 = vrot.slane %v1419, 4
        %v1435 = vsel %vm1384, 0.0, %v1434
        %v1436 = vrot.slane %v1427, 4
        %v1437 = vsel %vm1384, 0.0, %v1436
        %v1438 = vrot.slane %v1431, 4
        %v1439 = vsel %vm1384, 0.0, %v1438
        %v1440 = vsel %vm1384, %v1434, %v1415
        %v1442 = vunpack.c.l.s4 1983009808
        %v1443 = vunpack.c.0.s8 %v1442
        %v1444 = vperm.slane %v1440, %v1443
        %v1445 = vrot.slane %v1435, 4
        %v1446 = vsel %vm1384, %v1445, %v1433
        %v1448 = vunpack.c.l.s4 1983009808
        %v1449 = vunpack.c.0.s8 %v1448
        %v1450 = vperm.slane %v1446, %v1449
        %v1451 = vsel %vm1384, %v1438, %v1427
        %v1453 = vunpack.c.l.s4 1983009808
        %v1454 = vunpack.c.0.s8 %v1453
        %v1455 = vperm.slane %v1451, %v1454
        %v1456 = vrot.slane %v1439, 4
        %v1457 = vsel %vm1384, %v1456, %v1437
        %v1459 = vunpack.c.l.s4 1983009808
        %v1460 = vunpack.c.0.s8 %v1459
        %v1461 = vperm.slane %v1457, %v1460
        %v1462 = vrot.slane %v1450, 4
        %v1463 = vsel %vm1384, %v1462, %v1444
        %v1464 = vrot.slane %v1444, 4
        %v1465 = vsel %vm1384, %v1450, %v1464
        %v1467 = vunpack.c.l.s4 1934713408
        %v1468 = vunpack.c.0.s8 %v1467
        %v1469 = vperm.slane %v1463, %v1468
        %v1471 = vunpack.c.l.s4 1934713408
        %v1472 = vunpack.c.0.s8 %v1471
        %v1473 = vperm.slane %v1465, %v1472
        %v1474 = vrot.slane %v1461, 4
        %v1475 = vsel %vm1384, %v1474, %v1455
        %v1476 = vrot.slane %v1455, 4
        %v1477 = vsel %vm1384, %v1461, %v1476
        %v1479 = vunpack.c.l.s4 1934713408
        %v1480 = vunpack.c.0.s8 %v1479
        %v1481 = vperm.slane %v1475, %v1480
        %v1483 = vunpack.c.l.s4 1934713408
        %v1484 = vunpack.c.0.s8 %v1483
        %v1485 = vperm.slane %v1477, %v1484
        %v1486 = vrot.slane %v1481, 4
        %v1487 = vsel %vm1384, %v1486, %v1469
        %v1488 = vrot.slane %v1469, 4
        %v1489 = vsel %vm1384, %v1481, %v1488
        %v1490 = vrot.slane %v1485, 4
        %v1491 = vsel %vm1384, %v1490, %v1473
        %v1492 = vrot.slane %v1473, 4
        %v1493 = vsel %vm1384, %v1485, %v1492
        %1495 = vrot.lane.b32.xlu0 %v1489, 8
        %v1496 = vpop.permute.xlu0 %1495
        %1499 = vrot.lane.b32.xlu0 %v1491, 16
        %v1500 = vpop.permute.xlu0 %1499
        %1503 = vrot.lane.b32.xlu0 %v1493, 24
        %v1504 = vpop.permute.xlu0 %1503
        %v1506 = vsel %vm1157, %v1487, %v1496
        %vm1507 = vcmask 130048
        %v1508 = vsel %vm1507, %v1506, %v1500
        %vm1509 = vcmask 195584
        %v1510 = vsel %vm1509, %v1508, %v1504
        %v1511 = vpack.c.bf16 %v1510, %v1510
        %v1512 = vld [vmem:[%s9] sm:$0xf]
        %v1513 = vld [vmem:[%s9 + $0x4] sm:$0xf]
        %v1514 = vld [vmem:[%s9 + $0x8] sm:$0xf]
        %v1515 = vld [vmem:[%s9 + $0xc] sm:$0xf]
        %v1516 = vld [vmem:[%s10] sm:$0x1]
        %v1518 = vperm.slane %v1516, 0
        %v1524 = vunpack.c.l.b16 %v1512
        %v1525 = vunpack.c.l.b16 %v1513
        %v1526 = vunpack.c.l.b16 %v1514
        %v1527 = vunpack.c.l.b16 %v1515
        %v1528 = vpack.c.b16 %v1525, %v1524
        %v1529 = vpack.c.b16 %v1527, %v1526
        %v1533 = vsel %vm714, %v1511, 0
        %1535 = vmatpush.bf16.msra.mxu0 0
        %1536 = vmatpush.bf16.msra.mxu0 0
        %1537 = vmatpush.bf16.msra.mxu0 0
        %1538 = vmatpush.bf16.msra.mxu0 0
        %1539 = vmatpush.bf16.msra.mxu0 0
        %1540 = vmatpush.bf16.msra.mxu0 0
        %1541 = vmatpush.bf16.msra.mxu0 %v1529
        %1542 = vmatpush.bf16.msra.mxu0 %v1528
        %1543 = vmatmul.bf16.gmra.mxu0 %v1533
        %v1544 = vpop.f32.mrf.mxu0
        %v1545 = vadd.f32 %v1518, %v1544
        %v1546 = vpop.f32.mrf.mxu0
        %1547 = vdwg.mxu0
        %v1548 = vadd.f32 %v713, %v1545
        %v1549 = vld [vmem:[%s11] sm:$0x1]
        %v1550 = vld [vmem:[%s12] sm:$0x1]
        %v1551 = vsel %vm714, %v1548, 0.0
        %1552 = vadd.xlane.f32.xlu0 %v1551
        %v1553 = vpop.xlane.xlu0 %1552
        %v1554 = vmul.f32 %v1553, %v724
        %v1555 = vsub.f32 %v1548, %v1554
        %v1556 = vmul.f32 %v1555, %v1555
        %v1557 = vsel %vm714, %v1556, 0.0
        %1558 = vadd.xlane.f32.xlu0 %v1557
        %v1559 = vpop.xlane.xlu0 %1558
        %v1560 = vmul.f32 %v1559, %v724
        %v1561 = vadd.f32 %v1560, 1e-05
        %v1562 = vrsqrt.pop %v1561
        %v1563 = vmul.f32 %v1562, %v1561
        %v1564 = vmul.f32 %v1563, %v1562
        %v1565 = vmul.f32 0.5, %v1564
        %v1566 = vsub.f32 1.5, %v1565
        %v1567 = vmul.f32 %v1562, %v1566
        %vm1568 = vweird.f32 %v1561
        %vm1569 = vweird.f32 %v1562
        %vm1570 = vmor %vm1568, %vm1569
        %v1571 = vsel %vm1570, %v1562, %v1567
        %v1572 = vmul.f32 %v1555, %v1571
        %v1574 = vperm.slane %v1549, 0
        %v1576 = vmul.f32 %v1572, %v1574
        %v1578 = vperm.slane %v1550, 0
        %v1580 = vadd.f32 %v1576, %v1578
        %v1581 = vpack.c.bf16 %v1580, %v1580
        %v1582 = vld [vmem:[#allocation7] sm:$0xf]
        %v1583 = vld [vmem:[#allocation7 + $0x4] sm:$0xf]
        %v1584 = vld [vmem:[#allocation7 + $0x8] sm:$0xf]
        %v1585 = vld [vmem:[#allocation7 + $0xc] sm:$0xf]
        %v1586 = vld [vmem:[%s14] sm:$0x1]
        %v1588 = vperm.slane %v1586, 0
        %v1594 = vunpack.c.l.b16 %v1582
        %v1595 = vunpack.c.l.b16 %v1583
        %v1596 = vunpack.c.l.b16 %v1584
        %v1597 = vunpack.c.l.b16 %v1585
        %v1598 = vpack.c.b16 %v1595, %v1594
        %v1599 = vpack.c.b16 %v1597, %v1596
        %v1603 = vsel %vm714, %v1581, 0
        %1605 = vmatpush.bf16.msra.mxu0 0
        %1606 = vmatpush.bf16.msra.mxu0 0
        %1607 = vmatpush.bf16.msra.mxu0 0
        %1608 = vmatpush.bf16.msra.mxu0 0
        %1609 = vmatpush.bf16.msra.mxu0 0
        %1610 = vmatpush.bf16.msra.mxu0 0
        %1611 = vmatpush.bf16.msra.mxu0 %v1599
        %1612 = vmatpush.bf16.msra.mxu0 %v1598
        %1613 = vmatmul.bf16.gmra.mxu0 %v1603
        %v1614 = vpop.f32.mrf.mxu0
        %v1615 = vadd.f32 %v1588, %v1614
        %v1616 = vpop.f32.mrf.mxu0
        %1617 = vdwg.mxu0
        %v1618 = vmul.f32 %v1615, 1.702
        %v1619 = vxor.u32 %v1618, 2147483648
        %v1620 = vmul.f32 %v1619, 1.442695
        %v1621 = vpow.pop %v1620
        %v1622 = vadd.f32 %v1621, 1.0
        %v1623 = vrcp.pop %v1622
        %v1624 = vmul.f32 %v1622, %v1623
        %v1625 = vsub.f32 1.0, %v1624
        %v1626 = vmul.f32 %v1623, %v1625
        %v1627 = vadd.f32 %v1623, %v1626
        %vm1628 = vweird.f32 %v1622
        %vm1629 = vweird.f32 %v1623
        %vm1630 = vmor %vm1628, %vm1629
        %v1631 = vsel %vm1630, %v1623, %v1627
        %v1632 = vand.u32 2147483647, %v1622
        %vm1633 = vcmp.eq.f32.partialorder %v1632, 8.507059e+37
        %v1634 = vand.u32 %v1622, 2147483648
        %v1635 = vor.u32 1.1754944e-38, %v1634
        %v1636 = vsel %vm1633, %v1635, %v1631
        %v1637 = vmul.f32 1.0, %v1636
        %v1638 = vmul.f32 %v1615, %v1637
        %v1639 = vpack.c.bf16 %v1638, %v1638
        %v1640 = vld [vmem:[%s15] sm:$0xf]
        %v1641 = vld [vmem:[%s15 + $0x4] sm:$0xf]
        %v1642 = vld [vmem:[%s15 + $0x8] sm:$0xf]
        %v1643 = vld [vmem:[%s15 + $0xc] sm:$0xf]
        %v1644 = vld [vmem:[%s15 + $0x10] sm:$0xf]
        %v1645 = vld [vmem:[%s15 + $0x14] sm:$0xf]
        %v1646 = vld [vmem:[%s15 + $0x18] sm:$0xf]
        %v1647 = vld [vmem:[%s15 + $0x1c] sm:$0xf]
        %v1648 = vld [vmem:[%s15 + $0x20] sm:$0xf]
        %v1649 = vld [vmem:[%s15 + $0x24] sm:$0xf]
        %v1650 = vld [vmem:[%s15 + $0x28] sm:$0xf]
        %v1651 = vld [vmem:[%s15 + $0x2c] sm:$0xf]
        %v1652 = vld [vmem:[%s15 + $0x30] sm:$0xf]
        %v1653 = vld [vmem:[%s15 + $0x34] sm:$0xf]
        %v1654 = vld [vmem:[%s15 + $0x38] sm:$0xf]
        %v1655 = vld [vmem:[%s15 + $0x3c] sm:$0xf]
        %v1656 = vld [vmem:[%s16] sm:$0x1]
        %v1658 = vperm.slane %v1656, 0
        %v1676 = vunpack.c.l.b16 %v1640
        %v1677 = vunpack.c.l.b16 %v1641
        %v1678 = vunpack.c.l.b16 %v1642
        %v1679 = vunpack.c.l.b16 %v1643
        %v1680 = vunpack.c.l.b16 %v1644
        %v1681 = vunpack.c.l.b16 %v1645
        %v1682 = vunpack.c.l.b16 %v1646
        %v1683 = vunpack.c.l.b16 %v1647
        %v1684 = vunpack.c.l.b16 %v1648
        %v1685 = vunpack.c.l.b16 %v1649
        %v1686 = vunpack.c.l.b16 %v1650
        %v1687 = vunpack.c.l.b16 %v1651
        %v1688 = vunpack.c.l.b16 %v1652
        %v1689 = vunpack.c.l.b16 %v1653
        %v1690 = vunpack.c.l.b16 %v1654
        %v1691 = vunpack.c.l.b16 %v1655
        %v1692 = vpack.c.b16 %v1677, %v1676
        %v1693 = vpack.c.b16 %v1679, %v1678
        %v1694 = vpack.c.b16 %v1681, %v1680
        %v1695 = vpack.c.b16 %v1683, %v1682
        %v1696 = vpack.c.b16 %v1685, %v1684
        %v1697 = vpack.c.b16 %v1687, %v1686
        %v1698 = vpack.c.b16 %v1689, %v1688
        %v1699 = vpack.c.b16 %v1691, %v1690
        %1708 = vmatpush.bf16.msra.mxu0 %v1699
        %1709 = vmatpush.bf16.msra.mxu0 %v1698
        %1710 = vmatpush.bf16.msra.mxu0 %v1697
        %1711 = vmatpush.bf16.msra.mxu0 %v1696
        %1712 = vmatpush.bf16.msra.mxu0 %v1695
        %1713 = vmatpush.bf16.msra.mxu0 %v1694
        %1714 = vmatpush.bf16.msra.mxu0 %v1693
        %1715 = vmatpush.bf16.msra.mxu0 %v1692
        %1716 = vmatmul.bf16.gmra.mxu0 %v1639
        %v1717 = vpop.f32.mrf.mxu0
        %v1718 = vadd.f32 %v1658, %v1717
        %v1719 = vpop.f32.mrf.mxu0
        %1720 = vdwg.mxu0
        %v1721 = vadd.f32 %v1548, %v1718
        %1722 = vst.msk [vmem:[%s585] sm:$0xff] %vm714, %v1721
        %s1723 = sand.u32 %s417, 1
        %s1724 = scalar_lea.sflag [#allocation6], %s1723
        %s1725 = sand.u32 %s417, 1
        %s1726 = smul.addr %s1725, 8
        %s1727 = scalar_lea.vmem [#allocation9], %s1726
        // Predicated region
        $region101: #{tpu_custom_call.1} parent=87 // pred_check
          %p1728 = pneg %p427
        $region102: #{tpu_custom_call.1} parent=87 // pred_check_branch
          %1730 = sbr.rel (%p1728) target = $region104
        $region103: #{tpu_custom_call.1} parent=87 // pred_region
          %1732 = vsyncadd %s1724, 0
          %s1733 = sadd.s32 %s38, %s37
          %s1734 = smul.addr %s1733, 8
          %s1735 = scalar_lea.hbm %s17, %s1734
          %s1737 = sshll.u32 %s1727, 4
          %s1738 = int_to_ptr.vmem [resolvable:$true] %s1737
          %s1739 = sshll.u32 %s1735, 4
          %s1740 = int_to_ptr.hbm [resolvable:$true] %s1739
          %1742 = dma.vmem_to_hbm [thread:$0]  %s1738, 128, %s1740, %s1724
        $region104: #{tpu_custom_call.1} parent=87 // pred_fallthru
          _
      $region88: #{tpu_custom_call.1} parent=5 // pred_fallthru
        _
      %p1743 = scmp.le.s32.totalorder 2, %s28
      // Predicated region
      $region105: #{tpu_custom_call.1} parent=5 // pred_check
        %p1744 = pneg %p1743
      $region106: #{tpu_custom_call.1} parent=5 // pred_check_branch
        %1746 = sbr.rel (%p1744) target = $region108
      $region107: #{tpu_custom_call.1} parent=5 // pred_region
        %s1747 = ssub.s32 %s28, 2
        // Predicated region
        $region109: #{tpu_custom_call.1} parent=107 // pred_check
          %p1748 = pneg %p433
        $region110: #{tpu_custom_call.1} parent=107 // pred_check_branch
          %1750 = sbr.rel (%p1748) target = $region112
        $region111: #{tpu_custom_call.1} parent=107 // pred_region
          %s1751 = sand.u32 %s418, 1
          %s1752 = scalar_lea.sflag [#allocation6], %s1751
          %s1753 = sand.u32 %s418, 1
          %s1754 = smul.addr %s1753, 8
          %s1755 = scalar_lea.vmem [#allocation9], %s1754
          %1757 = dma.done %s1752, 128
        $region112: #{tpu_custom_call.1} parent=107 // pred_fallthru
          _
      $region108: #{tpu_custom_call.1} parent=5 // pred_fallthru
        _
    $region6: #{tpu_custom_call.1} parent=1 // loop_footer
      %s32 = sadd.s32 1, %s28
    $region7: #{tpu_custom_call.1} parent=1 // loop_footer_branch
      %27 = sbr.rel target = $region3
    $region8: #{tpu_custom_call.1} parent=1 // loop_exit
      _
    %1758 = vsyncpa [#allocation5], 1
    %s1759 = scalar_lea.sflag [#allocation5], 1
    %1760 = vsyncpa %s1759, 1
    %1761 = vsyncpa [#allocation8], 1
    %1762 = vsyncpa [#allocation6], 1
    %s1763 = scalar_lea.sflag [#allocation6], 1
    %1764 = vsyncpa %s1763, 1

// kernel: tpu_custom_call.1
$region0: #{tpu_custom_call.1}
  #allocation0 [shape = 'u32[]', space=smem, size = 0x4, offset = 0x4, fixed_abs, tag = 'smem constant byte address 0x4 - core index']
  #allocation1 [shape = 'u32[72,128]{1,0:T(1,128)}', space=vmem, size = 0x9000, scoped, tag = 'internal scratch']
  #allocation2 [shape = 'bf16[8,32]{1,0:T(8,128)(2,1)}', space=vmem, size = 0x800, scoped, tag = 'scratch operand']
  #allocation3 [shape = 'bf16[8,32]{1,0:T(8,128)(2,1)}', space=vmem, size = 0x800, scoped, tag = 'scratch operand']
  %s0 = inlined_call_operand.vmem [shape: f32[2,8,32], index: 0, kind: input, shape index: {}]
  %s1 = inlined_call_operand.hbm [shape: f32[1,32], index: 1, kind: input, shape index: {}]
  %s2 = inlined_call_operand.vmem [shape: f32[1,32], index: 2, kind: input, shape index: {}]
  %s3 = inlined_call_operand.vmem [shape: bf16[32,32], index: 3, kind: input, shape index: {}]
  %s4 = inlined_call_operand.vmem [shape: bf16[32,32], index: 4, kind: input, shape index: {}]
  %s5 = inlined_call_operand.vmem [shape: bf16[32,32], index: 5, kind: input, shape index: {}]
  %s6 = inlined_call_operand.vmem [shape: f32[1,32], index: 6, kind: input, shape index: {}]
  %s7 = inlined_call_operand.vmem [shape: f32[1,32], index: 7, kind: input, shape index: {}]
  %s8 = inlined_call_operand.vmem [shape: f32[1,32], index: 8, kind: input, shape index: {}]
  %s9 = inlined_call_operand.vmem [shape: bf16[32,32], index: 9, kind: input, shape index: {}]
  %s10 = inlined_call_operand.vmem [shape: f32[1,32], index: 10, kind: input, shape index: {}]
  %s11 = inlined_call_operand.vmem [shape: f32[1,32], index: 11, kind: input, shape index: {}]
  %s12 = inlined_call_operand.vmem [shape: f32[1,32], index: 12, kind: input, shape index: {}]
  %s13 = inlined_call_operand.hbm [shape: bf16[32,128], index: 13, kind: input, shape index: {}]
  %s14 = inlined_call_operand.vmem [shape: f32[1,128], index: 14, kind: input, shape index: {}]
  %s15 = inlined_call_operand.vmem [shape: bf16[128,32], index: 15, kind: input, shape index: {}]
  %s16 = inlined_call_operand.vmem [shape: f32[1,32], index: 16, kind: input, shape index: {}]
  %s17 = inlined_call_operand.hbm [shape: f32[2,8,32], index: 17, kind: output, shape index: {}]
  %s18 = sld [smem:[#allocation0]]
  $region113: #{tpu_custom_call.1} parent=0
    _
  %s20 = ssub.s32 1, %s18
  %s21 = scalar_select 0, %s20, %s18
  $region1: #{tpu_custom_call.1} parent=0
    #allocation4 [shape = 'u8[512]{0}', space=vmem, size = 0x400, scoped, tag = 'input window, operand 1, single buffered']
    #allocation5 [shape = 's32[2]{0}', space=sflag, size = 0x8, scoped, tag = 'scoped memory for tpu_custom_call.1']
    #allocation6 [shape = 's32[2]{0}', space=sflag, size = 0x8, scoped, tag = 'scoped memory for tpu_custom_call.1']
    #allocation7 [shape = 'u8[8192]{0}', space=vmem, size = 0x2000, scoped, tag = 'input window, operand 13, single buffered']
    #allocation8 [shape = 's32[1]{0}', space=sflag, size = 0x4, scoped, tag = 'scoped memory for tpu_custom_call.1']
    #allocation9 [shape = 'u8[8192]{0}', space=vmem, size = 0x2000, scoped, tag = 'output window, operand 0']
    %22 = vsyncpa [#allocation5], 0
    %23 = vsyncpa [#allocation8], 0
    %24 = vsyncpa [#allocation6], 0
    %s25 = scalar_lea.sflag [#allocation6], 1
    %26 = vsyncpa %s25, 0
    loop: start=0, step=1, limit=4
    $region2: #{tpu_custom_call.1} parent=1 // loop_pre_header
      _
    $region3: #{tpu_custom_call.1} parent=1 // loop_header
      %s28 = sphi 0, %s32
      %p29 = scmp.ge.s32.totalorder %s28, 4
      %s35 = sphi 0, %s47
      %s36 = sphi 0, %s43
      %s37 = sphi 0, %s35
      %s38 = sphi 0, %s36
      %s39 = sphi 0, %s37
      %s40 = sphi 0, %s38
      %s50 = sphi 0, %s52
      %s53 = sphi 0, %s50
      %s54 = sphi 0, %s53
      %s70 = sphi 0, %s54
      %s74 = sphi 0, %s74
      %s76 = sphi 0, %s74
      %s77 = sphi 0, %s76
      %s91 = sphi 0, %s77
      %s95 = sphi 0, %s95
      %s97 = sphi 0, %s95
      %s98 = sphi 0, %s97
      %s112 = sphi 0, %s98
      %s116 = sphi 0, %s116
      %s118 = sphi 0, %s116
      %s119 = sphi 0, %s118
      %s133 = sphi 0, %s119
      %s137 = sphi 0, %s137
      %s139 = sphi 0, %s137
      %s140 = sphi 0, %s139
      %s154 = sphi 0, %s140
      %s158 = sphi 0, %s158
      %s160 = sphi 0, %s158
      %s161 = sphi 0, %s160
      %s175 = sphi 0, %s161
      %s179 = sphi 0, %s179
      %s181 = sphi 0, %s179
      %s182 = sphi 0, %s181
      %s196 = sphi 0, %s182
      %s200 = sphi 0, %s200
      %s202 = sphi 0, %s200
      %s203 = sphi 0, %s202
      %s217 = sphi 0, %s203
      %s221 = sphi 0, %s221
      %s223 = sphi 0, %s221
      %s224 = sphi 0, %s223
      %s238 = sphi 0, %s224
      %s242 = sphi 0, %s242
      %s244 = sphi 0, %s242
      %s245 = sphi 0, %s244
      %s259 = sphi 0, %s245
      %s263 = sphi 0, %s263
      %s265 = sphi 0, %s263
      %s266 = sphi 0, %s265
      %s280 = sphi 0, %s266
      %s284 = sphi 0, %s284
      %s286 = sphi 0, %s284
      %s287 = sphi 0, %s286
      %s301 = sphi 0, %s287
      %s305 = sphi 0, %s305
      %s307 = sphi 0, %s305
      %s308 = sphi 0, %s307
      %s322 = sphi 0, %s308
      %s326 = sphi 0, %s326
      %s328 = sphi 0, %s326
      %s329 = sphi 0, %s328
      %s343 = sphi 0, %s329
      %s347 = sphi 0, %s347
      %s349 = sphi 0, %s347
      %s350 = sphi 0, %s349
      %s364 = sphi 0, %s350
      %s368 = sphi 0, %s368
      %s370 = sphi 0, %s368
      %s371 = sphi 0, %s370
      %s385 = sphi 0, %s371
      %s389 = sphi 0, %s389
      %s391 = sphi 0, %s389
      %s392 = sphi 0, %s391
      %s406 = sphi 0, %s392
      %s414 = sphi 0, %s416
      %s417 = sphi 0, %s414
      %s418 = sphi 0, %s417
      %s434 = sphi 0, %s418
    $region4: #{tpu_custom_call.1} parent=1 // loop_header_branch
      %31 = sbr.rel (%p29) target = $region8
    $region5: #{tpu_custom_call.1} parent=1 // loop_body
      %s33 = ssub.s32 %s28, 1
      %s34 = ssub.s32 %s28, 2
      %s41 = sadd.s32 1, %s36
      %p42 = scmp.ge.s32.totalorder %s41, 1
      %s43 = scalar_select %p42, 0, %s41
      %s44 = sadd.s32 1, %s35
      %s45 = scalar_select %p42, %s44, %s35
      %p46 = scmp.ge.s32.totalorder %s45, 2
      %s47 = scalar_select %p46, 0, %s45
      %s48 = ssub.s32 %s35, %s47
      %p49 = scmp.eq.s32.totalorder %s48, 0
      %s51 = sadd.s32 %s50, 1
      %s52 = scalar_select %p49, %s50, %s51
      %p55 = pneg %p49
      %p56 = scmp.eq.s32.totalorder %s28, 1
      %p57 = por %p55, %p56
      %p58 = scmp.ne.s32.totalorder %s50, %s53
      %p59 = scmp.eq.s32.totalorder %s28, 0
      %p60 = por %p58, %p59
      %p61 = scmp.ne.s32.totalorder %s50, %s53
      %p62 = scmp.eq.s32.totalorder %s33, 1
      %p63 = por %p61, %p62
      %p64 = scmp.ne.s32.totalorder %s53, %s54
      %p65 = scmp.eq.s32.totalorder %s33, 0
      %p66 = por %p64, %p65
      %p67 = scmp.ne.s32.totalorder %s53, %s54
      %p68 = scmp.eq.s32.totalorder %s34, 1
      %p69 = por %p67, %p68
      %p71 = scmp.ne.s32.totalorder %s54, %s70
      %p72 = scmp.eq.s32.totalorder %s34, 0
      %p73 = por %p71, %p72
      %s75 = sadd.s32 %s74, 1
      %p78 = scmp.eq.s32.totalorder %s28, 1
      %p79 = scmp.ne.s32.totalorder %s74, %s76
      %p80 = scmp.eq.s32.totalorder %s28, 0
      %p81 = por %p79, %p80
      %p82 = scmp.ne.s32.totalorder %s74, %s76
      %p83 = scmp.eq.s32.totalorder %s33, 1
      %p84 = por %p82, %p83
      %p85 = scmp.ne.s32.totalorder %s76, %s77
      %p86 = scmp.eq.s32.totalorder %s33, 0
      %p87 = por %p85, %p86
      %p88 = scmp.ne.s32.totalorder %s76, %s77
      %p89 = scmp.eq.s32.totalorder %s34, 1
      %p90 = por %p88, %p89
      %p92 = scmp.ne.s32.totalorder %s77, %s91
      %p93 = scmp.eq.s32.totalorder %s34, 0
      %p94 = por %p92, %p93
      %s96 = sadd.s32 %s95, 1
      %p99 = scmp.eq.s32.totalorder %s28, 1
      %p100 = scmp.ne.s32.totalorder %s95, %s97
      %p101 = scmp.eq.s32.totalorder %s28, 0
      %p102 = por %p100, %p101
      %p103 = scmp.ne.s32.totalorder %s95, %s97
      %p104 = scmp.eq.s32.totalorder %s33, 1
      %p105 = por %p103, %p104
      %p106 = scmp.ne.s32.totalorder %s97, %s98
      %p107 = scmp.eq.s32.totalorder %s33, 0
      %p108 = por %p106, %p107
      %p109 = scmp.ne.s32.totalorder %s97, %s98
      %p110 = scmp.eq.s32.totalorder %s34, 1
      %p111 = por %p109, %p110
      %p113 = scmp.ne.s32.totalorder %s98, %s112
      %p114 = scmp.eq.s32.totalorder %s34, 0
      %p115 = por %p113, %p114
      %s117 = sadd.s32 %s116, 1
      %p120 = scmp.eq.s32.totalorder %s28, 1
      %p121 = scmp.ne.s32.totalorder %s116, %s118
      %p122 = scmp.eq.s32.totalorder %s28, 0
      %p123 = por %p121, %p122
      %p124 = scmp.ne.s32.totalorder %s116, %s118
      %p125 = scmp.eq.s32.totalorder %s33, 1
      %p126 = por %p124, %p125
      %p127 = scmp.ne.s32.totalorder %s118, %s119
      %p128 = scmp.eq.s32.totalorder %s33, 0
      %p129 = por %p127, %p128
      %p130 = scmp.ne.s32.totalorder %s118, %s119
      %p131 = scmp.eq.s32.totalorder %s34, 1
      %p132 = por %p130, %p131
      %p134 = scmp.ne.s32.totalorder %s119, %s133
      %p135 = scmp.eq.s32.totalorder %s34, 0
      %p136 = por %p134, %p135
      %s138 = sadd.s32 %s137, 1
      %p141 = scmp.eq.s32.totalorder %s28, 1
      %p142 = scmp.ne.s32.totalorder %s137, %s139
      %p143 = scmp.eq.s32.totalorder %s28, 0
      %p144 = por %p142, %p143
      %p145 = scmp.ne.s32.totalorder %s137, %s139
      %p146 = scmp.eq.s32.totalorder %s33, 1
      %p147 = por %p145, %p146
      %p148 = scmp.ne.s32.totalorder %s139, %s140
      %p149 = scmp.eq.s32.totalorder %s33, 0
      %p150 = por %p148, %p149
      %p151 = scmp.ne.s32.totalorder %s139, %s140
      %p152 = scmp.eq.s32.totalorder %s34, 1
      %p153 = por %p151, %p152
      %p155 = scmp.ne.s32.totalorder %s140, %s154
      %p156 = scmp.eq.s32.totalorder %s34, 0
      %p157 = por %p155, %p156
      %s159 = sadd.s32 %s158, 1
      %p162 = scmp.eq.s32.totalorder %s28, 1
      %p163 = scmp.ne.s32.totalorder %s158, %s160
      %p164 = scmp.eq.s32.totalorder %s28, 0
      %p165 = por %p163, %p164
      %p166 = scmp.ne.s32.totalorder %s158, %s160
      %p167 = scmp.eq.s32.totalorder %s33, 1
      %p168 = por %p166, %p167
      %p169 = scmp.ne.s32.totalorder %s160, %s161
      %p170 = scmp.eq.s32.totalorder %s33, 0
      %p171 = por %p169, %p170
      %p172 = scmp.ne.s32.totalorder %s160, %s161
      %p173 = scmp.eq.s32.totalorder %s34, 1
      %p174 = por %p172, %p173
      %p176 = scmp.ne.s32.totalorder %s161, %s175
      %p177 = scmp.eq.s32.totalorder %s34, 0
      %p178 = por %p176, %p177
      %s180 = sadd.s32 %s179, 1
      %p183 = scmp.eq.s32.totalorder %s28, 1
      %p184 = scmp.ne.s32.totalorder %s179, %s181
      %p185 = scmp.eq.s32.totalorder %s28, 0
      %p186 = por %p184, %p185
      %p187 = scmp.ne.s32.totalorder %s179, %s181
      %p188 = scmp.eq.s32.totalorder %s33, 1
      %p189 = por %p187, %p188
      %p190 = scmp.ne.s32.totalorder %s181, %s182
      %p191 = scmp.eq.s32.totalorder %s33, 0
      %p192 = por %p190, %p191
      %p193 = scmp.ne.s32.totalorder %s181, %s182
      %p194 = scmp.eq.s32.totalorder %s34, 1
      %p195 = por %p193, %p194
      %p197 = scmp.ne.s32.totalorder %s182, %s196
      %p198 = scmp.eq.s32.totalorder %s34, 0
      %p199 = por %p197, %p198
      %s201 = sadd.s32 %s200, 1
      %p204 = scmp.eq.s32.totalorder %s28, 1
      %p205 = scmp.ne.s32.totalorder %s200, %s202
      %p206 = scmp.eq.s32.totalorder %s28, 0
      %p207 = por %p205, %p206
      %p208 = scmp.ne.s32.totalorder %s200, %s202
      %p209 = scmp.eq.s32.totalorder %s33, 1
      %p210 = por %p208, %p209
      %p211 = scmp.ne.s32.totalorder %s202, %s203
      %p212 = scmp.eq.s32.totalorder %s33, 0
      %p213 = por %p211, %p212
      %p214 = scmp.ne.s32.totalorder %s202, %s203
      %p215 = scmp.eq.s32.totalorder %s34, 1
      %p216 = por %p214, %p215
      %p218 = scmp.ne.s32.totalorder %s203, %s217
      %p219 = scmp.eq.s32.totalorder %s34, 0
      %p220 = por %p218, %p219
      %s222 = sadd.s32 %s221, 1
      %p225 = scmp.eq.s32.totalorder %s28, 1
      %p226 = scmp.ne.s32.totalorder %s221, %s223
      %p227 = scmp.eq.s32.totalorder %s28, 0
      %p228 = por %p226, %p227
      %p229 = scmp.ne.s32.totalorder %s221, %s223
      %p230 = scmp.eq.s32.totalorder %s33, 1
      %p231 = por %p229, %p230
      %p232 = scmp.ne.s32.totalorder %s223, %s224
      %p233 = scmp.eq.s32.totalorder %s33, 0
      %p234 = por %p232, %p233
      %p235 = scmp.ne.s32.totalorder %s223, %s224
      %p236 = scmp.eq.s32.totalorder %s34, 1
      %p237 = por %p235, %p236
      %p239 = scmp.ne.s32.totalorder %s224, %s238
      %p240 = scmp.eq.s32.totalorder %s34, 0
      %p241 = por %p239, %p240
      %s243 = sadd.s32 %s242, 1
      %p246 = scmp.eq.s32.totalorder %s28, 1
      %p247 = scmp.ne.s32.totalorder %s242, %s244
      %p248 = scmp.eq.s32.totalorder %s28, 0
      %p249 = por %p247, %p248
      %p250 = scmp.ne.s32.totalorder %s242, %s244
      %p251 = scmp.eq.s32.totalorder %s33, 1
      %p252 = por %p250, %p251
      %p253 = scmp.ne.s32.totalorder %s244, %s245
      %p254 = scmp.eq.s32.totalorder %s33, 0
      %p255 = por %p253, %p254
      %p256 = scmp.ne.s32.totalorder %s244, %s245
      %p257 = scmp.eq.s32.totalorder %s34, 1
      %p258 = por %p256, %p257
      %p260 = scmp.ne.s32.totalorder %s245, %s259
      %p261 = scmp.eq.s32.totalorder %s34, 0
      %p262 = por %p260, %p261
      %s264 = sadd.s32 %s263, 1
      %p267 = scmp.eq.s32.totalorder %s28, 1
      %p268 = scmp.ne.s32.totalorder %s263, %s265
      %p269 = scmp.eq.s32.totalorder %s28, 0
      %p270 = por %p268, %p269
      %p271 = scmp.ne.s32.totalorder %s263, %s265
      %p272 = scmp.eq.s32.totalorder %s33, 1
      %p273 = por %p271, %p272
      %p274 = scmp.ne.s32.totalorder %s265, %s266
      %p275 = scmp.eq.s32.totalorder %s33, 0
      %p276 = por %p274, %p275
      %p277 = scmp.ne.s32.totalorder %s265, %s266
      %p278 = scmp.eq.s32.totalorder %s34, 1
      %p279 = por %p277, %p278
      %p281 = scmp.ne.s32.totalorder %s266, %s280
      %p282 = scmp.eq.s32.totalorder %s34, 0
      %p283 = por %p281, %p282
      %s285 = sadd.s32 %s284, 1
      %p288 = scmp.eq.s32.totalorder %s28, 1
      %p289 = scmp.ne.s32.totalorder %s284, %s286
      %p290 = scmp.eq.s32.totalorder %s28, 0
      %p291 = por %p289, %p290
      %p292 = scmp.ne.s32.totalorder %s284, %s286
      %p293 = scmp.eq.s32.totalorder %s33, 1
      %p294 = por %p292, %p293
      %p295 = scmp.ne.s32.totalorder %s286, %s287
      %p296 = scmp.eq.s32.totalorder %s33, 0
      %p297 = por %p295, %p296
      %p298 = scmp.ne.s32.totalorder %s286, %s287
      %p299 = scmp.eq.s32.totalorder %s34, 1
      %p300 = por %p298, %p299
      %p302 = scmp.ne.s32.totalorder %s287, %s301
      %p303 = scmp.eq.s32.totalorder %s34, 0
      %p304 = por %p302, %p303
      %s306 = sadd.s32 %s305, 1
      %p309 = scmp.eq.s32.totalorder %s28, 1
      %p310 = scmp.ne.s32.totalorder %s305, %s307
      %p311 = scmp.eq.s32.totalorder %s28, 0
      %p312 = por %p310, %p311
      %p313 = scmp.ne.s32.totalorder %s305, %s307
      %p314 = scmp.eq.s32.totalorder %s33, 1
      %p315 = por %p313, %p314
      %p316 = scmp.ne.s32.totalorder %s307, %s308
      %p317 = scmp.eq.s32.totalorder %s33, 0
      %p318 = por %p316, %p317
      %p319 = scmp.ne.s32.totalorder %s307, %s308
      %p320 = scmp.eq.s32.totalorder %s34, 1
      %p321 = por %p319, %p320
      %p323 = scmp.ne.s32.totalorder %s308, %s322
      %p324 = scmp.eq.s32.totalorder %s34, 0
      %p325 = por %p323, %p324
      %s327 = sadd.s32 %s326, 1
      %p330 = scmp.eq.s32.totalorder %s28, 1
      %p331 = scmp.ne.s32.totalorder %s326, %s328
      %p332 = scmp.eq.s32.totalorder %s28, 0
      %p333 = por %p331, %p332
      %p334 = scmp.ne.s32.totalorder %s326, %s328
      %p335 = scmp.eq.s32.totalorder %s33, 1
      %p336 = por %p334, %p335
      %p337 = scmp.ne.s32.totalorder %s328, %s329
      %p338 = scmp.eq.s32.totalorder %s33, 0
      %p339 = por %p337, %p338
      %p340 = scmp.ne.s32.totalorder %s328, %s329
      %p341 = scmp.eq.s32.totalorder %s34, 1
      %p342 = por %p340, %p341
      %p344 = scmp.ne.s32.totalorder %s329, %s343
      %p345 = scmp.eq.s32.totalorder %s34, 0
      %p346 = por %p344, %p345
      %s348 = sadd.s32 %s347, 1
      %p351 = scmp.eq.s32.totalorder %s28, 1
      %p352 = scmp.ne.s32.totalorder %s347, %s349
      %p353 = scmp.eq.s32.totalorder %s28, 0
      %p354 = por %p352, %p353
      %p355 = scmp.ne.s32.totalorder %s347, %s349
      %p356 = scmp.eq.s32.totalorder %s33, 1
      %p357 = por %p355, %p356
      %p358 = scmp.ne.s32.totalorder %s349, %s350
      %p359 = scmp.eq.s32.totalorder %s33, 0
      %p360 = por %p358, %p359
      %p361 = scmp.ne.s32.totalorder %s349, %s350
      %p362 = scmp.eq.s32.totalorder %s34, 1
      %p363 = por %p361, %p362
      %p365 = scmp.ne.s32.totalorder %s350, %s364
      %p366 = scmp.eq.s32.totalorder %s34, 0
      %p367 = por %p365, %p366
      %s369 = sadd.s32 %s368, 1
      %p372 = scmp.eq.s32.totalorder %s28, 1
      %p373 = scmp.ne.s32.totalorder %s368, %s370
      %p374 = scmp.eq.s32.totalorder %s28, 0
      %p375 = por %p373, %p374
      %p376 = scmp.ne.s32.totalorder %s368, %s370
      %p377 = scmp.eq.s32.totalorder %s33, 1
      %p378 = por %p376, %p377
      %p379 = scmp.ne.s32.totalorder %s370, %s371
      %p380 = scmp.eq.s32.totalorder %s33, 0
      %p381 = por %p379, %p380
      %p382 = scmp.ne.s32.totalorder %s370, %s371
      %p383 = scmp.eq.s32.totalorder %s34, 1
      %p384 = por %p382, %p383
      %p386 = scmp.ne.s32.totalorder %s371, %s385
      %p387 = scmp.eq.s32.totalorder %s34, 0
      %p388 = por %p386, %p387
      %s390 = sadd.s32 %s389, 1
      %p393 = scmp.eq.s32.totalorder %s28, 1
      %p394 = scmp.ne.s32.totalorder %s389, %s391
      %p395 = scmp.eq.s32.totalorder %s28, 0
      %p396 = por %p394, %p395
      %p397 = scmp.ne.s32.totalorder %s389, %s391
      %p398 = scmp.eq.s32.totalorder %s33, 1
      %p399 = por %p397, %p398
      %p400 = scmp.ne.s32.totalorder %s391, %s392
      %p401 = scmp.eq.s32.totalorder %s33, 0
      %p402 = por %p400, %p401
      %p403 = scmp.ne.s32.totalorder %s391, %s392
      %p404 = scmp.eq.s32.totalorder %s34, 1
      %p405 = por %p403, %p404
      %p407 = scmp.ne.s32.totalorder %s392, %s406
      %p408 = scmp.eq.s32.totalorder %s34, 0
      %p409 = por %p407, %p408
      %s410 = ssub.s32 %s35, %s47
      %s411 = ssub.s32 %s36, %s43
      %s412 = sor.u32 %s410, %s411
      %p413 = scmp.eq.s32.totalorder %s412, 0
      %s415 = sadd.s32 %s414, 1
      %s416 = scalar_select %p413, %s414, %s415
      %p419 = pneg %p413
      %p420 = scmp.eq.s32.totalorder %s28, 1
      %p421 = por %p419, %p420
      %p422 = scmp.ne.s32.totalorder %s414, %s417
      %p423 = scmp.eq.s32.totalorder %s28, 0
      %p424 = por %p422, %p423
      %p425 = scmp.ne.s32.totalorder %s414, %s417
      %p426 = scmp.eq.s32.totalorder %s33, 1
      %p427 = por %p425, %p426
      %p428 = scmp.ne.s32.totalorder %s417, %s418
      %p429 = scmp.eq.s32.totalorder %s33, 0
      %p430 = por %p428, %p429
      %p431 = scmp.ne.s32.totalorder %s417, %s418
      %p432 = scmp.eq.s32.totalorder %s34, 1
      %p433 = por %p431, %p432
      %p435 = scmp.ne.s32.totalorder %s418, %s434
      %p436 = scmp.eq.s32.totalorder %s34, 0
      %p437 = por %p435, %p436
      %p438 = scmp.le.s32.totalorder 1, %s28
      %p439 = scmp.lt.s32.totalorder %s28, 3
      %p440 = pnand %p438, %p439
      %p441 = pneg %p440
      // Predicated region
      $region9: #{tpu_custom_call.1} parent=5 // pred_check
        _
      $region10: #{tpu_custom_call.1} parent=5 // pred_check_branch
        %443 = sbr.rel (%p440) target = $region12
      $region11: #{tpu_custom_call.1} parent=5 // pred_region
        %s444 = ssub.s32 %s28, 1
        // Predicated region
        $region13: #{tpu_custom_call.1} parent=11 // pred_check
          %p445 = pneg %p87
        $region14: #{tpu_custom_call.1} parent=11 // pred_check_branch
          %447 = sbr.rel (%p445) target = $region16
        $region15: #{tpu_custom_call.1} parent=11 // pred_region
          %449 = vsyncadd [#allocation5], 0
          %s451 = sshll.u32 %s1, 4
          %s452 = int_to_ptr.hbm [resolvable:$true] %s451
          %s453 = sshll.u32 [#allocation4], 4
          %s454 = int_to_ptr.vmem [resolvable:$true] %s453
          %456 = dma.hbm_to_vmem [thread:$0]  %s452, 16, %s454, [#allocation5]
        $region16: #{tpu_custom_call.1} parent=11 // pred_fallthru
          _
        // Predicated region
        $region17: #{tpu_custom_call.1} parent=11 // pred_check
          %p457 = pneg %p108
        $region18: #{tpu_custom_call.1} parent=11 // pred_check_branch
          %459 = sbr.rel (%p457) target = $region20
        $region19: #{tpu_custom_call.1} parent=11 // pred_region
          _
        $region20: #{tpu_custom_call.1} parent=11 // pred_fallthru
          _
        // Predicated region
        $region21: #{tpu_custom_call.1} parent=11 // pred_check
          %p460 = pneg %p129
        $region22: #{tpu_custom_call.1} parent=11 // pred_check_branch
          %462 = sbr.rel (%p460) target = $region24
        $region23: #{tpu_custom_call.1} parent=11 // pred_region
          _
        $region24: #{tpu_custom_call.1} parent=11 // pred_fallthru
          _
        // Predicated region
        $region25: #{tpu_custom_call.1} parent=11 // pred_check
          %p463 = pneg %p150
        $region26: #{tpu_custom_call.1} parent=11 // pred_check_branch
          %465 = sbr.rel (%p463) target = $region28
        $region27: #{tpu_custom_call.1} parent=11 // pred_region
          _
        $region28: #{tpu_custom_call.1} parent=11 // pred_fallthru
          _
        // Predicated region
        $region29: #{tpu_custom_call.1} parent=11 // pred_check
          %p466 = pneg %p171
        $region30: #{tpu_custom_call.1} parent=11 // pred_check_branch
          %468 = sbr.rel (%p466) target = $region32
        $region31: #{tpu_custom_call.1} parent=11 // pred_region
          _
        $region32: #{tpu_custom_call.1} parent=11 // pred_fallthru
          _
        // Predicated region
        $region33: #{tpu_custom_call.1} parent=11 // pred_check
          %p469 = pneg %p192
        $region34: #{tpu_custom_call.1} parent=11 // pred_check_branch
          %471 = sbr.rel (%p469) target = $region36
        $region35: #{tpu_custom_call.1} parent=11 // pred_region
          _
        $region36: #{tpu_custom_call.1} parent=11 // pred_fallthru
          _
        // Predicated region
        $region37: #{tpu_custom_call.1} parent=11 // pred_check
          %p472 = pneg %p213
        $region38: #{tpu_custom_call.1} parent=11 // pred_check_branch
          %474 = sbr.rel (%p472) target = $region40
        $region39: #{tpu_custom_call.1} parent=11 // pred_region
          _
        $region40: #{tpu_custom_call.1} parent=11 // pred_fallthru
          _
        // Predicated region
        $region41: #{tpu_custom_call.1} parent=11 // pred_check
          %p475 = pneg %p234
        $region42: #{tpu_custom_call.1} parent=11 // pred_check_branch
          %477 = sbr.rel (%p475) target = $region44
        $region43: #{tpu_custom_call.1} parent=11 // pred_region
          _
        $region44: #{tpu_custom_call.1} parent=11 // pred_fallthru
          _
        // Predicated region
        $region45: #{tpu_custom_call.1} parent=11 // pred_check
          %p478 = pneg %p255
        $region46: #{tpu_custom_call.1} parent=11 // pred_check_branch
          %480 = sbr.rel (%p478) target = $region48
        $region47: #{tpu_custom_call.1} parent=11 // pred_region
          _
        $region48: #{tpu_custom_call.1} parent=11 // pred_fallthru
          _
        // Predicated region
        $region49: #{tpu_custom_call.1} parent=11 // pred_check
          %p481 = pneg %p276
        $region50: #{tpu_custom_call.1} parent=11 // pred_check_branch
          %483 = sbr.rel (%p481) target = $region52
        $region51: #{tpu_custom_call.1} parent=11 // pred_region
          _
        $region52: #{tpu_custom_call.1} parent=11 // pred_fallthru
          _
        // Predicated region
        $region53: #{tpu_custom_call.1} parent=11 // pred_check
          %p484 = pneg %p297
        $region54: #{tpu_custom_call.1} parent=11 // pred_check_branch
          %486 = sbr.rel (%p484) target = $region56
        $region55: #{tpu_custom_call.1} parent=11 // pred_region
          _
        $region56: #{tpu_custom_call.1} parent=11 // pred_fallthru
          _
        // Predicated region
        $region57: #{tpu_custom_call.1} parent=11 // pred_check
          %p487 = pneg %p318
        $region58: #{tpu_custom_call.1} parent=11 // pred_check_branch
          %489 = sbr.rel (%p487) target = $region60
        $region59: #{tpu_custom_call.1} parent=11 // pred_region
          _
        $region60: #{tpu_custom_call.1} parent=11 // pred_fallthru
          _
        // Predicated region
        $region61: #{tpu_custom_call.1} parent=11 // pred_check
          %p490 = pneg %p339
        $region62: #{tpu_custom_call.1} parent=11 // pred_check_branch
          %492 = sbr.rel (%p490) target = $region64
        $region63: #{tpu_custom_call.1} parent=11 // pred_region
          %494 = vsyncadd [#allocation8], 0
          %s495 = sshll.u32 %s13, 4
          %s496 = int_to_ptr.hbm [resolvable:$true] %s495
          %s497 = sshll.u32 [#allocation7], 4
          %s498 = int_to_ptr.vmem [resolvable:$true] %s497
          %503 = dma.hbm_to_vmem [thread:$0]  %s496, 256, %s498, [#allocation8], 64, 64, 4
        $region64: #{tpu_custom_call.1} parent=11 // pred_fallthru
          _
        // Predicated region
        $region65: #{tpu_custom_call.1} parent=11 // pred_check
          %p504 = pneg %p360
        $region66: #{tpu_custom_call.1} parent=11 // pred_check_branch
          %506 = sbr.rel (%p504) target = $region68
        $region67: #{tpu_custom_call.1} parent=11 // pred_region
          _
        $region68: #{tpu_custom_call.1} parent=11 // pred_fallthru
          _
        // Predicated region
        $region69: #{tpu_custom_call.1} parent=11 // pred_check
          %p507 = pneg %p381
        $region70: #{tpu_custom_call.1} parent=11 // pred_check_branch
          %509 = sbr.rel (%p507) target = $region72
        $region71: #{tpu_custom_call.1} parent=11 // pred_region
          _
        $region72: #{tpu_custom_call.1} parent=11 // pred_fallthru
          _
        // Predicated region
        $region73: #{tpu_custom_call.1} parent=11 // pred_check
          %p510 = pneg %p402
        $region74: #{tpu_custom_call.1} parent=11 // pred_check_branch
          %512 = sbr.rel (%p510) target = $region76
        $region75: #{tpu_custom_call.1} parent=11 // pred_region
          _
        $region76: #{tpu_custom_call.1} parent=11 // pred_fallthru
          _
      $region12: #{tpu_custom_call.1} parent=5 // pred_fallthru
        _
      %p513 = scmp.lt.s32.totalorder %s28, 2
      // Predicated region
      $region77: #{tpu_custom_call.1} parent=5 // pred_check
        %p514 = pneg %p513
      $region78: #{tpu_custom_call.1} parent=5 // pred_check_branch
        %516 = sbr.rel (%p514) target = $region80
      $region79: #{tpu_custom_call.1} parent=5 // pred_region
        // Predicated region
        $region81: #{tpu_custom_call.1} parent=79 // pred_check
          %p517 = pneg %p60
        $region82: #{tpu_custom_call.1} parent=79 // pred_check_branch
          %519 = sbr.rel (%p517) target = $region84
        $region83: #{tpu_custom_call.1} parent=79 // pred_region
          %p520 = scmp.lt.s32.totalorder %s35, 1
          %s521 = scalar_select %p520, %s35, 1
          %s522 = smul.addr %s521, 8
          %s523 = scalar_lea.vmem %s0, %s522
        $region84: #{tpu_custom_call.1} parent=79 // pred_fallthru
          _
      $region80: #{tpu_custom_call.1} parent=5 // pred_fallthru
        _
      %p524 = scmp.le.s32.totalorder 1, %s28
      %p525 = scmp.lt.s32.totalorder %s28, 3
      %p526 = pnand %p524, %p525
      %p527 = pneg %p526
      // Predicated region
      $region85: #{tpu_custom_call.1} parent=5 // pred_check
        _
      $region86: #{tpu_custom_call.1} parent=5 // pred_check_branch
        %529 = sbr.rel (%p526) target = $region88
      $region87: #{tpu_custom_call.1} parent=5 // pred_region
        %s530 = ssub.s32 %s28, 1
        // Predicated region
        $region89: #{tpu_custom_call.1} parent=87 // pred_check
          %p531 = pneg %p87
        $region90: #{tpu_custom_call.1} parent=87 // pred_check_branch
          %533 = sbr.rel (%p531) target = $region92
        $region91: #{tpu_custom_call.1} parent=87 // pred_region
          %535 = dma.done [#allocation5], 16
        $region92: #{tpu_custom_call.1} parent=87 // pred_fallthru
          _
        // Predicated region
        $region93: #{tpu_custom_call.1} parent=87 // pred_check
          %p536 = pneg %p339
        $region94: #{tpu_custom_call.1} parent=87 // pred_check_branch
          %538 = sbr.rel (%p536) target = $region96
        $region95: #{tpu_custom_call.1} parent=87 // pred_region
          %540 = dma.done [#allocation8], 256
        $region96: #{tpu_custom_call.1} parent=87 // pred_fallthru
          _
        %p541 = scmp.lt.s32.totalorder %s37, 1
        %s542 = scalar_select %p541, %s37, 1
        %s543 = smul.addr %s542, 8
        %s544 = scalar_lea.vmem %s0, %s543
        %p545 = pneg %p66
        %p546 = pneg %p63
        %p547 = pneg %p87
        %p548 = pneg %p84
        %p549 = pneg %p108
        %p550 = pneg %p105
        %p551 = pneg %p129
        %p552 = pneg %p126
        %p553 = pneg %p150
        %p554 = pneg %p147
        %p555 = pneg %p171
        %p556 = pneg %p168
        %p557 = pneg %p192
        %p558 = pneg %p189
        %p559 = pneg %p213
        %p560 = pneg %p210
        %p561 = pneg %p234
        %p562 = pneg %p231
        %p563 = pneg %p255
        %p564 = pneg %p252
        %p565 = pneg %p276
        %p566 = pneg %p273
        %p567 = pneg %p297
        %p568 = pneg %p294
        %p569 = pneg %p318
        %p570 = pneg %p315
        %p571 = pneg %p339
        %p572 = pneg %p336
        %p573 = pneg %p360
        %p574 = pneg %p357
        %p575 = pneg %p381
        %p576 = pneg %p378
        %p577 = pneg %p402
        %p578 = pneg %p399
        %p579 = pneg %p430
        %p580 = pneg %p427
        %s581 = sand.u32 %s417, 1
        %s582 = scalar_lea.sflag [#allocation6], %s581
        %s583 = sand.u32 %s417, 1
        %s584 = smul.addr %s583, 8
        %s585 = scalar_lea.vmem [#allocation9], %s584
        %p586 = scmp.lt.s32.totalorder %s37, 1
        %s587 = scalar_select %p586, %s37, 1
        %s588 = smul.addr %s587, 8
        %s589 = scalar_lea.vmem %s0, %s588
        %v591 = vld [vmem:[#allocation4] sm:$0x1]
        %v592 = vld [vmem:[%s2] sm:$0x1]
        %p593 = scmp.eq.s32.totalorder %s38, 0
        // Predicated region
        $region97: #{tpu_custom_call.1} parent=87 // pred_check
          %p594 = pneg %p593
        $region98: #{tpu_custom_call.1} parent=87 // pred_check_branch
          %596 = sbr.rel (%p594) target = $region100
        $region99: #{tpu_custom_call.1} parent=87 // pred_region
          %v597 = vld [vmem:[%s589] sm:$0xff]
          %vm598 = vcmask 261120
          %v599 = vsel %vm598, %v597, 0.0
          %600 = vadd.xlane.f32.xlu0 %v599
          %v601 = vpop.xlane.xlu0 %600
          %v602 = vrcp.pop 32.0
          %v603 = vmul.f32 32.0, %v602
          %v604 = vsub.f32 1.0, %v603
          %v605 = vmul.f32 %v602, %v604
          %v606 = vadd.f32 %v602, %v605
          %vm607 = vweird.f32 %v602
          %v608 = vsel %vm607, %v602, %v606
          %v609 = vmul.f32 %v601, %v608
          %v610 = vsub.f32 %v597, %v609
          %v611 = vmul.f32 %v610, %v610
          %v612 = vsel %vm598, %v611, 0.0
          %613 = vadd.xlane.f32.xlu0 %v612
          %v614 = vpop.xlane.xlu0 %613
          %v615 = vmul.f32 %v614, %v608
          %v616 = vadd.f32 %v615, 1e-05
          %v617 = vrsqrt.pop %v616
          %v618 = vmul.f32 %v617, %v616
          %v619 = vmul.f32 %v618, %v617
          %v620 = vmul.f32 0.5, %v619
          %v621 = vsub.f32 1.5, %v620
          %v622 = vmul.f32 %v617, %v621
          %vm623 = vweird.f32 %v616
          %vm624 = vweird.f32 %v617
          %vm625 = vmor %vm623, %vm624
          %v626 = vsel %vm625, %v617, %v622
          %v627 = vmul.f32 %v610, %v626
          %v629 = vperm.slane %v591, 0
          %v631 = vmul.f32 %v627, %v629
          %v633 = vperm.slane %v592, 0
          %v635 = vadd.f32 %v631, %v633
          %v636 = vpack.c.bf16 %v635, %v635
          %v637 = vld [vmem:[%s4] sm:$0xf]
          %v638 = vld [vmem:[%s4 + $0x4] sm:$0xf]
          %v639 = vld [vmem:[%s4 + $0x8] sm:$0xf]
          %v640 = vld [vmem:[%s4 + $0xc] sm:$0xf]
          %v641 = vld [vmem:[%s7] sm:$0x1]
          %v643 = vperm.slane %v641, 0
          %v649 = vunpack.c.l.b16 %v637
          %v650 = vunpack.c.l.b16 %v638
          %v651 = vunpack.c.l.b16 %v639
          %v652 = vunpack.c.l.b16 %v640
          %v653 = vpack.c.b16 %v650, %v649
          %v654 = vpack.c.b16 %v652, %v651
          %v658 = vsel %vm598, %v636, 0
          %660 = vmatpush.bf16.msra.mxu0 0
          %661 = vmatpush.bf16.msra.mxu0 0
          %662 = vmatpush.bf16.msra.mxu0 0
          %663 = vmatpush.bf16.msra.mxu0 0
          %664 = vmatpush.bf16.msra.mxu0 0
          %665 = vmatpush.bf16.msra.mxu0 0
          %666 = vmatpush.bf16.msra.mxu0 %v654
          %667 = vmatpush.bf16.msra.mxu0 %v653
          %668 = vmatmul.bf16.gmra.mxu0 %v658
          %v669 = vpop.f32.mrf.mxu0
          %v670 = vadd.f32 %v643, %v669
          %v671 = vpop.f32.mrf.mxu0
          %672 = vdwg.mxu0
          %v673 = vld [vmem:[%s5] sm:$0xf]
          %v674 = vld [vmem:[%s5 + $0x4] sm:$0xf]
          %v675 = vld [vmem:[%s5 + $0x8] sm:$0xf]
          %v676 = vld [vmem:[%s5 + $0xc] sm:$0xf]
          %v677 = vld [vmem:[%s8] sm:$0x1]
          %v679 = vperm.slane %v677, 0
          %v685 = vunpack.c.l.b16 %v673
          %v686 = vunpack.c.l.b16 %v674
          %v687 = vunpack.c.l.b16 %v675
          %v688 = vunpack.c.l.b16 %v676
          %v689 = vpack.c.b16 %v686, %v685
          %v690 = vpack.c.b16 %v688, %v687
          %693 = vmatpush.bf16.msra.mxu0 0
          %694 = vmatpush.bf16.msra.mxu0 0
          %695 = vmatpush.bf16.msra.mxu0 0
          %696 = vmatpush.bf16.msra.mxu0 0
          %697 = vmatpush.bf16.msra.mxu0 0
          %698 = vmatpush.bf16.msra.mxu0 0
          %699 = vmatpush.bf16.msra.mxu0 %v690
          %700 = vmatpush.bf16.msra.mxu0 %v689
          %701 = vmatmul.bf16.gmra.mxu0 %v658
          %v702 = vpop.f32.mrf.mxu0
          %v703 = vadd.f32 %v679, %v702
          %v704 = vpop.f32.mrf.mxu0
          %705 = vdwg.mxu0
          %v706 = vpack.c.bf16 %v670, %v670
          %vm707 = vcmask 257024
          %708 = vst.msk [vmem:[#allocation2] sm:$0xf] %vm707, %v706
          %v709 = vpack.c.bf16 %v703, %v703
          %710 = vst.msk [vmem:[#allocation3] sm:$0xf] %vm707, %v709
        $region100: #{tpu_custom_call.1} parent=87 // pred_fallthru
          _
        %s711 = smul.u32 %s38, 8
        %s712 = scalar_lea.vmem %s589, %s711
        %v713 = vld [vmem:[%s712] sm:$0xff]
        %vm714 = vcmask 261120
        %v715 = vsel %vm714, %v713, 0.0
        %716 = vadd.xlane.f32.xlu0 %v715
        %v717 = vpop.xlane.xlu0 %716
        %v718 = vrcp.pop 32.0
        %v719 = vmul.f32 32.0, %v718
        %v720 = vsub.f32 1.0, %v719
        %v721 = vmul.f32 %v718, %v720
        %v722 = vadd.f32 %v718, %v721
        %vm723 = vweird.f32 %v718
        %v724 = vsel %vm723, %v718, %v722
        %v725 = vmul.f32 %v717, %v724
        %v726 = vsub.f32 %v713, %v725
        %v727 = vmul.f32 %v726, %v726
        %v728 = vsel %vm714, %v727, 0.0
        %729 = vadd.xlane.f32.xlu0 %v728
        %v730 = vpop.xlane.xlu0 %729
        %v731 = vmul.f32 %v730, %v724
        %v732 = vadd.f32 %v731, 1e-05
        %v733 = vrsqrt.pop %v732
        %v734 = vmul.f32 %v733, %v732
        %v735 = vmul.f32 %v734, %v733
        %v736 = vmul.f32 0.5, %v735
        %v737 = vsub.f32 1.5, %v736
        %v738 = vmul.f32 %v733, %v737
        %vm739 = vweird.f32 %v732
        %vm740 = vweird.f32 %v733
        %vm741 = vmor %vm739, %vm740
        %v742 = vsel %vm741, %v733, %v738
        %v743 = vmul.f32 %v726, %v742
        %v745 = vperm.slane %v591, 0
        %v747 = vmul.f32 %v743, %v745
        %v749 = vperm.slane %v592, 0
        %v751 = vadd.f32 %v747, %v749
        %v752 = vpack.c.bf16 %v751, %v751
        %v753 = vld [vmem:[%s3] sm:$0xf]
        %v754 = vld [vmem:[%s3 + $0x4] sm:$0xf]
        %v755 = vld [vmem:[%s3 + $0x8] sm:$0xf]
        %v756 = vld [vmem:[%s3 + $0xc] sm:$0xf]
        %v757 = vld [vmem:[%s6] sm:$0x1]
        %v759 = vperm.slane %v757, 0
        %v765 = vunpack.c.l.b16 %v753
        %v766 = vunpack.c.l.b16 %v754
        %v767 = vunpack.c.l.b16 %v755
        %v768 = vunpack.c.l.b16 %v756
        %v769 = vpack.c.b16 %v766, %v765
        %v770 = vpack.c.b16 %v768, %v767
        %v774 = vsel %vm714, %v752, 0
        %776 = vmatpush.bf16.msra.mxu0 0
        %777 = vmatpush.bf16.msra.mxu0 0
        %778 = vmatpush.bf16.msra.mxu0 0
        %779 = vmatpush.bf16.msra.mxu0 0
        %780 = vmatpush.bf16.msra.mxu0 0
        %781 = vmatpush.bf16.msra.mxu0 0
        %782 = vmatpush.bf16.msra.mxu0 %v770
        %783 = vmatpush.bf16.msra.mxu0 %v769
        %784 = vmatmul.bf16.gmra.mxu0 %v774
        %v785 = vpop.f32.mrf.mxu0
        %v786 = vadd.f32 %v759, %v785
        %v787 = vpop.f32.mrf.mxu0
        %788 = vdwg.mxu0
        %v789 = vmul.f32 %v786, 0.35355338
        %v790 = vpack.c.bf16 %v789, %v789
        %792 = vrot.lane.b32.xlu0 %v790, 120
        %v793 = vpop.permute.xlu0 %792
        %794 = vrot.lane.b32.xlu0 %v790, 112
        %v795 = vpop.permute.xlu0 %794
        %796 = vrot.lane.b32.xlu0 %v790, 104
        %v797 = vpop.permute.xlu0 %796
        %v800 = vpack.i.b16 %v793, %v790
        %v801 = vshrl.u32 %v790, 16
        %v802 = vshrl.u32 %v793, 16
        %v803 = vpack.i.b16 %v802, %v801
        %v806 = vpack.i.b16 %v797, %v795
        %v807 = vshrl.u32 %v795, 16
        %v808 = vshrl.u32 %v797, 16
        %v809 = vpack.i.b16 %v808, %v807
        %v812 = vunpack.c.l.s4 1983009808
        %v813 = vunpack.c.0.s8 %v812
        %v814 = vperm.slane %v800, %v813
        %v817 = vunpack.c.l.s4 1983009808
        %v818 = vunpack.c.0.s8 %v817
        %v819 = vperm.slane %v806, %v818
        %v820 = vrot.slane %v819, 4
        %vm821 = vcmask 1047556
        %v822 = vsel %vm821, %v820, %v814
        %v823 = vrot.slane %v814, 4
        %v824 = vsel %vm821, %v819, %v823
        %v826 = vunpack.c.l.s4 1934713408
        %v827 = vunpack.c.0.s8 %v826
        %v828 = vperm.slane %v822, %v827
        %v830 = vunpack.c.l.s4 1934713408
        %v831 = vunpack.c.0.s8 %v830
        %v832 = vperm.slane %v824, %v831
        %v833 = vrot.slane %v828, 4
        %v834 = vsel %vm821, 0, %v833
        %v835 = vrot.slane %v832, 4
        %v836 = vsel %vm821, 0, %v835
        %v839 = vunpack.c.l.s4 1983009808
        %v840 = vunpack.c.0.s8 %v839
        %v841 = vperm.slane %v803, %v840
        %v844 = vunpack.c.l.s4 1983009808
        %v845 = vunpack.c.0.s8 %v844
        %v846 = vperm.slane %v809, %v845
        %v847 = vrot.slane %v846, 4
        %v848 = vsel %vm821, %v847, %v841
        %v849 = vrot.slane %v841, 4
        %v850 = vsel %vm821, %v846, %v849
        %v852 = vunpack.c.l.s4 1934713408
        %v853 = vunpack.c.0.s8 %v852
        %v854 = vperm.slane %v848, %v853
        %v856 = vunpack.c.l.s4 1934713408
        %v857 = vunpack.c.0.s8 %v856
        %v858 = vperm.slane %v850, %v857
        %v859 = vrot.slane %v854, 4
        %v860 = vsel %vm821, 0, %v859
        %v861 = vrot.slane %v858, 4
        %v862 = vsel %vm821, 0, %v861
        %v863 = vsel %vm821, %v835, %v828
        %v865 = vunpack.c.l.s4 1983009808
        %v866 = vunpack.c.0.s8 %v865
        %v867 = vperm.slane %v863, %v866
        %v868 = vrot.slane %v836, 4
        %v869 = vsel %vm821, %v868, %v834
        %v871 = vunpack.c.l.s4 1983009808
        %v872 = vunpack.c.0.s8 %v871
        %v873 = vperm.slane %v869, %v872
        %v874 = vrot.slane %v873, 4
        %v875 = vsel %vm821, %v874, %v867
        %v877 = vunpack.c.l.s4 1934713408
        %v878 = vunpack.c.0.s8 %v877
        %v879 = vperm.slane %v875, %v878
        %v880 = vrot.slane %v879, 4
        %v881 = vsel %vm821, 0, %v880
        %v882 = vsel %vm821, %v861, %v854
        %v884 = vunpack.c.l.s4 1983009808
        %v885 = vunpack.c.0.s8 %v884
        %v886 = vperm.slane %v882, %v885
        %v887 = vrot.slane %v862, 4
        %v888 = vsel %vm821, %v887, %v860
        %v890 = vunpack.c.l.s4 1983009808
        %v891 = vunpack.c.0.s8 %v890
        %v892 = vperm.slane %v888, %v891
        %v893 = vrot.slane %v892, 4
        %v894 = vsel %vm821, %v893, %v886
        %v896 = vunpack.c.l.s4 1934713408
        %v897 = vunpack.c.0.s8 %v896
        %v898 = vperm.slane %v894, %v897
        %v899 = vrot.slane %v898, 4
        %v900 = vsel %vm821, 0, %v899
        %v903 = vpack.i.b16 %v898, %v879
        %v904 = vshrl.u32 %v879, 16
        %v905 = vshrl.u32 %v898, 16
        %v906 = vpack.i.b16 %v905, %v904
        %v909 = vpack.i.b16 %v900, %v881
        %v910 = vshrl.u32 %v881, 16
        %v911 = vshrl.u32 %v900, 16
        %v912 = vpack.i.b16 %v911, %v910
        %v913 = vld [vmem:[#allocation2] sm:$0xf]
        %v914 = vld [vmem:[#allocation3] sm:$0xf]
        %916 = vrot.lane.b32.xlu0 %v913, 120
        %v917 = vpop.permute.xlu0 %916
        %918 = vrot.lane.b32.xlu0 %v913, 112
        %v919 = vpop.permute.xlu0 %918
        %920 = vrot.lane.b32.xlu0 %v913, 104
        %v921 = vpop.permute.xlu0 %920
        %v924 = vpack.i.b16 %v917, %v913
        %v925 = vshrl.u32 %v913, 16
        %v926 = vshrl.u32 %v917, 16
        %v927 = vpack.i.b16 %v926, %v925
        %v930 = vpack.i.b16 %v921, %v919
        %v931 = vshrl.u32 %v919, 16
        %v932 = vshrl.u32 %v921, 16
        %v933 = vpack.i.b16 %v932, %v931
        %v936 = vunpack.c.l.s4 1983009808
        %v937 = vunpack.c.0.s8 %v936
        %v938 = vperm.slane %v924, %v937
        %v941 = vunpack.c.l.s4 1983009808
        %v942 = vunpack.c.0.s8 %v941
        %v943 = vperm.slane %v930, %v942
        %v944 = vrot.slane %v943, 4
        %v945 = vsel %vm821, %v944, %v938
        %v946 = vrot.slane %v938, 4
        %v947 = vsel %vm821, %v943, %v946
        %v949 = vunpack.c.l.s4 1934713408
        %v950 = vunpack.c.0.s8 %v949
        %v951 = vperm.slane %v945, %v950
        %v953 = vunpack.c.l.s4 1934713408
        %v954 = vunpack.c.0.s8 %v953
        %v955 = vperm.slane %v947, %v954
        %v956 = vrot.slane %v951, 4
        %v957 = vsel %vm821, 0, %v956
        %v958 = vrot.slane %v955, 4
        %v959 = vsel %vm821, 0, %v958
        %v962 = vunpack.c.l.s4 1983009808
        %v963 = vunpack.c.0.s8 %v962
        %v964 = vperm.slane %v927, %v963
        %v967 = vunpack.c.l.s4 1983009808
        %v968 = vunpack.c.0.s8 %v967
        %v969 = vperm.slane %v933, %v968
        %v970 = vrot.slane %v969, 4
        %v971 = vsel %vm821, %v970, %v964
        %v972 = vrot.slane %v964, 4
        %v973 = vsel %vm821, %v969, %v972
        %v975 = vunpack.c.l.s4 1934713408
        %v976 = vunpack.c.0.s8 %v975
        %v977 = vperm.slane %v971, %v976
        %v979 = vunpack.c.l.s4 1934713408
        %v980 = vunpack.c.0.s8 %v979
        %v981 = vperm.slane %v973, %v980
        %v982 = vrot.slane %v977, 4
        %v983 = vsel %vm821, 0, %v982
        %v984 = vrot.slane %v981, 4
        %v985 = vsel %vm821, 0, %v984
        %v986 = vsel %vm821, %v958, %v951
        %v988 = vunpack.c.l.s4 1983009808
        %v989 = vunpack.c.0.s8 %v988
        %v990 = vperm.slane %v986, %v989
        %v991 = vrot.slane %v959, 4
        %v992 = vsel %vm821, %v991, %v957
        %v994 = vunpack.c.l.s4 1983009808
        %v995 = vunpack.c.0.s8 %v994
        %v996 = vperm.slane %v992, %v995
        %v997 = vrot.slane %v996, 4
        %v998 = vsel %vm821, %v997, %v990
        %v1000 = vunpack.c.l.s4 1934713408
        %v1001 = vunpack.c.0.s8 %v1000
        %v1002 = vperm.slane %v998, %v1001
        %v1003 = vrot.slane %v1002, 4
        %v1004 = vsel %vm821, 0, %v1003
        %v1005 = vsel %vm821, %v984, %v977
        %v1007 = vunpack.c.l.s4 1983009808
        %v1008 = vunpack.c.0.s8 %v1007
        %v1009 = vperm.slane %v1005, %v1008
        %v1010 = vrot.slane %v985, 4
        %v1011 = vsel %vm821, %v1010, %v983
        %v1013 = vunpack.c.l.s4 1983009808
        %v1014 = vunpack.c.0.s8 %v1013
        %v1015 = vperm.slane %v1011, %v1014
        %v1016 = vrot.slane %v1015, 4
        %v1017 = vsel %vm821, %v1016, %v1009
        %v1019 = vunpack.c.l.s4 1934713408
        %v1020 = vunpack.c.0.s8 %v1019
        %v1021 = vperm.slane %v1017, %v1020
        %v1022 = vrot.slane %v1021, 4
        %v1023 = vsel %vm821, 0, %v1022
        %v1026 = vpack.i.b16 %v1021, %v1002
        %v1027 = vshrl.u32 %v1002, 16
        %v1028 = vshrl.u32 %v1021, 16
        %v1029 = vpack.i.b16 %v1028, %v1027
        %v1032 = vpack.i.b16 %v1023, %v1004
        %v1033 = vshrl.u32 %v1004, 16
        %v1034 = vshrl.u32 %v1023, 16
        %v1035 = vpack.i.b16 %v1034, %v1033
        %1037 = vrot.lane.b32.xlu0 %v914, 120
        %v1038 = vpop.permute.xlu0 %1037
        %1039 = vrot.lane.b32.xlu0 %v914, 112
        %v1040 = vpop.permute.xlu0 %1039
        %1041 = vrot.lane.b32.xlu0 %v914, 104
        %v1042 = vpop.permute.xlu0 %1041
        %v1045 = vpack.i.b16 %v1038, %v914
        %v1046 = vshrl.u32 %v914, 16
        %v1047 = vshrl.u32 %v1038, 16
        %v1048 = vpack.i.b16 %v1047, %v1046
        %v1051 = vpack.i.b16 %v1042, %v1040
        %v1052 = vshrl.u32 %v1040, 16
        %v1053 = vshrl.u32 %v1042, 16
        %v1054 = vpack.i.b16 %v1053, %v1052
        %v1057 = vunpack.c.l.s4 1983009808
        %v1058 = vunpack.c.0.s8 %v1057
        %v1059 = vperm.slane %v1045, %v1058
        %v1062 = vunpack.c.l.s4 1983009808
        %v1063 = vunpack.c.0.s8 %v1062
        %v1064 = vperm.slane %v1051, %v1063
        %v1065 = vrot.slane %v1064, 4
        %v1066 = vsel %vm821, %v1065, %v1059
        %v1067 = vrot.slane %v1059, 4
        %v1068 = vsel %vm821, %v1064, %v1067
        %v1070 = vunpack.c.l.s4 1934713408
        %v1071 = vunpack.c.0.s8 %v1070
        %v1072 = vperm.slane %v1066, %v1071
        %v1074 = vunpack.c.l.s4 1934713408
        %v1075 = vunpack.c.0.s8 %v1074
        %v1076 = vperm.slane %v1068, %v1075
        %v1077 = vrot.slane %v1072, 4
        %v1078 = vsel %vm821, 0, %v1077
        %v1079 = vrot.slane %v1076, 4
        %v1080 = vsel %vm821, 0, %v1079
        %v1083 = vunpack.c.l.s4 1983009808
        %v1084 = vunpack.c.0.s8 %v1083
        %v1085 = vperm.slane %v1048, %v1084
        %v1088 = vunpack.c.l.s4 1983009808
        %v1089 = vunpack.c.0.s8 %v1088
        %v1090 = vperm.slane %v1054, %v1089
        %v1091 = vrot.slane %v1090, 4
        %v1092 = vsel %vm821, %v1091, %v1085
        %v1093 = vrot.slane %v1085, 4
        %v1094 = vsel %vm821, %v1090, %v1093
        %v1096 = vunpack.c.l.s4 1934713408
        %v1097 = vunpack.c.0.s8 %v1096
        %v1098 = vperm.slane %v1092, %v1097
        %v1100 = vunpack.c.l.s4 1934713408
        %v1101 = vunpack.c.0.s8 %v1100
        %v1102 = vperm.slane %v1094, %v1101
        %v1103 = vrot.slane %v1098, 4
        %v1104 = vsel %vm821, 0, %v1103
        %v1105 = vrot.slane %v1102, 4
        %v1106 = vsel %vm821, 0, %v1105
        %v1107 = vsel %vm821, %v1079, %v1072
        %v1109 = vunpack.c.l.s4 1983009808
        %v1110 = vunpack.c.0.s8 %v1109
        %v1111 = vperm.slane %v1107, %v1110
        %v1112 = vrot.slane %v1080, 4
        %v1113 = vsel %vm821, %v1112, %v1078
        %v1115 = vunpack.c.l.s4 1983009808
        %v1116 = vunpack.c.0.s8 %v1115
        %v1117 = vperm.slane %v1113, %v1116
        %v1118 = vrot.slane %v1117, 4
        %v1119 = vsel %vm821, %v1118, %v1111
        %v1121 = vunpack.c.l.s4 1934713408
        %v1122 = vunpack.c.0.s8 %v1121
        %v1123 = vperm.slane %v1119, %v1122
        %v1124 = vrot.slane %v1123, 4
        %v1125 = vsel %vm821, 0, %v1124
        %v1126 = vsel %vm821, %v1105, %v1098
        %v1128 = vunpack.c.l.s4 1983009808
        %v1129 = vunpack.c.0.s8 %v1128
        %v1130 = vperm.slane %v1126, %v1129
        %v1131 = vrot.slane %v1106, 4
        %v1132 = vsel %vm821, %v1131, %v1104
        %v1134 = vunpack.c.l.s4 1983009808
        %v1135 = vunpack.c.0.s8 %v1134
        %v1136 = vperm.slane %v1132, %v1135
        %v1137 = vrot.slane %v1136, 4
        %v1138 = vsel %vm821, %v1137, %v1130
        %v1140 = vunpack.c.l.s4 1934713408
        %v1141 = vunpack.c.0.s8 %v1140
        %v1142 = vperm.slane %v1138, %v1141
        %v1143 = vrot.slane %v1142, 4
        %v1144 = vsel %vm821, 0, %v1143
        %v1147 = vpack.i.b16 %v1142, %v1123
        %v1148 = vshrl.u32 %v1123, 16
        %v1149 = vshrl.u32 %v1142, 16
        %v1150 = vpack.i.b16 %v1149, %v1148
        %v1153 = vpack.i.b16 %v1144, %v1125
        %v1154 = vshrl.u32 %v1125, 16
        %v1155 = vshrl.u32 %v1144, 16
        %v1156 = vpack.i.b16 %v1155, %v1154
        %vm1157 = vcmask 64512
        %v1159 = vsel %vm1157, %v903, 0
        %v1162 = vsel %vm1157, %v1026, 0
        %1164 = vmatpush.bf16.xpose.msra.mxu0 0
        %1165 = vmatpush.bf16.xpose.msra.mxu0 0
        %1166 = vmatpush.bf16.xpose.msra.mxu0 0
        %1167 = vmatpush.bf16.xpose.msra.mxu0 0
        %1168 = vmatpush.bf16.xpose.msra.mxu0 0
        %1169 = vmatpush.bf16.xpose.msra.mxu0 0
        %1170 = vmatpush.bf16.xpose.msra.mxu0 0
        %1171 = vmatpush.bf16.xpose.msra.mxu0 %v1162
        %1172 = vmatmul.bf16.gmra.mxu0 %v1159
        %v1173 = vpop.f32.mrf.mxu0
        %v1174 = vadd.f32 0.0, %v1173
        %v1175 = vpop.f32.mrf.mxu0
        %1176 = vdwg.mxu0
        %v1178 = vsel %vm1157, %v906, 0
        %v1181 = vsel %vm1157, %v1029, 0
        %1183 = vmatpush.bf16.xpose.msra.mxu0 0
        %1184 = vmatpush.bf16.xpose.msra.mxu0 0
        %1185 = vmatpush.bf16.xpose.msra.mxu0 0
        %1186 = vmatpush.bf16.xpose.msra.mxu0 0
        %1187 = vmatpush.bf16.xpose.msra.mxu0 0
        %1188 = vmatpush.bf16.xpose.msra.mxu0 0
        %1189 = vmatpush.bf16.xpose.msra.mxu0 0
        %1190 = vmatpush.bf16.xpose.msra.mxu0 %v1181
        %1191 = vmatmul.bf16.gmra.mxu0 %v1178
        %v1192 = vpop.f32.mrf.mxu0
        %v1193 = vadd.f32 0.0, %v1192
        %v1194 = vpop.f32.mrf.mxu0
        %1195 = vdwg.mxu0
        %v1197 = vsel %vm1157, %v909, 0
        %v1200 = vsel %vm1157, %v1032, 0
        %1202 = vmatpush.bf16.xpose.msra.mxu0 0
        %1203 = vmatpush.bf16.xpose.msra.mxu0 0
        %1204 = vmatpush.bf16.xpose.msra.mxu0 0
        %1205 = vmatpush.bf16.xpose.msra.mxu0 0
        %1206 = vmatpush.bf16.xpose.msra.mxu0 0
        %1207 = vmatpush.bf16.xpose.msra.mxu0 0
        %1208 = vmatpush.bf16.xpose.msra.mxu0 0
        %1209 = vmatpush.bf16.xpose.msra.mxu0 %v1200
        %1210 = vmatmul.bf16.gmra.mxu0 %v1197
        %v1211 = vpop.f32.mrf.mxu0
        %v1212 = vadd.f32 0.0, %v1211
        %v1213 = vpop.f32.mrf.mxu0
        %1214 = vdwg.mxu0
        %v1216 = vsel %vm1157, %v912, 0
        %v1219 = vsel %vm1157, %v1035, 0
        %1221 = vmatpush.bf16.xpose.msra.mxu0 0
        %1222 = vmatpush.bf16.xpose.msra.mxu0 0
        %1223 = vmatpush.bf16.xpose.msra.mxu0 0
        %1224 = vmatpush.bf16.xpose.msra.mxu0 0
        %1225 = vmatpush.bf16.xpose.msra.mxu0 0
        %1226 = vmatpush.bf16.xpose.msra.mxu0 0
        %1227 = vmatpush.bf16.xpose.msra.mxu0 0
        %1228 = vmatpush.bf16.xpose.msra.mxu0 %v1219
        %1229 = vmatmul.bf16.gmra.mxu0 %v1216
        %v1230 = vpop.f32.mrf.mxu0
        %v1231 = vadd.f32 0.0, %v1230
        %v1232 = vpop.f32.mrf.mxu0
        %1233 = vdwg.mxu0
        %v1234 = vsel %vm1157, %v1174, -inf
        %1235 = vmax.xlane.f32.xlu0 %v1234
        %v1236 = vpop.xlane.xlu0 %1235
        %v1237 = vsel %vm1157, %v1193, -inf
        %1238 = vmax.xlane.f32.xlu0 %v1237
        %v1239 = vpop.xlane.xlu0 %1238
        %v1240 = vsel %vm1157, %v1212, -inf
        %1241 = vmax.xlane.f32.xlu0 %v1240
        %v1242 = vpop.xlane.xlu0 %1241
        %v1243 = vsel %vm1157, %v1231, -inf
        %1244 = vmax.xlane.f32.xlu0 %v1243
        %v1245 = vpop.xlane.xlu0 %1244
        %v1246 = vsub.f32 -inf, %v1236
        %v1247 = vsub.f32 -inf, %v1239
        %v1248 = vsub.f32 -inf, %v1242
        %v1249 = vsub.f32 -inf, %v1245
        %v1250 = vmul.f32 %v1246, 1.442695
        %v1251 = vpow.pop %v1250
        %v1252 = vmul.f32 %v1247, 1.442695
        %v1253 = vpow.pop %v1252
        %v1254 = vmul.f32 %v1248, 1.442695
        %v1255 = vpow.pop %v1254
        %v1256 = vmul.f32 %v1249, 1.442695
        %v1257 = vpow.pop %v1256
        %v1258 = vsub.f32 %v1174, %v1236
        %v1259 = vsub.f32 %v1193, %v1239
        %v1260 = vsub.f32 %v1212, %v1242
        %v1261 = vsub.f32 %v1231, %v1245
        %v1262 = vmul.f32 %v1258, 1.442695
        %v1263 = vpow.pop %v1262
        %v1264 = vmul.f32 %v1259, 1.442695
        %v1265 = vpow.pop %v1264
        %v1266 = vmul.f32 %v1260, 1.442695
        %v1267 = vpow.pop %v1266
        %v1268 = vmul.f32 %v1261, 1.442695
        %v1269 = vpow.pop %v1268
        %v1270 = vmul.f32 %v1251, 0.0
        %v1271 = vmul.f32 %v1253, 0.0
        %v1272 = vmul.f32 %v1255, 0.0
        %v1273 = vmul.f32 %v1257, 0.0
        %v1274 = vsel %vm1157, %v1263, 0.0
        %1275 = vadd.xlane.f32.xlu0 %v1274
        %v1276 = vpop.xlane.xlu0 %1275
        %v1277 = vsel %vm1157, %v1265, 0.0
        %1278 = vadd.xlane.f32.xlu0 %v1277
        %v1279 = vpop.xlane.xlu0 %1278
        %v1280 = vsel %vm1157, %v1267, 0.0
        %1281 = vadd.xlane.f32.xlu0 %v1280
        %v1282 = vpop.xlane.xlu0 %1281
        %v1283 = vsel %vm1157, %v1269, 0.0
        %1284 = vadd.xlane.f32.xlu0 %v1283
        %v1285 = vpop.xlane.xlu0 %1284
        %v1286 = vadd.f32 %v1270, %v1276
        %v1287 = vadd.f32 %v1271, %v1279
        %v1288 = vadd.f32 %v1272, %v1282
        %v1289 = vadd.f32 %v1273, %v1285
        %v1290 = vpack.c.bf16 %v1263, %v1263
        %v1291 = vpack.c.bf16 %v1265, %v1265
        %v1292 = vpack.c.bf16 %v1267, %v1267
        %v1293 = vpack.c.bf16 %v1269, %v1269
        %v1295 = vsel %vm1157, %v1290, 0
        %vm1297 = vcmask 1043456
        %v1299 = vsel %vm1297, %v1147, 0
        %1301 = vmatpush.bf16.msra.mxu0 0
        %1302 = vmatpush.bf16.msra.mxu0 0
        %1303 = vmatpush.bf16.msra.mxu0 0
        %1304 = vmatpush.bf16.msra.mxu0 0
        %1305 = vmatpush.bf16.msra.mxu0 0
        %1306 = vmatpush.bf16.msra.mxu0 0
        %1307 = vmatpush.bf16.msra.mxu0 0
        %1308 = vmatpush.bf16.msra.mxu0 %v1299
        %1309 = vmatmul.bf16.gmra.mxu0 %v1295
        %v1310 = vpop.f32.mrf.mxu0
        %v1311 = vadd.f32 0.0, %v1310
        %v1312 = vpop.f32.mrf.mxu0
        %1313 = vdwg.mxu0
        %v1315 = vsel %vm1157, %v1291, 0
        %v1318 = vsel %vm1297, %v1150, 0
        %1320 = vmatpush.bf16.msra.mxu0 0
        %1321 = vmatpush.bf16.msra.mxu0 0
        %1322 = vmatpush.bf16.msra.mxu0 0
        %1323 = vmatpush.bf16.msra.mxu0 0
        %1324 = vmatpush.bf16.msra.mxu0 0
        %1325 = vmatpush.bf16.msra.mxu0 0
        %1326 = vmatpush.bf16.msra.mxu0 0
        %1327 = vmatpush.bf16.msra.mxu0 %v1318
        %1328 = vmatmul.bf16.gmra.mxu0 %v1315
        %v1329 = vpop.f32.mrf.mxu0
        %v1330 = vadd.f32 0.0, %v1329
        %v1331 = vpop.f32.mrf.mxu0
        %1332 = vdwg.mxu0
        %v1334 = vsel %vm1157, %v1292, 0
        %v1337 = vsel %vm1297, %v1153, 0
        %1339 = vmatpush.bf16.msra.mxu0 0
        %1340 = vmatpush.bf16.msra.mxu0 0
        %1341 = vmatpush.bf16.msra.mxu0 0
        %1342 = vmatpush.bf16.msra.mxu0 0
        %1343 = vmatpush.bf16.msra.mxu0 0
        %1344 = vmatpush.bf16.msra.mxu0 0
        %1345 = vmatpush.bf16.msra.mxu0 0
        %1346 = vmatpush.bf16.msra.mxu0 %v1337
        %1347 = vmatmul.bf16.gmra.mxu0 %v1334
        %v1348 = vpop.f32.mrf.mxu0
        %v1349 = vadd.f32 0.0, %v1348
        %v1350 = vpop.f32.mrf.mxu0
        %1351 = vdwg.mxu0
        %v1353 = vsel %vm1157, %v1293, 0
        %v1356 = vsel %vm1297, %v1156, 0
        %1358 = vmatpush.bf16.msra.mxu0 0
        %1359 = vmatpush.bf16.msra.mxu0 0
        %1360 = vmatpush.bf16.msra.mxu0 0
        %1361 = vmatpush.bf16.msra.mxu0 0
        %1362 = vmatpush.bf16.msra.mxu0 0
        %1363 = vmatpush.bf16.msra.mxu0 0
        %1364 = vmatpush.bf16.msra.mxu0 0
        %1365 = vmatpush.bf16.msra.mxu0 %v1356
        %1366 = vmatmul.bf16.gmra.mxu0 %v1353
        %v1367 = vpop.f32.mrf.mxu0
        %v1368 = vadd.f32 0.0, %v1367
        %v1369 = vpop.f32.mrf.mxu0
        %1370 = vdwg.mxu0
        %v1371 = vadd.f32 %v1270, %v1311
        %v1372 = vadd.f32 %v1271, %v1330
        %v1373 = vadd.f32 %v1272, %v1349
        %v1374 = vadd.f32 %v1273, %v1368
        %v1375 = vrcp.pop %v1286
        %v1376 = vrcp.pop %v1287
        %v1377 = vrcp.pop %v1288
        %v1378 = vrcp.pop %v1289
        %v1379 = vmul.f32 %v1371, %v1375
        %v1380 = vmul.f32 %v1372, %v1376
        %v1381 = vmul.f32 %v1373, %v1377
        %v1382 = vmul.f32 %v1374, %v1378
        %v1383 = vrot.slane %v1381, 4
        %vm1384 = vcmask 1047556
        %v1385 = vsel %vm1384, %v1383, %v1379
        %v1386 = vrot.slane %v1379, 4
        %v1387 = vsel %vm1384, %v1381, %v1386
        %v1389 = vunpack.c.l.s4 1983009808
        %v1390 = vunpack.c.0.s8 %v1389
        %v1391 = vperm.slane %v1385, %v1390
        %v1393 = vunpack.c.l.s4 1983009808
        %v1394 = vunpack.c.0.s8 %v1393
        %v1395 = vperm.slane %v1387, %v1394
        %v1396 = vrot.slane %v1382, 4
        %v1397 = vsel %vm1384, %v1396, %v1380
        %v1398 = vrot.slane %v1380, 4
        %v1399 = vsel %vm1384, %v1382, %v1398
        %v1401 = vunpack.c.l.s4 1983009808
        %v1402 = vunpack.c.0.s8 %v1401
        %v1403 = vperm.slane %v1397, %v1402
        %v1405 = vunpack.c.l.s4 1983009808
        %v1406 = vunpack.c.0.s8 %v1405
        %v1407 = vperm.slane %v1399, %v1406
        %v1408 = vrot.slane %v1403, 4
        %v1409 = vsel %vm1384, %v1408, %v1391
        %v1410 = vrot.slane %v1391, 4
        %v1411 = vsel %vm1384, %v1403, %v1410
        %v1413 = vunpack.c.l.s4 1934713408
        %v1414 = vunpack.c.0.s8 %v1413
        %v1415 = vperm.slane %v1409, %v1414
        %v1417 = vunpack.c.l.s4 1934713408
        %v1418 = vunpack.c.0.s8 %v1417
        %v1419 = vperm.slane %v1411, %v1418
        %v1420 = vrot.slane %v1407, 4
        %v1421 = vsel %vm1384, %v1420, %v1395
        %v1422 = vrot.slane %v1395, 4
        %v1423 = vsel %vm1384, %v1407, %v1422
        %v1425 = vunpack.c.l.s4 1934713408
        %v1426 = vunpack.c.0.s8 %v1425
        %v1427 = vperm.slane %v1421, %v1426
        %v1429 = vunpack.c.l.s4 1934713408
        %v1430 = vunpack.c.0.s8 %v1429
        %v1431 = vperm.slane %v1423, %v1430
        %v1432 = vrot.slane %v1415, 4
        %v1433 = vsel %vm1384, 0.0, %v1432
        %v1434 = vrot.slane %v1419, 4
        %v1435 = vsel %vm1384, 0.0, %v1434
        %v1436 = vrot.slane %v1427, 4
        %v1437 = vsel %vm1384, 0.0, %v1436
        %v1438 = vrot.slane %v1431, 4
        %v1439 = vsel %vm1384, 0.0, %v1438
        %v1440 = vsel %vm1384, %v1434, %v1415
        %v1442 = vunpack.c.l.s4 1983009808
        %v1443 = vunpack.c.0.s8 %v1442
        %v1444 = vperm.slane %v1440, %v1443
        %v1445 = vrot.slane %v1435, 4
        %v1446 = vsel %vm1384, %v1445, %v1433
        %v1448 = vunpack.c.l.s4 1983009808
        %v1449 = vunpack.c.0.s8 %v1448
        %v1450 = vperm.slane %v1446, %v1449
        %v1451 = vsel %vm1384, %v1438, %v1427
        %v1453 = vunpack.c.l.s4 1983009808
        %v1454 = vunpack.c.0.s8 %v1453
        %v1455 = vperm.slane %v1451, %v1454
        %v1456 = vrot.slane %v1439, 4
        %v1457 = vsel %vm1384, %v1456, %v1437
        %v1459 = vunpack.c.l.s4 1983009808
        %v1460 = vunpack.c.0.s8 %v1459
        %v1461 = vperm.slane %v1457, %v1460
        %v1462 = vrot.slane %v1450, 4
        %v1463 = vsel %vm1384, %v1462, %v1444
        %v1464 = vrot.slane %v1444, 4
        %v1465 = vsel %vm1384, %v1450, %v1464
        %v1467 = vunpack.c.l.s4 1934713408
        %v1468 = vunpack.c.0.s8 %v1467
        %v1469 = vperm.slane %v1463, %v1468
        %v1471 = vunpack.c.l.s4 1934713408
        %v1472 = vunpack.c.0.s8 %v1471
        %v1473 = vperm.slane %v1465, %v1472
        %v1474 = vrot.slane %v1461, 4
        %v1475 = vsel %vm1384, %v1474, %v1455
        %v1476 = vrot.slane %v1455, 4
        %v1477 = vsel %vm1384, %v1461, %v1476
        %v1479 = vunpack.c.l.s4 1934713408
        %v1480 = vunpack.c.0.s8 %v1479
        %v1481 = vperm.slane %v1475, %v1480
        %v1483 = vunpack.c.l.s4 1934713408
        %v1484 = vunpack.c.0.s8 %v1483
        %v1485 = vperm.slane %v1477, %v1484
        %v1486 = vrot.slane %v1481, 4
        %v1487 = vsel %vm1384, %v1486, %v1469
        %v1488 = vrot.slane %v1469, 4
        %v1489 = vsel %vm1384, %v1481, %v1488
        %v1490 = vrot.slane %v1485, 4
        %v1491 = vsel %vm1384, %v1490, %v1473
        %v1492 = vrot.slane %v1473, 4
        %v1493 = vsel %vm1384, %v1485, %v1492
        %1495 = vrot.lane.b32.xlu0 %v1489, 8
        %v1496 = vpop.permute.xlu0 %1495
        %1499 = vrot.lane.b32.xlu0 %v1491, 16
        %v1500 = vpop.permute.xlu0 %1499
        %1503 = vrot.lane.b32.xlu0 %v1493, 24
        %v1504 = vpop.permute.xlu0 %1503
        %v1506 = vsel %vm1157, %v1487, %v1496
        %vm1507 = vcmask 130048
        %v1508 = vsel %vm1507, %v1506, %v1500
        %vm1509 = vcmask 195584
        %v1510 = vsel %vm1509, %v1508, %v1504
        %v1511 = vpack.c.bf16 %v1510, %v1510
        %v1512 = vld [vmem:[%s9] sm:$0xf]
        %v1513 = vld [vmem:[%s9 + $0x4] sm:$0xf]
        %v1514 = vld [vmem:[%s9 + $0x8] sm:$0xf]
        %v1515 = vld [vmem:[%s9 + $0xc] sm:$0xf]
        %v1516 = vld [vmem:[%s10] sm:$0x1]
        %v1518 = vperm.slane %v1516, 0
        %v1524 = vunpack.c.l.b16 %v1512
        %v1525 = vunpack.c.l.b16 %v1513
        %v1526 = vunpack.c.l.b16 %v1514
        %v1527 = vunpack.c.l.b16 %v1515
        %v1528 = vpack.c.b16 %v1525, %v1524
        %v1529 = vpack.c.b16 %v1527, %v1526
        %v1533 = vsel %vm714, %v1511, 0
        %1535 = vmatpush.bf16.msra.mxu0 0
        %1536 = vmatpush.bf16.msra.mxu0 0
        %1537 = vmatpush.bf16.msra.mxu0 0
        %1538 = vmatpush.bf16.msra.mxu0 0
        %1539 = vmatpush.bf16.msra.mxu0 0
        %1540 = vmatpush.bf16.msra.mxu0 0
        %1541 = vmatpush.bf16.msra.mxu0 %v1529
        %1542 = vmatpush.bf16.msra.mxu0 %v1528
        %1543 = vmatmul.bf16.gmra.mxu0 %v1533
        %v1544 = vpop.f32.mrf.mxu0
        %v1545 = vadd.f32 %v1518, %v1544
        %v1546 = vpop.f32.mrf.mxu0
        %1547 = vdwg.mxu0
        %v1548 = vadd.f32 %v713, %v1545
        %v1549 = vld [vmem:[%s11] sm:$0x1]
        %v1550 = vld [vmem:[%s12] sm:$0x1]
        %v1551 = vsel %vm714, %v1548, 0.0
        %1552 = vadd.xlane.f32.xlu0 %v1551
        %v1553 = vpop.xlane.xlu0 %1552
        %v1554 = vmul.f32 %v1553, %v724
        %v1555 = vsub.f32 %v1548, %v1554
        %v1556 = vmul.f32 %v1555, %v1555
        %v1557 = vsel %vm714, %v1556, 0.0
        %1558 = vadd.xlane.f32.xlu0 %v1557
        %v1559 = vpop.xlane.xlu0 %1558
        %v1560 = vmul.f32 %v1559, %v724
        %v1561 = vadd.f32 %v1560, 1e-05
        %v1562 = vrsqrt.pop %v1561
        %v1563 = vmul.f32 %v1562, %v1561
        %v1564 = vmul.f32 %v1563, %v1562
        %v1565 = vmul.f32 0.5, %v1564
        %v1566 = vsub.f32 1.5, %v1565
        %v1567 = vmul.f32 %v1562, %v1566
        %vm1568 = vweird.f32 %v1561
        %vm1569 = vweird.f32 %v1562
        %vm1570 = vmor %vm1568, %vm1569
        %v1571 = vsel %vm1570, %v1562, %v1567
        %v1572 = vmul.f32 %v1555, %v1571
        %v1574 = vperm.slane %v1549, 0
        %v1576 = vmul.f32 %v1572, %v1574
        %v1578 = vperm.slane %v1550, 0
        %v1580 = vadd.f32 %v1576, %v1578
        %v1581 = vpack.c.bf16 %v1580, %v1580
        %v1582 = vld [vmem:[#allocation7] sm:$0xf]
        %v1583 = vld [vmem:[#allocation7 + $0x4] sm:$0xf]
        %v1584 = vld [vmem:[#allocation7 + $0x8] sm:$0xf]
        %v1585 = vld [vmem:[#allocation7 + $0xc] sm:$0xf]
        %v1586 = vld [vmem:[%s14] sm:$0x1]
        %v1588 = vperm.slane %v1586, 0
        %v1594 = vunpack.c.l.b16 %v1582
        %v1595 = vunpack.c.l.b16 %v1583
        %v1596 = vunpack.c.l.b16 %v1584
        %v1597 = vunpack.c.l.b16 %v1585
        %v1598 = vpack.c.b16 %v1595, %v1594
        %v1599 = vpack.c.b16 %v1597, %v1596
        %v1603 = vsel %vm714, %v1581, 0
        %1605 = vmatpush.bf16.msra.mxu0 0
        %1606 = vmatpush.bf16.msra.mxu0 0
        %1607 = vmatpush.bf16.msra.mxu0 0
        %1608 = vmatpush.bf16.msra.mxu0 0
        %1609 = vmatpush.bf16.msra.mxu0 0
        %1610 = vmatpush.bf16.msra.mxu0 0
        %1611 = vmatpush.bf16.msra.mxu0 %v1599
        %1612 = vmatpush.bf16.msra.mxu0 %v1598
        %1613 = vmatmul.bf16.gmra.mxu0 %v1603
        %v1614 = vpop.f32.mrf.mxu0
        %v1615 = vadd.f32 %v1588, %v1614
        %v1616 = vpop.f32.mrf.mxu0
        %1617 = vdwg.mxu0
        %v1618 = vmul.f32 %v1615, 1.702
        %v1619 = vxor.u32 %v1618, 2147483648
        %v1620 = vmul.f32 %v1619, 1.442695
        %v1621 = vpow.pop %v1620
        %v1622 = vadd.f32 %v1621, 1.0
        %v1623 = vrcp.pop %v1622
        %v1624 = vmul.f32 %v1622, %v1623
        %v1625 = vsub.f32 1.0, %v1624
        %v1626 = vmul.f32 %v1623, %v1625
        %v1627 = vadd.f32 %v1623, %v1626
        %vm1628 = vweird.f32 %v1622
        %vm1629 = vweird.f32 %v1623
        %vm1630 = vmor %vm1628, %vm1629
        %v1631 = vsel %vm1630, %v1623, %v1627
        %v1632 = vand.u32 2147483647, %v1622
        %vm1633 = vcmp.eq.f32.partialorder %v1632, 8.507059e+37
        %v1634 = vand.u32 %v1622, 2147483648
        %v1635 = vor.u32 1.1754944e-38, %v1634
        %v1636 = vsel %vm1633, %v1635, %v1631
        %v1637 = vmul.f32 1.0, %v1636
        %v1638 = vmul.f32 %v1615, %v1637
        %v1639 = vpack.c.bf16 %v1638, %v1638
        %v1640 = vld [vmem:[%s15] sm:$0xf]
        %v1641 = vld [vmem:[%s15 + $0x4] sm:$0xf]
        %v1642 = vld [vmem:[%s15 + $0x8] sm:$0xf]
        %v1643 = vld [vmem:[%s15 + $0xc] sm:$0xf]
        %v1644 = vld [vmem:[%s15 + $0x10] sm:$0xf]
        %v1645 = vld [vmem:[%s15 + $0x14] sm:$0xf]
        %v1646 = vld [vmem:[%s15 + $0x18] sm:$0xf]
        %v1647 = vld [vmem:[%s15 + $0x1c] sm:$0xf]
        %v1648 = vld [vmem:[%s15 + $0x20] sm:$0xf]
        %v1649 = vld [vmem:[%s15 + $0x24] sm:$0xf]
        %v1650 = vld [vmem:[%s15 + $0x28] sm:$0xf]
        %v1651 = vld [vmem:[%s15 + $0x2c] sm:$0xf]
        %v1652 = vld [vmem:[%s15 + $0x30] sm:$0xf]
        %v1653 = vld [vmem:[%s15 + $0x34] sm:$0xf]
        %v1654 = vld [vmem:[%s15 + $0x38] sm:$0xf]
        %v1655 = vld [vmem:[%s15 + $0x3c] sm:$0xf]
        %v1656 = vld [vmem:[%s16] sm:$0x1]
        %v1658 = vperm.slane %v1656, 0
        %v1676 = vunpack.c.l.b16 %v1640
        %v1677 = vunpack.c.l.b16 %v1641
        %v1678 = vunpack.c.l.b16 %v1642
        %v1679 = vunpack.c.l.b16 %v1643
        %v1680 = vunpack.c.l.b16 %v1644
        %v1681 = vunpack.c.l.b16 %v1645
        %v1682 = vunpack.c.l.b16 %v1646
        %v1683 = vunpack.c.l.b16 %v1647
        %v1684 = vunpack.c.l.b16 %v1648
        %v1685 = vunpack.c.l.b16 %v1649
        %v1686 = vunpack.c.l.b16 %v1650
        %v1687 = vunpack.c.l.b16 %v1651
        %v1688 = vunpack.c.l.b16 %v1652
        %v1689 = vunpack.c.l.b16 %v1653
        %v1690 = vunpack.c.l.b16 %v1654
        %v1691 = vunpack.c.l.b16 %v1655
        %v1692 = vpack.c.b16 %v1677, %v1676
        %v1693 = vpack.c.b16 %v1679, %v1678
        %v1694 = vpack.c.b16 %v1681, %v1680
        %v1695 = vpack.c.b16 %v1683, %v1682
        %v1696 = vpack.c.b16 %v1685, %v1684
        %v1697 = vpack.c.b16 %v1687, %v1686
        %v1698 = vpack.c.b16 %v1689, %v1688
        %v1699 = vpack.c.b16 %v1691, %v1690
        %1708 = vmatpush.bf16.msra.mxu0 %v1699
        %1709 = vmatpush.bf16.msra.mxu0 %v1698
        %1710 = vmatpush.bf16.msra.mxu0 %v1697
        %1711 = vmatpush.bf16.msra.mxu0 %v1696
        %1712 = vmatpush.bf16.msra.mxu0 %v1695
        %1713 = vmatpush.bf16.msra.mxu0 %v1694
        %1714 = vmatpush.bf16.msra.mxu0 %v1693
        %1715 = vmatpush.bf16.msra.mxu0 %v1692
        %1716 = vmatmul.bf16.gmra.mxu0 %v1639
        %v1717 = vpop.f32.mrf.mxu0
        %v1718 = vadd.f32 %v1658, %v1717
        %v1719 = vpop.f32.mrf.mxu0
        %1720 = vdwg.mxu0
        %v1721 = vadd.f32 %v1548, %v1718
        %1722 = vst.msk [vmem:[%s585] sm:$0xff] %vm714, %v1721
        %s1723 = sand.u32 %s417, 1
        %s1724 = scalar_lea.sflag [#allocation6], %s1723
        %s1725 = sand.u32 %s417, 1
        %s1726 = smul.addr %s1725, 8
        %s1727 = scalar_lea.vmem [#allocation9], %s1726
        // Predicated region
        $region101: #{tpu_custom_call.1} parent=87 // pred_check
          %p1728 = pneg %p427
        $region102: #{tpu_custom_call.1} parent=87 // pred_check_branch
          %1730 = sbr.rel (%p1728) target = $region104
        $region103: #{tpu_custom_call.1} parent=87 // pred_region
          %1732 = vsyncadd %s1724, 0
          %s1733 = sadd.s32 %s38, %s37
          %s1734 = smul.addr %s1733, 8
          %s1735 = scalar_lea.hbm %s17, %s1734
          %s1737 = sshll.u32 %s1727, 4
          %s1738 = int_to_ptr.vmem [resolvable:$true] %s1737
          %s1739 = sshll.u32 %s1735, 4
          %s1740 = int_to_ptr.hbm [resolvable:$true] %s1739
          %1742 = dma.vmem_to_hbm [thread:$0]  %s1738, 128, %s1740, %s1724
        $region104: #{tpu_custom_call.1} parent=87 // pred_fallthru
          _
      $region88: #{tpu_custom_call.1} parent=5 // pred_fallthru
        _
      %p1743 = scmp.le.s32.totalorder 2, %s28
      // Predicated region
      $region105: #{tpu_custom_call.1} parent=5 // pred_check
        %p1744 = pneg %p1743
      $region106: #{tpu_custom_call.1} parent=5 // pred_check_branch
        %1746 = sbr.rel (%p1744) target = $region108
      $region107: #{tpu_custom_call.1} parent=5 // pred_region
        %s1747 = ssub.s32 %s28, 2
        // Predicated region
        $region109: #{tpu_custom_call.1} parent=107 // pred_check
          %p1748 = pneg %p433
        $region110: #{tpu_custom_call.1} parent=107 // pred_check_branch
          %1750 = sbr.rel (%p1748) target = $region112
        $region111: #{tpu_custom_call.1} parent=107 // pred_region
          %s1751 = sand.u32 %s418, 1
          %s1752 = scalar_lea.sflag [#allocation6], %s1751
          %s1753 = sand.u32 %s418, 1
          %s1754 = smul.addr %s1753, 8
          %s1755 = scalar_lea.vmem [#allocation9], %s1754
          %1757 = dma.done %s1752, 128
        $region112: #{tpu_custom_call.1} parent=107 // pred_fallthru
          _
      $region108: #{tpu_custom_call.1} parent=5 // pred_fallthru
        _
    $region6: #{tpu_custom_call.1} parent=1 // loop_footer
      %s32 = sadd.s32 1, %s28
    $region7: #{tpu_custom_call.1} parent=1 // loop_footer_branch
      %27 = sbr.rel target = $region3
    $region8: #{tpu_custom_call.1} parent=1 // loop_exit
      _
    %1758 = vsyncpa [#allocation5], 1
    %s1759 = scalar_lea.sflag [#allocation5], 1
    %1760 = vsyncpa %s1759, 1
    %1761 = vsyncpa [#allocation8], 1
    %1762 = vsyncpa [#allocation6], 1
    %s1763 = scalar_lea.sflag [#allocation6], 1
    %1764 = vsyncpa %s1763, 1

</llo_original>
